<compile_context>
chip_gen: v6e
topology: v6e:2x2x1
jax: 0.10.0
libtpu: 0.0.40
codegen_flags: <defaults>
</compile_context>

<pallas_src>
import functools

import numpy as np

import jax
import jax.numpy as jnp
from jax import lax
from jax.experimental import pallas as pl
from jax.experimental.pallas import tpu as pltpu

NEG_SLOPE = 0.01   # nn.LeakyReLU default negative_slope
BN_EPS = 1e-5      # nn.BatchNorm2d default eps


# ------------------------------ Fused kernel ------------------------------- #
def _generator_kernel(*refs, B, stage_dims):
    n_stages = len(stage_dims)
    noise_ref, lw_ref, lb_ref = refs[:3]
    stage_refs = refs[3:3 + 6 * n_stages]
    out_ref = refs[3 + 6 * n_stages]
    a0_scr = refs[4 + 6 * n_stages]

    H0, W0, C0, _ = stage_dims[0]
    row = W0 * C0

    # ---- nn.Linear (folded into the fused kernel: one tiny MXU matmul) ----
    x = jnp.dot(noise_ref[...], lw_ref[...],
                preferred_element_type=jnp.float32) + lb_ref[...]

    # ---- torch .view(B, C0, H0, W0): scatter to row-flat (B*H0, W0*C0).
    # The channel->lane permutation is already folded into lw/lb columns; only
    # the batch-row -> (batch, h)-row split remains: B*H0 static slice stores.
    for b in range(B):
        for h in range(H0):
            r0 = b * H0 + h
            a0_scr[r0:r0 + 1, :] = x[b:b + 1, h * row:(h + 1) * row]
    a = a0_scr[...]                                       # (B*H0, W0*C0)

    for si in range(n_stages):
        H, W, Cin, Cout = stage_dims[si]
        g_ref, bt_ref, p_ref, m_ref, r_ref, cb_ref = stage_refs[6 * si:6 * si + 6]

        # -- BatchNorm2d (training-mode batch stats) on the compact tensor.
        #    p_ref pools lanes with equal (lane % Cin); 1/(B*H*W) folded in.
        colsum = jnp.sum(a, axis=0, keepdims=True)                    # (1, W*Cin)
        mean_t = jnp.dot(colsum, p_ref[...],
                         preferred_element_type=jnp.float32)          # (1, W*Cin)
        d = a - mean_t
        var_t = jnp.dot(jnp.sum(d * d, axis=0, keepdims=True), p_ref[...],
                        preferred_element_type=jnp.float32)
        scale = g_ref[...] * lax.rsqrt(var_t + BN_EPS)
        act = d * scale + bt_ref[...]

        # -- LeakyReLU(0.01) (commutes with the nearest-neighbour upsample).
        act = jnp.where(act > 0, act, NEG_SLOPE * act)

        # -- Upsample(x2, nearest) + zero halo + Conv2d 3x3: 6 slab matmuls.
        acc = None
        for dy in range(3):
            t = jnp.dot(act, m_ref[dy],
                        preferred_element_type=jnp.float32)           # (B*H, 2W*Cout)
            contrib = jnp.dot(r_ref[dy], t,
                              preferred_element_type=jnp.float32)     # (B*2H, 2W*Cout)
            acc = contrib if acc is None else acc + contrib
        a = acc + cb_ref[...]                         # bias added once, hoisted

        if si == n_stages - 1:
            a = jnp.tanh(a)

    out_ref[...] = a                                  # (B*imgH, imgW*channels)


# ------------------ Host-side (trace-time) constant builders --------------- #
def _stage_index_mats(B, H, W, Cin):
    """Numpy index-pattern constants for one conv block."""
    # P: per-channel pooling over lanes with equal (lane % Cin); / count folded.
    l = np.arange(W * Cin)
    P = (l[:, None] % Cin == l[None, :] % Cin).astype(np.float32) / float(B * H * W)

    # place[dx, w, j] = 1 iff upsampled+zero-padded column (j+dx) reads source
    # column w (nearest upsample by 2, pad 1).  Used to build M[dy].
    place = np.zeros((3, W, 2 * W), np.float32)
    for dx in range(3):
        for j in range(2 * W):
            n = j + dx
            if 1 <= n <= 2 * W:
                place[dx, (n - 1) // 2, j] = 1.0

    # R[dy]: 0/1 row gather (block diagonal over batch) implementing the
    # H-upsample + zero halo + dy shift: out row r reads source row (r+dy-1)//2.
    R = np.zeros((3, B * 2 * H, B * H), np.float32)
    for dy in range(3):
        for b in range(B):
            for r in range(2 * H):
                s = (r + dy - 1) // 2          # python floor division
                if 0 <= s < H:
                    R[dy, b * 2 * H + r, b * H + s] = 1.0
    return P, place, R


def _prepare_inputs(noise, params, nf, init_size, channels):
    B = noise.shape[0]
    lw = params["lin_w"]                       # (lin_out, latent) -- torch layout
    lb = params["lin_b"]                       # (lin_out,)
    lin_out, latent = lw.shape
    C0, H0, W0 = nf * 2, init_size, init_size

    # Fold torch's .view(B, C0, H0, W0) channel ordering into the linear weight
    # columns so each output row-h segment is already (w, c)-packed on lanes.
    lwp = jnp.transpose(lw.reshape(C0, H0, W0, latent), (1, 2, 0, 3))
    lwp = lwp.reshape(lin_out, latent).T                           # (latent, lin_out)
    lbp = jnp.transpose(lb.reshape(C0, H0, W0), (1, 2, 0)).reshape(1, lin_out)

    inputs = [noise, lwp, lbp]
    stage_dims = []
    chans = [nf * 2, nf * 4, nf * 2, nf, channels]
    H, W = H0, W0
    for i, st in enumerate(params["convs"]):
        Cin, Cout = chans[i], chans[i + 1]
        P, place, R = _stage_index_mats(B, H, W, Cin)
        # M[dy] (W*Cin, 2W*Cout): W-upsample + zero halo + dx taps + channel mix.
        # torch conv weight is OIHW = (Cout, Cin, dy, dx).
        M = jnp.einsum("xwj,oiyx->ywijo", place, st["w"])
        M = M.reshape(3, W * Cin, 2 * W * Cout)
        inputs += [
            jnp.tile(st["gamma"], W).reshape(1, W * Cin),
            jnp.tile(st["beta"], W).reshape(1, W * Cin),
            jnp.asarray(P),
            M,
            jnp.asarray(R),
            jnp.tile(st["b"], 2 * W).reshape(1, 2 * W * Cout),
        ]
        stage_dims.append((H, W, Cin, Cout))
        H, W = 2 * H, 2 * W
    return inputs, tuple(stage_dims)


# --------------------------------- Forward --------------------------------- #
def generator_forward(noise, params, nf, init_size, image_size, channels):
    B = noise.shape[0]
    inputs, stage_dims = _prepare_inputs(noise, params, nf, init_size, channels)
    kernel = functools.partial(_generator_kernel, B=B, stage_dims=stage_dims)
    out2d = pl.pallas_call(
        kernel,
        out_shape=jax.ShapeDtypeStruct((B * image_size, image_size * channels),
                                       jnp.float32),
        in_specs=[pl.BlockSpec(memory_space=pltpu.MemorySpace.VMEM)] * len(inputs),
        out_specs=pl.BlockSpec(memory_space=pltpu.MemorySpace.VMEM),
        scratch_shapes=[pltpu.VMEM((B * init_size, init_size * nf * 2),
                                   jnp.float32)],
    )(*inputs)
    # Row-flat (B*H, W*C) -> NCHW (layout-only, outside the kernel).
    img = out2d.reshape(B, image_size, image_size, channels)
    return jnp.transpose(img, (0, 3, 1, 2))


# -------------------------------- Parameters -------------------------------- #
def init_params(key, latent_dim, image_size, nf, channels):
    init_size = image_size // 16
    lin_out = nf * 2 * init_size ** 2
    ks = jax.random.split(key, 6)

    def w_init(k, shape, fan_in):
        return jax.random.normal(k, shape, jnp.float32) / jnp.sqrt(float(fan_in))

    params = {
        "lin_w": w_init(ks[0], (lin_out, latent_dim), latent_dim),  # torch (out, in)
        "lin_b": w_init(ks[1], (lin_out,), latent_dim),
    }
    chans = [nf * 2, nf * 4, nf * 2, nf, channels]
    convs = []
    for i in range(4):
        cin, cout = chans[i], chans[i + 1]
        kw, kb, kg, kbt = jax.random.split(ks[2 + i], 4)
        convs.append({
            "w": w_init(kw, (cout, cin, 3, 3), 9 * cin),            # torch OIHW
            "b": w_init(kb, (cout,), 9 * cin),
            "gamma": 1.0 + 0.1 * jax.random.normal(kg, (cin,), jnp.float32),
            "beta": 0.1 * jax.random.normal(kbt, (cin,), jnp.float32),
        })
    params["convs"] = convs
    return params


# ----------------------------- Pure-JAX reference --------------------------- #
def reference_forward(noise, params, nf, init_size):
    B = noise.shape[0]
    x = jnp.matmul(noise, params["lin_w"].T,
                   precision=lax.Precision.HIGHEST) + params["lin_b"]
    x = x.reshape(B, nf * 2, init_size, init_size)
    for i, st in enumerate(params["convs"]):
        gamma, beta, w, b = st["gamma"], st["beta"], st["w"], st["b"]
        cout, cin = w.shape[0], w.shape[1]
        mean = jnp.mean(x, axis=(0, 2, 3), keepdims=True)
        var = jnp.mean((x - mean) ** 2, axis=(0, 2, 3), keepdims=True)
        x = (x - mean) * lax.rsqrt(var + BN_EPS)
        x = x * gamma.reshape(1, cin, 1, 1) + beta.reshape(1, cin, 1, 1)
        x = jnp.repeat(jnp.repeat(x, 2, axis=2), 2, axis=3)   # nearest upsample
        x = jnp.where(x > 0, x, NEG_SLOPE * x)
        x = lax.conv_general_dilated(
            x, jnp.transpose(w, (2, 3, 1, 0)), window_strides=(1, 1),
            padding=((1, 1), (1, 1)),
            dimension_numbers=("NCHW", "HWIO", "NCHW"),
            precision=lax.Precision.HIGHEST)
        x = x + b.reshape(1, cout, 1, 1)
        if i == 3:
            x = jnp.tanh(x)
    return x


# ----------------------------------- Main ----------------------------------- #
if __name__ == "__main__":
    latent_dim, image_size, num_feature_maps, channels, batch = 16, 32, 4, 3, 2
    init_size = image_size // 16

    key = jax.random.PRNGKey(0)
    k_params, k_noise = jax.random.split(key)
    params = init_params(k_params, latent_dim, image_size, num_feature_maps,
                         channels)
    noise = jax.random.normal(k_noise, (batch, latent_dim), jnp.float32)

    fwd = jax.jit(functools.partial(
        generator_forward, nf=num_feature_maps, init_size=init_size,
        image_size=image_size, channels=channels))
    img = jax.block_until_ready(fwd(noise, params))
    assert img.shape == (batch, channels, image_size, image_size), img.shape

    ref = jax.block_until_ready(
        reference_forward(noise, params, num_feature_maps, init_size))
    max_err = float(jnp.max(jnp.abs(img - ref)))
    assert jnp.allclose(img, ref, atol=5e-3, rtol=5e-3), f"max_err={max_err}"

    print("KERNEL_OK")
</pallas_src>

<mosaic_0001>
module attributes {stable_mosaic.version = 11 : i64} {
  func.func @_generator_kernel(%arg0: memref<2x16xf32, #tpu.memory_space<vmem>>, %arg1: memref<16x32xf32, #tpu.memory_space<vmem>>, %arg2: memref<1x32xf32, #tpu.memory_space<vmem>>, %arg3: memref<1x16xf32, #tpu.memory_space<vmem>>, %arg4: memref<1x16xf32, #tpu.memory_space<vmem>>, %arg5: memref<16x16xf32, #tpu.memory_space<vmem>>, %arg6: memref<3x16x64xf32, #tpu.memory_space<vmem>>, %arg7: memref<3x8x4xf32, #tpu.memory_space<vmem>>, %arg8: memref<1x64xf32, #tpu.memory_space<vmem>>, %arg9: memref<1x64xf32, #tpu.memory_space<vmem>>, %arg10: memref<1x64xf32, #tpu.memory_space<vmem>>, %arg11: memref<64x64xf32, #tpu.memory_space<vmem>>, %arg12: memref<3x64x64xf32, #tpu.memory_space<vmem>>, %arg13: memref<3x16x8xf32, #tpu.memory_space<vmem>>, %arg14: memref<1x64xf32, #tpu.memory_space<vmem>>, %arg15: memref<1x64xf32, #tpu.memory_space<vmem>>, %arg16: memref<1x64xf32, #tpu.memory_space<vmem>>, %arg17: memref<64x64xf32, #tpu.memory_space<vmem>>, %arg18: memref<3x64x64xf32, #tpu.memory_space<vmem>>, %arg19: memref<3x32x16xf32, #tpu.memory_space<vmem>>, %arg20: memref<1x64xf32, #tpu.memory_space<vmem>>, %arg21: memref<1x64xf32, #tpu.memory_space<vmem>>, %arg22: memref<1x64xf32, #tpu.memory_space<vmem>>, %arg23: memref<64x64xf32, #tpu.memory_space<vmem>>, %arg24: memref<3x64x96xf32, #tpu.memory_space<vmem>>, %arg25: memref<3x64x32xf32, #tpu.memory_space<vmem>>, %arg26: memref<1x96xf32, #tpu.memory_space<vmem>>, %arg27: memref<64x96xf32, #tpu.memory_space<vmem>>, %arg28: memref<4x16xf32, #tpu.memory_space<vmem>>) attributes {dimension_semantics = [], scalar_prefetch = 0 : i64, scratch_operands = 1 : i64, tpu.core_type = #tpu.core_type<tc>} {
    %c0 = arith.constant 0 : index
    %c0_0 = arith.constant 0 : index
    %0 = vector.load %arg0[%c0, %c0_0] : memref<2x16xf32, #tpu.memory_space<vmem>>, vector<2x16xf32>
    %c0_1 = arith.constant 0 : index
    %c0_2 = arith.constant 0 : index
    %1 = vector.load %arg1[%c0_1, %c0_2] : memref<16x32xf32, #tpu.memory_space<vmem>>, vector<16x32xf32>
    %cst = arith.constant dense<0.000000e+00> : vector<2x32xf32>
    %2 = tpu.matmul %0, %1, %cst {dimension_numbers = #tpu.dot_dimension_numbers<[1], [0], [0], [1], [0, 0, 1, 1], [], []>} : vector<2x16xf32>, vector<16x32xf32>, vector<2x32xf32> -> vector<2x32xf32>
    %c0_3 = arith.constant 0 : index
    %c0_4 = arith.constant 0 : index
    %3 = vector.load %arg2[%c0_3, %c0_4] : memref<1x32xf32, #tpu.memory_space<vmem>>, vector<1x32xf32>
    %4 = vector.broadcast %3 : vector<1x32xf32> to vector<2x32xf32>
    %5 = arith.addf %2, %4 : vector<2x32xf32>
    %6 = vector.extract_strided_slice %5 {offsets = [0, 0], sizes = [1, 16], strides = [1, 1]} : vector<2x32xf32> to vector<1x16xf32>
    %c0_5 = arith.constant 0 : index
    %c0_6 = arith.constant 0 : index
    %7 = vector.load %arg28[%c0_5, %c0_6] : memref<4x16xf32, #tpu.memory_space<vmem>>, vector<1x16xf32>
    tpu.vector_store %arg28[%c0_5, %c0_6], %6 {strides = array<i32>} : memref<4x16xf32, #tpu.memory_space<vmem>>, vector<1x16xf32>,
    %8 = vector.extract_strided_slice %5 {offsets = [0, 16], sizes = [1, 16], strides = [1, 1]} : vector<2x32xf32> to vector<1x16xf32>
    %c1 = arith.constant 1 : index
    %c0_7 = arith.constant 0 : index
    %9 = vector.load %arg28[%c1, %c0_7] : memref<4x16xf32, #tpu.memory_space<vmem>>, vector<1x16xf32>
    tpu.vector_store %arg28[%c1, %c0_7], %8 {strides = array<i32>} : memref<4x16xf32, #tpu.memory_space<vmem>>, vector<1x16xf32>,
    %10 = vector.extract_strided_slice %5 {offsets = [1, 0], sizes = [1, 16], strides = [1, 1]} : vector<2x32xf32> to vector<1x16xf32>
    %c2 = arith.constant 2 : index
    %c0_8 = arith.constant 0 : index
    %11 = vector.load %arg28[%c2, %c0_8] : memref<4x16xf32, #tpu.memory_space<vmem>>, vector<1x16xf32>
    tpu.vector_store %arg28[%c2, %c0_8], %10 {strides = array<i32>} : memref<4x16xf32, #tpu.memory_space<vmem>>, vector<1x16xf32>,
    %12 = vector.extract_strided_slice %5 {offsets = [1, 16], sizes = [1, 16], strides = [1, 1]} : vector<2x32xf32> to vector<1x16xf32>
    %c3 = arith.constant 3 : index
    %c0_9 = arith.constant 0 : index
    %13 = vector.load %arg28[%c3, %c0_9] : memref<4x16xf32, #tpu.memory_space<vmem>>, vector<1x16xf32>
    tpu.vector_store %arg28[%c3, %c0_9], %12 {strides = array<i32>} : memref<4x16xf32, #tpu.memory_space<vmem>>, vector<1x16xf32>,
    %c0_10 = arith.constant 0 : index
    %c0_11 = arith.constant 0 : index
    %14 = vector.load %arg28[%c0_10, %c0_11] : memref<4x16xf32, #tpu.memory_space<vmem>>, vector<4x16xf32>
    %cst_12 = arith.constant dense<0.000000e+00> : vector<16xf32>
    %15 = vector.multi_reduction <add>, %14, %cst_12 [0] : vector<4x16xf32> to vector<16xf32>
    %16 = vector.shape_cast %15 : vector<16xf32> to vector<1x16xf32>
    %c0_13 = arith.constant 0 : index
    %c0_14 = arith.constant 0 : index
    %17 = vector.load %arg5[%c0_13, %c0_14] : memref<16x16xf32, #tpu.memory_space<vmem>>, vector<16x16xf32>
    %cst_15 = arith.constant dense<0.000000e+00> : vector<1x16xf32>
    %18 = tpu.matmul %16, %17, %cst_15 {dimension_numbers = #tpu.dot_dimension_numbers<[1], [0], [0], [1], [0, 0, 1, 1], [], []>} : vector<1x16xf32>, vector<16x16xf32>, vector<1x16xf32> -> vector<1x16xf32>
    %19 = vector.broadcast %18 : vector<1x16xf32> to vector<4x16xf32>
    %20 = arith.subf %14, %19 : vector<4x16xf32>
    %21 = arith.mulf %20, %20 : vector<4x16xf32>
    %cst_16 = arith.constant dense<0.000000e+00> : vector<16xf32>
    %22 = vector.multi_reduction <add>, %21, %cst_16 [0] : vector<4x16xf32> to vector<16xf32>
    %23 = vector.shape_cast %22 : vector<16xf32> to vector<1x16xf32>
    %c0_17 = arith.constant 0 : index
    %c0_18 = arith.constant 0 : index
    %24 = vector.load %arg5[%c0_17, %c0_18] : memref<16x16xf32, #tpu.memory_space<vmem>>, vector<16x16xf32>
    %cst_19 = arith.constant dense<0.000000e+00> : vector<1x16xf32>
    %25 = tpu.matmul %23, %24, %cst_19 {dimension_numbers = #tpu.dot_dimension_numbers<[1], [0], [0], [1], [0, 0, 1, 1], [], []>} : vector<1x16xf32>, vector<16x16xf32>, vector<1x16xf32> -> vector<1x16xf32>
    %c0_20 = arith.constant 0 : index
    %c0_21 = arith.constant 0 : index
    %26 = vector.load %arg3[%c0_20, %c0_21] : memref<1x16xf32, #tpu.memory_space<vmem>>, vector<1x16xf32>
    %cst_22 = arith.constant 9.99999974E-6 : f32
    %27 = vector.broadcast %cst_22 : f32 to vector<1x16xf32>
    %28 = arith.addf %25, %27 : vector<1x16xf32>
    %29 = math.rsqrt %28 : vector<1x16xf32>
    %30 = arith.mulf %26, %29 : vector<1x16xf32>
    %31 = vector.broadcast %30 : vector<1x16xf32> to vector<4x16xf32>
    %32 = arith.mulf %20, %31 : vector<4x16xf32>
    %c0_23 = arith.constant 0 : index
    %c0_24 = arith.constant 0 : index
    %33 = vector.load %arg4[%c0_23, %c0_24] : memref<1x16xf32, #tpu.memory_space<vmem>>, vector<1x16xf32>
    %34 = vector.broadcast %33 : vector<1x16xf32> to vector<4x16xf32>
    %35 = arith.addf %32, %34 : vector<4x16xf32>
    %cst_25 = arith.constant 0.000000e+00 : f32
    %36 = vector.broadcast %cst_25 : f32 to vector<4x16xf32>
    %37 = arith.cmpf ogt, %35, %36 : vector<4x16xf32>
    %cst_26 = arith.constant 0.00999999977 : f32
    %38 = vector.broadcast %cst_26 : f32 to vector<4x16xf32>
    %39 = arith.mulf %38, %35 : vector<4x16xf32>
    %40 = arith.select %37, %35, %39 : vector<4x16xi1>, vector<4x16xf32>
    %c0_27 = arith.constant 0 : index
    %c0_28 = arith.constant 0 : index
    %c0_29 = arith.constant 0 : index
    %41 = vector.load %arg6[%c0_27, %c0_28, %c0_29] : memref<3x16x64xf32, #tpu.memory_space<vmem>>, vector<1x16x64xf32>
    %42 = vector.shape_cast %41 : vector<1x16x64xf32> to vector<16x64xf32>
    %cst_30 = arith.constant dense<0.000000e+00> : vector<4x64xf32>
    %43 = tpu.matmul %40, %42, %cst_30 {dimension_numbers = #tpu.dot_dimension_numbers<[1], [0], [0], [1], [0, 0, 1, 1], [], []>} : vector<4x16xf32>, vector<16x64xf32>, vector<4x64xf32> -> vector<4x64xf32>
    %c0_31 = arith.constant 0 : index
    %c0_32 = arith.constant 0 : index
    %c0_33 = arith.constant 0 : index
    %44 = vector.load %arg7[%c0_31, %c0_32, %c0_33] : memref<3x8x4xf32, #tpu.memory_space<vmem>>, vector<1x8x4xf32>
    %45 = vector.shape_cast %44 : vector<1x8x4xf32> to vector<8x4xf32>
    %cst_34 = arith.constant dense<0.000000e+00> : vector<8x64xf32>
    %46 = tpu.matmul %45, %43, %cst_34 {dimension_numbers = #tpu.dot_dimension_numbers<[1], [0], [0], [1], [0, 0, 1, 1], [], []>} : vector<8x4xf32>, vector<4x64xf32>, vector<8x64xf32> -> vector<8x64xf32>
    %c1_35 = arith.constant 1 : index
    %c0_36 = arith.constant 0 : index
    %c0_37 = arith.constant 0 : index
    %47 = vector.load %arg6[%c1_35, %c0_36, %c0_37] : memref<3x16x64xf32, #tpu.memory_space<vmem>>, vector<1x16x64xf32>
    %48 = vector.shape_cast %47 : vector<1x16x64xf32> to vector<16x64xf32>
    %cst_38 = arith.constant dense<0.000000e+00> : vector<4x64xf32>
    %49 = tpu.matmul %40, %48, %cst_38 {dimension_numbers = #tpu.dot_dimension_numbers<[1], [0], [0], [1], [0, 0, 1, 1], [], []>} : vector<4x16xf32>, vector<16x64xf32>, vector<4x64xf32> -> vector<4x64xf32>
    %c1_39 = arith.constant 1 : index
    %c0_40 = arith.constant 0 : index
    %c0_41 = arith.constant 0 : index
    %50 = vector.load %arg7[%c1_39, %c0_40, %c0_41] : memref<3x8x4xf32, #tpu.memory_space<vmem>>, vector<1x8x4xf32>
    %51 = vector.shape_cast %50 : vector<1x8x4xf32> to vector<8x4xf32>
    %cst_42 = arith.constant dense<0.000000e+00> : vector<8x64xf32>
    %52 = tpu.matmul %51, %49, %cst_42 {dimension_numbers = #tpu.dot_dimension_numbers<[1], [0], [0], [1], [0, 0, 1, 1], [], []>} : vector<8x4xf32>, vector<4x64xf32>, vector<8x64xf32> -> vector<8x64xf32>
    %53 = arith.addf %46, %52 : vector<8x64xf32>
    %c2_43 = arith.constant 2 : index
    %c0_44 = arith.constant 0 : index
    %c0_45 = arith.constant 0 : index
    %54 = vector.load %arg6[%c2_43, %c0_44, %c0_45] : memref<3x16x64xf32, #tpu.memory_space<vmem>>, vector<1x16x64xf32>
    %55 = vector.shape_cast %54 : vector<1x16x64xf32> to vector<16x64xf32>
    %cst_46 = arith.constant dense<0.000000e+00> : vector<4x64xf32>
    %56 = tpu.matmul %40, %55, %cst_46 {dimension_numbers = #tpu.dot_dimension_numbers<[1], [0], [0], [1], [0, 0, 1, 1], [], []>} : vector<4x16xf32>, vector<16x64xf32>, vector<4x64xf32> -> vector<4x64xf32>
    %c2_47 = arith.constant 2 : index
    %c0_48 = arith.constant 0 : index
    %c0_49 = arith.constant 0 : index
    %57 = vector.load %arg7[%c2_47, %c0_48, %c0_49] : memref<3x8x4xf32, #tpu.memory_space<vmem>>, vector<1x8x4xf32>
    %58 = vector.shape_cast %57 : vector<1x8x4xf32> to vector<8x4xf32>
    %cst_50 = arith.constant dense<0.000000e+00> : vector<8x64xf32>
    %59 = tpu.matmul %58, %56, %cst_50 {dimension_numbers = #tpu.dot_dimension_numbers<[1], [0], [0], [1], [0, 0, 1, 1], [], []>} : vector<8x4xf32>, vector<4x64xf32>, vector<8x64xf32> -> vector<8x64xf32>
    %60 = arith.addf %53, %59 : vector<8x64xf32>
    %c0_51 = arith.constant 0 : index
    %c0_52 = arith.constant 0 : index
    %61 = vector.load %arg8[%c0_51, %c0_52] : memref<1x64xf32, #tpu.memory_space<vmem>>, vector<1x64xf32>
    %62 = vector.broadcast %61 : vector<1x64xf32> to vector<8x64xf32>
    %63 = arith.addf %60, %62 : vector<8x64xf32>
    %cst_53 = arith.constant dense<0.000000e+00> : vector<64xf32>
    %64 = vector.multi_reduction <add>, %63, %cst_53 [0] : vector<8x64xf32> to vector<64xf32>
    %65 = vector.shape_cast %64 : vector<64xf32> to vector<1x64xf32>
    %c0_54 = arith.constant 0 : index
    %c0_55 = arith.constant 0 : index
    %66 = vector.load %arg11[%c0_54, %c0_55] : memref<64x64xf32, #tpu.memory_space<vmem>>, vector<64x64xf32>
    %cst_56 = arith.constant dense<0.000000e+00> : vector<1x64xf32>
    %67 = tpu.matmul %65, %66, %cst_56 {dimension_numbers = #tpu.dot_dimension_numbers<[1], [0], [0], [1], [0, 0, 1, 1], [], []>} : vector<1x64xf32>, vector<64x64xf32>, vector<1x64xf32> -> vector<1x64xf32>
    %68 = vector.broadcast %67 : vector<1x64xf32> to vector<8x64xf32>
    %69 = arith.subf %63, %68 : vector<8x64xf32>
    %70 = arith.mulf %69, %69 : vector<8x64xf32>
    %cst_57 = arith.constant dense<0.000000e+00> : vector<64xf32>
    %71 = vector.multi_reduction <add>, %70, %cst_57 [0] : vector<8x64xf32> to vector<64xf32>
    %72 = vector.shape_cast %71 : vector<64xf32> to vector<1x64xf32>
    %c0_58 = arith.constant 0 : index
    %c0_59 = arith.constant 0 : index
    %73 = vector.load %arg11[%c0_58, %c0_59] : memref<64x64xf32, #tpu.memory_space<vmem>>, vector<64x64xf32>
    %cst_60 = arith.constant dense<0.000000e+00> : vector<1x64xf32>
    %74 = tpu.matmul %72, %73, %cst_60 {dimension_numbers = #tpu.dot_dimension_numbers<[1], [0], [0], [1], [0, 0, 1, 1], [], []>} : vector<1x64xf32>, vector<64x64xf32>, vector<1x64xf32> -> vector<1x64xf32>
    %c0_61 = arith.constant 0 : index
    %c0_62 = arith.constant 0 : index
    %75 = vector.load %arg9[%c0_61, %c0_62] : memref<1x64xf32, #tpu.memory_space<vmem>>, vector<1x64xf32>
    %cst_63 = arith.constant 9.99999974E-6 : f32
    %76 = vector.broadcast %cst_63 : f32 to vector<1x64xf32>
    %77 = arith.addf %74, %76 : vector<1x64xf32>
    %78 = math.rsqrt %77 : vector<1x64xf32>
    %79 = arith.mulf %75, %78 : vector<1x64xf32>
    %80 = vector.broadcast %79 : vector<1x64xf32> to vector<8x64xf32>
    %81 = arith.mulf %69, %80 : vector<8x64xf32>
    %c0_64 = arith.constant 0 : index
    %c0_65 = arith.constant 0 : index
    %82 = vector.load %arg10[%c0_64, %c0_65] : memref<1x64xf32, #tpu.memory_space<vmem>>, vector<1x64xf32>
    %83 = vector.broadcast %82 : vector<1x64xf32> to vector<8x64xf32>
    %84 = arith.addf %81, %83 : vector<8x64xf32>
    %cst_66 = arith.constant 0.000000e+00 : f32
    %85 = vector.broadcast %cst_66 : f32 to vector<8x64xf32>
    %86 = arith.cmpf ogt, %84, %85 : vector<8x64xf32>
    %cst_67 = arith.constant 0.00999999977 : f32
    %87 = vector.broadcast %cst_67 : f32 to vector<8x64xf32>
    %88 = arith.mulf %87, %84 : vector<8x64xf32>
    %89 = arith.select %86, %84, %88 : vector<8x64xi1>, vector<8x64xf32>
    %c0_68 = arith.constant 0 : index
    %c0_69 = arith.constant 0 : index
    %c0_70 = arith.constant 0 : index
    %90 = vector.load %arg12[%c0_68, %c0_69, %c0_70] : memref<3x64x64xf32, #tpu.memory_space<vmem>>, vector<1x64x64xf32>
    %91 = vector.shape_cast %90 : vector<1x64x64xf32> to vector<64x64xf32>
    %cst_71 = arith.constant dense<0.000000e+00> : vector<8x64xf32>
    %92 = tpu.matmul %89, %91, %cst_71 {dimension_numbers = #tpu.dot_dimension_numbers<[1], [0], [0], [1], [0, 0, 1, 1], [], []>} : vector<8x64xf32>, vector<64x64xf32>, vector<8x64xf32> -> vector<8x64xf32>
    %c0_72 = arith.constant 0 : index
    %c0_73 = arith.constant 0 : index
    %c0_74 = arith.constant 0 : index
    %93 = vector.load %arg13[%c0_72, %c0_73, %c0_74] : memref<3x16x8xf32, #tpu.memory_space<vmem>>, vector<1x16x8xf32>
    %94 = vector.shape_cast %93 : vector<1x16x8xf32> to vector<16x8xf32>
    %cst_75 = arith.constant dense<0.000000e+00> : vector<16x64xf32>
    %95 = tpu.matmul %94, %92, %cst_75 {dimension_numbers = #tpu.dot_dimension_numbers<[1], [0], [0], [1], [0, 0, 1, 1], [], []>} : vector<16x8xf32>, vector<8x64xf32>, vector<16x64xf32> -> vector<16x64xf32>
    %c1_76 = arith.constant 1 : index
    %c0_77 = arith.constant 0 : index
    %c0_78 = arith.constant 0 : index
    %96 = vector.load %arg12[%c1_76, %c0_77, %c0_78] : memref<3x64x64xf32, #tpu.memory_space<vmem>>, vector<1x64x64xf32>
    %97 = vector.shape_cast %96 : vector<1x64x64xf32> to vector<64x64xf32>
    %cst_79 = arith.constant dense<0.000000e+00> : vector<8x64xf32>
    %98 = tpu.matmul %89, %97, %cst_79 {dimension_numbers = #tpu.dot_dimension_numbers<[1], [0], [0], [1], [0, 0, 1, 1], [], []>} : vector<8x64xf32>, vector<64x64xf32>, vector<8x64xf32> -> vector<8x64xf32>
    %c1_80 = arith.constant 1 : index
    %c0_81 = arith.constant 0 : index
    %c0_82 = arith.constant 0 : index
    %99 = vector.load %arg13[%c1_80, %c0_81, %c0_82] : memref<3x16x8xf32, #tpu.memory_space<vmem>>, vector<1x16x8xf32>
    %100 = vector.shape_cast %99 : vector<1x16x8xf32> to vector<16x8xf32>
    %cst_83 = arith.constant dense<0.000000e+00> : vector<16x64xf32>
    %101 = tpu.matmul %100, %98, %cst_83 {dimension_numbers = #tpu.dot_dimension_numbers<[1], [0], [0], [1], [0, 0, 1, 1], [], []>} : vector<16x8xf32>, vector<8x64xf32>, vector<16x64xf32> -> vector<16x64xf32>
    %102 = arith.addf %95, %101 : vector<16x64xf32>
    %c2_84 = arith.constant 2 : index
    %c0_85 = arith.constant 0 : index
    %c0_86 = arith.constant 0 : index
    %103 = vector.load %arg12[%c2_84, %c0_85, %c0_86] : memref<3x64x64xf32, #tpu.memory_space<vmem>>, vector<1x64x64xf32>
    %104 = vector.shape_cast %103 : vector<1x64x64xf32> to vector<64x64xf32>
    %cst_87 = arith.constant dense<0.000000e+00> : vector<8x64xf32>
    %105 = tpu.matmul %89, %104, %cst_87 {dimension_numbers = #tpu.dot_dimension_numbers<[1], [0], [0], [1], [0, 0, 1, 1], [], []>} : vector<8x64xf32>, vector<64x64xf32>, vector<8x64xf32> -> vector<8x64xf32>
    %c2_88 = arith.constant 2 : index
    %c0_89 = arith.constant 0 : index
    %c0_90 = arith.constant 0 : index
    %106 = vector.load %arg13[%c2_88, %c0_89, %c0_90] : memref<3x16x8xf32, #tpu.memory_space<vmem>>, vector<1x16x8xf32>
    %107 = vector.shape_cast %106 : vector<1x16x8xf32> to vector<16x8xf32>
    %cst_91 = arith.constant dense<0.000000e+00> : vector<16x64xf32>
    %108 = tpu.matmul %107, %105, %cst_91 {dimension_numbers = #tpu.dot_dimension_numbers<[1], [0], [0], [1], [0, 0, 1, 1], [], []>} : vector<16x8xf32>, vector<8x64xf32>, vector<16x64xf32> -> vector<16x64xf32>
    %109 = arith.addf %102, %108 : vector<16x64xf32>
    %c0_92 = arith.constant 0 : index
    %c0_93 = arith.constant 0 : index
    %110 = vector.load %arg14[%c0_92, %c0_93] : memref<1x64xf32, #tpu.memory_space<vmem>>, vector<1x64xf32>
    %111 = vector.broadcast %110 : vector<1x64xf32> to vector<16x64xf32>
    %112 = arith.addf %109, %111 : vector<16x64xf32>
    %cst_94 = arith.constant dense<0.000000e+00> : vector<64xf32>
    %113 = vector.multi_reduction <add>, %112, %cst_94 [0] : vector<16x64xf32> to vector<64xf32>
    %114 = vector.shape_cast %113 : vector<64xf32> to vector<1x64xf32>
    %c0_95 = arith.constant 0 : index
    %c0_96 = arith.constant 0 : index
    %115 = vector.load %arg17[%c0_95, %c0_96] : memref<64x64xf32, #tpu.memory_space<vmem>>, vector<64x64xf32>
    %cst_97 = arith.constant dense<0.000000e+00> : vector<1x64xf32>
    %116 = tpu.matmul %114, %115, %cst_97 {dimension_numbers = #tpu.dot_dimension_numbers<[1], [0], [0], [1], [0, 0, 1, 1], [], []>} : vector<1x64xf32>, vector<64x64xf32>, vector<1x64xf32> -> vector<1x64xf32>
    %117 = vector.broadcast %116 : vector<1x64xf32> to vector<16x64xf32>
    %118 = arith.subf %112, %117 : vector<16x64xf32>
    %119 = arith.mulf %118, %118 : vector<16x64xf32>
    %cst_98 = arith.constant dense<0.000000e+00> : vector<64xf32>
    %120 = vector.multi_reduction <add>, %119, %cst_98 [0] : vector<16x64xf32> to vector<64xf32>
    %121 = vector.shape_cast %120 : vector<64xf32> to vector<1x64xf32>
    %c0_99 = arith.constant 0 : index
    %c0_100 = arith.constant 0 : index
    %122 = vector.load %arg17[%c0_99, %c0_100] : memref<64x64xf32, #tpu.memory_space<vmem>>, vector<64x64xf32>
    %cst_101 = arith.constant dense<0.000000e+00> : vector<1x64xf32>
    %123 = tpu.matmul %121, %122, %cst_101 {dimension_numbers = #tpu.dot_dimension_numbers<[1], [0], [0], [1], [0, 0, 1, 1], [], []>} : vector<1x64xf32>, vector<64x64xf32>, vector<1x64xf32> -> vector<1x64xf32>
    %c0_102 = arith.constant 0 : index
    %c0_103 = arith.constant 0 : index
    %124 = vector.load %arg15[%c0_102, %c0_103] : memref<1x64xf32, #tpu.memory_space<vmem>>, vector<1x64xf32>
    %cst_104 = arith.constant 9.99999974E-6 : f32
    %125 = vector.broadcast %cst_104 : f32 to vector<1x64xf32>
    %126 = arith.addf %123, %125 : vector<1x64xf32>
    %127 = math.rsqrt %126 : vector<1x64xf32>
    %128 = arith.mulf %124, %127 : vector<1x64xf32>
    %129 = vector.broadcast %128 : vector<1x64xf32> to vector<16x64xf32>
    %130 = arith.mulf %118, %129 : vector<16x64xf32>
    %c0_105 = arith.constant 0 : index
    %c0_106 = arith.constant 0 : index
    %131 = vector.load %arg16[%c0_105, %c0_106] : memref<1x64xf32, #tpu.memory_space<vmem>>, vector<1x64xf32>
    %132 = vector.broadcast %131 : vector<1x64xf32> to vector<16x64xf32>
    %133 = arith.addf %130, %132 : vector<16x64xf32>
    %cst_107 = arith.constant 0.000000e+00 : f32
    %134 = vector.broadcast %cst_107 : f32 to vector<16x64xf32>
    %135 = arith.cmpf ogt, %133, %134 : vector<16x64xf32>
    %cst_108 = arith.constant 0.00999999977 : f32
    %136 = vector.broadcast %cst_108 : f32 to vector<16x64xf32>
    %137 = arith.mulf %136, %133 : vector<16x64xf32>
    %138 = arith.select %135, %133, %137 : vector<16x64xi1>, vector<16x64xf32>
    %c0_109 = arith.constant 0 : index
    %c0_110 = arith.constant 0 : index
    %c0_111 = arith.constant 0 : index
    %139 = vector.load %arg18[%c0_109, %c0_110, %c0_111] : memref<3x64x64xf32, #tpu.memory_space<vmem>>, vector<1x64x64xf32>
    %140 = vector.shape_cast %139 : vector<1x64x64xf32> to vector<64x64xf32>
    %cst_112 = arith.constant dense<0.000000e+00> : vector<16x64xf32>
    %141 = tpu.matmul %138, %140, %cst_112 {dimension_numbers = #tpu.dot_dimension_numbers<[1], [0], [0], [1], [0, 0, 1, 1], [], []>} : vector<16x64xf32>, vector<64x64xf32>, vector<16x64xf32> -> vector<16x64xf32>
    %c0_113 = arith.constant 0 : index
    %c0_114 = arith.constant 0 : index
    %c0_115 = arith.constant 0 : index
    %142 = vector.load %arg19[%c0_113, %c0_114, %c0_115] : memref<3x32x16xf32, #tpu.memory_space<vmem>>, vector<1x32x16xf32>
    %143 = vector.shape_cast %142 : vector<1x32x16xf32> to vector<32x16xf32>
    %cst_116 = arith.constant dense<0.000000e+00> : vector<32x64xf32>
    %144 = tpu.matmul %143, %141, %cst_116 {dimension_numbers = #tpu.dot_dimension_numbers<[1], [0], [0], [1], [0, 0, 1, 1], [], []>} : vector<32x16xf32>, vector<16x64xf32>, vector<32x64xf32> -> vector<32x64xf32>
    %c1_117 = arith.constant 1 : index
    %c0_118 = arith.constant 0 : index
    %c0_119 = arith.constant 0 : index
    %145 = vector.load %arg18[%c1_117, %c0_118, %c0_119] : memref<3x64x64xf32, #tpu.memory_space<vmem>>, vector<1x64x64xf32>
    %146 = vector.shape_cast %145 : vector<1x64x64xf32> to vector<64x64xf32>
    %cst_120 = arith.constant dense<0.000000e+00> : vector<16x64xf32>
    %147 = tpu.matmul %138, %146, %cst_120 {dimension_numbers = #tpu.dot_dimension_numbers<[1], [0], [0], [1], [0, 0, 1, 1], [], []>} : vector<16x64xf32>, vector<64x64xf32>, vector<16x64xf32> -> vector<16x64xf32>
    %c1_121 = arith.constant 1 : index
    %c0_122 = arith.constant 0 : index
    %c0_123 = arith.constant 0 : index
    %148 = vector.load %arg19[%c1_121, %c0_122, %c0_123] : memref<3x32x16xf32, #tpu.memory_space<vmem>>, vector<1x32x16xf32>
    %149 = vector.shape_cast %148 : vector<1x32x16xf32> to vector<32x16xf32>
    %cst_124 = arith.constant dense<0.000000e+00> : vector<32x64xf32>
    %150 = tpu.matmul %149, %147, %cst_124 {dimension_numbers = #tpu.dot_dimension_numbers<[1], [0], [0], [1], [0, 0, 1, 1], [], []>} : vector<32x16xf32>, vector<16x64xf32>, vector<32x64xf32> -> vector<32x64xf32>
    %151 = arith.addf %144, %150 : vector<32x64xf32>
    %c2_125 = arith.constant 2 : index
    %c0_126 = arith.constant 0 : index
    %c0_127 = arith.constant 0 : index
    %152 = vector.load %arg18[%c2_125, %c0_126, %c0_127] : memref<3x64x64xf32, #tpu.memory_space<vmem>>, vector<1x64x64xf32>
    %153 = vector.shape_cast %152 : vector<1x64x64xf32> to vector<64x64xf32>
    %cst_128 = arith.constant dense<0.000000e+00> : vector<16x64xf32>
    %154 = tpu.matmul %138, %153, %cst_128 {dimension_numbers = #tpu.dot_dimension_numbers<[1], [0], [0], [1], [0, 0, 1, 1], [], []>} : vector<16x64xf32>, vector<64x64xf32>, vector<16x64xf32> -> vector<16x64xf32>
    %c2_129 = arith.constant 2 : index
    %c0_130 = arith.constant 0 : index
    %c0_131 = arith.constant 0 : index
    %155 = vector.load %arg19[%c2_129, %c0_130, %c0_131] : memref<3x32x16xf32, #tpu.memory_space<vmem>>, vector<1x32x16xf32>
    %156 = vector.shape_cast %155 : vector<1x32x16xf32> to vector<32x16xf32>
    %cst_132 = arith.constant dense<0.000000e+00> : vector<32x64xf32>
    %157 = tpu.matmul %156, %154, %cst_132 {dimension_numbers = #tpu.dot_dimension_numbers<[1], [0], [0], [1], [0, 0, 1, 1], [], []>} : vector<32x16xf32>, vector<16x64xf32>, vector<32x64xf32> -> vector<32x64xf32>
    %158 = arith.addf %151, %157 : vector<32x64xf32>
    %c0_133 = arith.constant 0 : index
    %c0_134 = arith.constant 0 : index
    %159 = vector.load %arg20[%c0_133, %c0_134] : memref<1x64xf32, #tpu.memory_space<vmem>>, vector<1x64xf32>
    %160 = vector.broadcast %159 : vector<1x64xf32> to vector<32x64xf32>
    %161 = arith.addf %158, %160 : vector<32x64xf32>
    %cst_135 = arith.constant dense<0.000000e+00> : vector<64xf32>
    %162 = vector.multi_reduction <add>, %161, %cst_135 [0] : vector<32x64xf32> to vector<64xf32>
    %163 = vector.shape_cast %162 : vector<64xf32> to vector<1x64xf32>
    %c0_136 = arith.constant 0 : index
    %c0_137 = arith.constant 0 : index
    %164 = vector.load %arg23[%c0_136, %c0_137] : memref<64x64xf32, #tpu.memory_space<vmem>>, vector<64x64xf32>
    %cst_138 = arith.constant dense<0.000000e+00> : vector<1x64xf32>
    %165 = tpu.matmul %163, %164, %cst_138 {dimension_numbers = #tpu.dot_dimension_numbers<[1], [0], [0], [1], [0, 0, 1, 1], [], []>} : vector<1x64xf32>, vector<64x64xf32>, vector<1x64xf32> -> vector<1x64xf32>
    %166 = vector.broadcast %165 : vector<1x64xf32> to vector<32x64xf32>
    %167 = arith.subf %161, %166 : vector<32x64xf32>
    %168 = arith.mulf %167, %167 : vector<32x64xf32>
    %cst_139 = arith.constant dense<0.000000e+00> : vector<64xf32>
    %169 = vector.multi_reduction <add>, %168, %cst_139 [0] : vector<32x64xf32> to vector<64xf32>
    %170 = vector.shape_cast %169 : vector<64xf32> to vector<1x64xf32>
    %c0_140 = arith.constant 0 : index
    %c0_141 = arith.constant 0 : index
    %171 = vector.load %arg23[%c0_140, %c0_141] : memref<64x64xf32, #tpu.memory_space<vmem>>, vector<64x64xf32>
    %cst_142 = arith.constant dense<0.000000e+00> : vector<1x64xf32>
    %172 = tpu.matmul %170, %171, %cst_142 {dimension_numbers = #tpu.dot_dimension_numbers<[1], [0], [0], [1], [0, 0, 1, 1], [], []>} : vector<1x64xf32>, vector<64x64xf32>, vector<1x64xf32> -> vector<1x64xf32>
    %c0_143 = arith.constant 0 : index
    %c0_144 = arith.constant 0 : index
    %173 = vector.load %arg21[%c0_143, %c0_144] : memref<1x64xf32, #tpu.memory_space<vmem>>, vector<1x64xf32>
    %cst_145 = arith.constant 9.99999974E-6 : f32
    %174 = vector.broadcast %cst_145 : f32 to vector<1x64xf32>
    %175 = arith.addf %172, %174 : vector<1x64xf32>
    %176 = math.rsqrt %175 : vector<1x64xf32>
    %177 = arith.mulf %173, %176 : vector<1x64xf32>
    %178 = vector.broadcast %177 : vector<1x64xf32> to vector<32x64xf32>
    %179 = arith.mulf %167, %178 : vector<32x64xf32>
    %c0_146 = arith.constant 0 : index
    %c0_147 = arith.constant 0 : index
    %180 = vector.load %arg22[%c0_146, %c0_147] : memref<1x64xf32, #tpu.memory_space<vmem>>, vector<1x64xf32>
    %181 = vector.broadcast %180 : vector<1x64xf32> to vector<32x64xf32>
    %182 = arith.addf %179, %181 : vector<32x64xf32>
    %cst_148 = arith.constant 0.000000e+00 : f32
    %183 = vector.broadcast %cst_148 : f32 to vector<32x64xf32>
    %184 = arith.cmpf ogt, %182, %183 : vector<32x64xf32>
    %cst_149 = arith.constant 0.00999999977 : f32
    %185 = vector.broadcast %cst_149 : f32 to vector<32x64xf32>
    %186 = arith.mulf %185, %182 : vector<32x64xf32>
    %187 = arith.select %184, %182, %186 : vector<32x64xi1>, vector<32x64xf32>
    %c0_150 = arith.constant 0 : index
    %c0_151 = arith.constant 0 : index
    %c0_152 = arith.constant 0 : index
    %188 = vector.load %arg24[%c0_150, %c0_151, %c0_152] : memref<3x64x96xf32, #tpu.memory_space<vmem>>, vector<1x64x96xf32>
    %189 = vector.shape_cast %188 : vector<1x64x96xf32> to vector<64x96xf32>
    %cst_153 = arith.constant dense<0.000000e+00> : vector<32x96xf32>
    %190 = tpu.matmul %187, %189, %cst_153 {dimension_numbers = #tpu.dot_dimension_numbers<[1], [0], [0], [1], [0, 0, 1, 1], [], []>} : vector<32x64xf32>, vector<64x96xf32>, vector<32x96xf32> -> vector<32x96xf32>
    %c0_154 = arith.constant 0 : index
    %c0_155 = arith.constant 0 : index
    %c0_156 = arith.constant 0 : index
    %191 = vector.load %arg25[%c0_154, %c0_155, %c0_156] : memref<3x64x32xf32, #tpu.memory_space<vmem>>, vector<1x64x32xf32>
    %192 = vector.shape_cast %191 : vector<1x64x32xf32> to vector<64x32xf32>
    %cst_157 = arith.constant dense<0.000000e+00> : vector<64x96xf32>
    %193 = tpu.matmul %192, %190, %cst_157 {dimension_numbers = #tpu.dot_dimension_numbers<[1], [0], [0], [1], [0, 0, 1, 1], [], []>} : vector<64x32xf32>, vector<32x96xf32>, vector<64x96xf32> -> vector<64x96xf32>
    %c1_158 = arith.constant 1 : index
    %c0_159 = arith.constant 0 : index
    %c0_160 = arith.constant 0 : index
    %194 = vector.load %arg24[%c1_158, %c0_159, %c0_160] : memref<3x64x96xf32, #tpu.memory_space<vmem>>, vector<1x64x96xf32>
    %195 = vector.shape_cast %194 : vector<1x64x96xf32> to vector<64x96xf32>
    %cst_161 = arith.constant dense<0.000000e+00> : vector<32x96xf32>
    %196 = tpu.matmul %187, %195, %cst_161 {dimension_numbers = #tpu.dot_dimension_numbers<[1], [0], [0], [1], [0, 0, 1, 1], [], []>} : vector<32x64xf32>, vector<64x96xf32>, vector<32x96xf32> -> vector<32x96xf32>
    %c1_162 = arith.constant 1 : index
    %c0_163 = arith.constant 0 : index
    %c0_164 = arith.constant 0 : index
    %197 = vector.load %arg25[%c1_162, %c0_163, %c0_164] : memref<3x64x32xf32, #tpu.memory_space<vmem>>, vector<1x64x32xf32>
    %198 = vector.shape_cast %197 : vector<1x64x32xf32> to vector<64x32xf32>
    %cst_165 = arith.constant dense<0.000000e+00> : vector<64x96xf32>
    %199 = tpu.matmul %198, %196, %cst_165 {dimension_numbers = #tpu.dot_dimension_numbers<[1], [0], [0], [1], [0, 0, 1, 1], [], []>} : vector<64x32xf32>, vector<32x96xf32>, vector<64x96xf32> -> vector<64x96xf32>
    %200 = arith.addf %193, %199 : vector<64x96xf32>
    %c2_166 = arith.constant 2 : index
    %c0_167 = arith.constant 0 : index
    %c0_168 = arith.constant 0 : index
    %201 = vector.load %arg24[%c2_166, %c0_167, %c0_168] : memref<3x64x96xf32, #tpu.memory_space<vmem>>, vector<1x64x96xf32>
    %202 = vector.shape_cast %201 : vector<1x64x96xf32> to vector<64x96xf32>
    %cst_169 = arith.constant dense<0.000000e+00> : vector<32x96xf32>
    %203 = tpu.matmul %187, %202, %cst_169 {dimension_numbers = #tpu.dot_dimension_numbers<[1], [0], [0], [1], [0, 0, 1, 1], [], []>} : vector<32x64xf32>, vector<64x96xf32>, vector<32x96xf32> -> vector<32x96xf32>
    %c2_170 = arith.constant 2 : index
    %c0_171 = arith.constant 0 : index
    %c0_172 = arith.constant 0 : index
    %204 = vector.load %arg25[%c2_170, %c0_171, %c0_172] : memref<3x64x32xf32, #tpu.memory_space<vmem>>, vector<1x64x32xf32>
    %205 = vector.shape_cast %204 : vector<1x64x32xf32> to vector<64x32xf32>
    %cst_173 = arith.constant dense<0.000000e+00> : vector<64x96xf32>
    %206 = tpu.matmul %205, %203, %cst_173 {dimension_numbers = #tpu.dot_dimension_numbers<[1], [0], [0], [1], [0, 0, 1, 1], [], []>} : vector<64x32xf32>, vector<32x96xf32>, vector<64x96xf32> -> vector<64x96xf32>
    %207 = arith.addf %200, %206 : vector<64x96xf32>
    %c0_174 = arith.constant 0 : index
    %c0_175 = arith.constant 0 : index
    %208 = vector.load %arg26[%c0_174, %c0_175] : memref<1x96xf32, #tpu.memory_space<vmem>>, vector<1x96xf32>
    %209 = vector.broadcast %208 : vector<1x96xf32> to vector<64x96xf32>
    %210 = arith.addf %207, %209 : vector<64x96xf32>
    %211 = math.tanh %210 : vector<64x96xf32>
    %c0_176 = arith.constant 0 : index
    %c0_177 = arith.constant 0 : index
    %212 = vector.load %arg27[%c0_176, %c0_177] : memref<64x96xf32, #tpu.memory_space<vmem>>, vector<64x96xf32>
    tpu.vector_store %arg27[%c0_176, %c0_177], %211 {strides = array<i32>} : memref<64x96xf32, #tpu.memory_space<vmem>>, vector<64x96xf32>,
    return
  }
}

</mosaic_0001>

<llo_original>
// kernel: tile.118
$region0: #{tile.118}
  #allocation0 [shape = 's32[1]{0}', space=sflag, size = 0x4, scoped, tag = 'scoped memory for tile.118']
  %s0 = inlined_call_operand.vmem [shape: f32[3], index: 0, kind: input, shape index: {}]
  %s1 = inlined_call_operand.vmem [shape: f32[32,3], index: 1, kind: output, shape index: {}]
  // Predicated region
  $region2: #{tile.118} parent=0 // pred_check
    _
  $region3: #{tile.118} parent=0 // pred_check_branch
    %3 = sbr.rel (0) target = $region5
  $region4: #{tile.118} parent=0 // pred_region
    _
  $region5: #{tile.118} parent=0 // pred_fallthru
    _
  %v4 = vld [vmem:[%s0] ss:$0 sm:$0xff]
  %5 = vst [vmem:[%s1] sm:$0xff] %v4
  %s6 = scalar_lea.vmem %s1, 8
  %7 = vst [vmem:[%s6] sm:$0xff] %v4
  %s8 = scalar_lea.vmem %s1, 16
  %9 = vst [vmem:[%s8] sm:$0xff] %v4
  %s10 = scalar_lea.vmem %s1, 24
  %11 = vst [vmem:[%s10] sm:$0xff] %v4

// kernel: tile.119
$region0: #{tile.119}
  %s0 = inlined_call_operand.vmem [shape: f32[32,3], index: 0, kind: input, shape index: {}]
  %s1 = inlined_call_operand.vmem [shape: f32[1,96], index: 1, kind: output, shape index: {}]
  $region1: #{tile.119} parent=0
    #allocation0 [shape = 'u8[4096]{0}', space=vmem, size = 0x1000, scoped, tag = 'scoped mem for output reshape']
    %v2 = vld [vmem:[%s0] sm:$0x1]
    %vm3 = vcmask 23552
    %4 = vst.msk [vmem:[#allocation0] sm:$0x1] %vm3, %v2
    %s5 = scalar_lea.vmem %s0, 31
    %v6 = vld [vmem:[%s5] sm:$0x1]
    %7 = vrot.lane.b32.xlu0 %v6, 93
    %v8 = vpop.permute.xlu0 %7
    %vm9 = vcmask 786152
    %10 = vst.msk [vmem:[#allocation0] sm:$0x1] %vm9, %v8
    %s11 = scalar_lea.vmem %s0, 30
    %v12 = vld [vmem:[%s11] sm:$0x1]
    %13 = vrot.lane.b32.xlu0 %v12, 90
    %v14 = vpop.permute.xlu0 %13
    %vm15 = vcmask 761552
    %16 = vst.msk [vmem:[#allocation0] sm:$0x1] %vm15, %v14
    %s17 = scalar_lea.vmem %s0, 29
    %v18 = vld [vmem:[%s17] sm:$0x1]
    %19 = vrot.lane.b32.xlu0 %v18, 87
    %v20 = vpop.permute.xlu0 %19
    %vm21 = vcmask 736952
    %22 = vst.msk [vmem:[#allocation0] sm:$0x1] %vm21, %v20
    %s23 = scalar_lea.vmem %s0, 28
    %v24 = vld [vmem:[%s23] sm:$0x1]
    %25 = vrot.lane.b32.xlu0 %v24, 84
    %v26 = vpop.permute.xlu0 %25
    %vm27 = vcmask 712352
    %28 = vst.msk [vmem:[#allocation0] sm:$0x1] %vm27, %v26
    %s29 = scalar_lea.vmem %s0, 27
    %v30 = vld [vmem:[%s29] sm:$0x1]
    %31 = vrot.lane.b32.xlu0 %v30, 81
    %v32 = vpop.permute.xlu0 %31
    %vm33 = vcmask 687752
    %34 = vst.msk [vmem:[#allocation0] sm:$0x1] %vm33, %v32
    %s35 = scalar_lea.vmem %s0, 26
    %v36 = vld [vmem:[%s35] sm:$0x1]
    %37 = vrot.lane.b32.xlu0 %v36, 78
    %v38 = vpop.permute.xlu0 %37
    %vm39 = vcmask 663152
    %40 = vst.msk [vmem:[#allocation0] sm:$0x1] %vm39, %v38
    %s41 = scalar_lea.vmem %s0, 25
    %v42 = vld [vmem:[%s41] sm:$0x1]
    %43 = vrot.lane.b32.xlu0 %v42, 75
    %v44 = vpop.permute.xlu0 %43
    %vm45 = vcmask 638552
    %46 = vst.msk [vmem:[#allocation0] sm:$0x1] %vm45, %v44
    %s47 = scalar_lea.vmem %s0, 24
    %v48 = vld [vmem:[%s47] sm:$0x1]
    %49 = vrot.lane.b32.xlu0 %v48, 72
    %v50 = vpop.permute.xlu0 %49
    %vm51 = vcmask 613952
    %52 = vst.msk [vmem:[#allocation0] sm:$0x1] %vm51, %v50
    %s53 = scalar_lea.vmem %s0, 23
    %v54 = vld [vmem:[%s53] sm:$0x1]
    %55 = vrot.lane.b32.xlu0 %v54, 69
    %v56 = vpop.permute.xlu0 %55
    %vm57 = vcmask 589352
    %58 = vst.msk [vmem:[#allocation0] sm:$0x1] %vm57, %v56
    %s59 = scalar_lea.vmem %s0, 22
    %v60 = vld [vmem:[%s59] sm:$0x1]
    %61 = vrot.lane.b32.xlu0 %v60, 66
    %v62 = vpop.permute.xlu0 %61
    %vm63 = vcmask 564752
    %64 = vst.msk [vmem:[#allocation0] sm:$0x1] %vm63, %v62
    %s65 = scalar_lea.vmem %s0, 21
    %v66 = vld [vmem:[%s65] sm:$0x1]
    %67 = vrot.lane.b32.xlu0 %v66, 63
    %v68 = vpop.permute.xlu0 %67
    %vm69 = vcmask 540152
    %70 = vst.msk [vmem:[#allocation0] sm:$0x1] %vm69, %v68
    %s71 = scalar_lea.vmem %s0, 20
    %v72 = vld [vmem:[%s71] sm:$0x1]
    %73 = vrot.lane.b32.xlu0 %v72, 60
    %v74 = vpop.permute.xlu0 %73
    %vm75 = vcmask 515552
    %76 = vst.msk [vmem:[#allocation0] sm:$0x1] %vm75, %v74
    %s77 = scalar_lea.vmem %s0, 19
    %v78 = vld [vmem:[%s77] sm:$0x1]
    %79 = vrot.lane.b32.xlu0 %v78, 57
    %v80 = vpop.permute.xlu0 %79
    %vm81 = vcmask 490952
    %82 = vst.msk [vmem:[#allocation0] sm:$0x1] %vm81, %v80
    %s83 = scalar_lea.vmem %s0, 18
    %v84 = vld [vmem:[%s83] sm:$0x1]
    %85 = vrot.lane.b32.xlu0 %v84, 54
    %v86 = vpop.permute.xlu0 %85
    %vm87 = vcmask 466352
    %88 = vst.msk [vmem:[#allocation0] sm:$0x1] %vm87, %v86
    %s89 = scalar_lea.vmem %s0, 17
    %v90 = vld [vmem:[%s89] sm:$0x1]
    %91 = vrot.lane.b32.xlu0 %v90, 51
    %v92 = vpop.permute.xlu0 %91
    %vm93 = vcmask 441752
    %94 = vst.msk [vmem:[#allocation0] sm:$0x1] %vm93, %v92
    %s95 = scalar_lea.vmem %s0, 16
    %v96 = vld [vmem:[%s95] sm:$0x1]
    %97 = vrot.lane.b32.xlu0 %v96, 48
    %v98 = vpop.permute.xlu0 %97
    %vm99 = vcmask 417152
    %100 = vst.msk [vmem:[#allocation0] sm:$0x1] %vm99, %v98
    %s101 = scalar_lea.vmem %s0, 15
    %v102 = vld [vmem:[%s101] sm:$0x1]
    %103 = vrot.lane.b32.xlu0 %v102, 45
    %v104 = vpop.permute.xlu0 %103
    %vm105 = vcmask 392552
    %106 = vst.msk [vmem:[#allocation0] sm:$0x1] %vm105, %v104
    %s107 = scalar_lea.vmem %s0, 14
    %v108 = vld [vmem:[%s107] sm:$0x1]
    %109 = vrot.lane.b32.xlu0 %v108, 42
    %v110 = vpop.permute.xlu0 %109
    %vm111 = vcmask 367952
    %112 = vst.msk [vmem:[#allocation0] sm:$0x1] %vm111, %v110
    %s113 = scalar_lea.vmem %s0, 13
    %v114 = vld [vmem:[%s113] sm:$0x1]
    %115 = vrot.lane.b32.xlu0 %v114, 39
    %v116 = vpop.permute.xlu0 %115
    %vm117 = vcmask 343352
    %118 = vst.msk [vmem:[#allocation0] sm:$0x1] %vm117, %v116
    %s119 = scalar_lea.vmem %s0, 12
    %v120 = vld [vmem:[%s119] sm:$0x1]
    %121 = vrot.lane.b32.xlu0 %v120, 36
    %v122 = vpop.permute.xlu0 %121
    %vm123 = vcmask 318752
    %124 = vst.msk [vmem:[#allocation0] sm:$0x1] %vm123, %v122
    %s125 = scalar_lea.vmem %s0, 11
    %v126 = vld [vmem:[%s125] sm:$0x1]
    %127 = vrot.lane.b32.xlu0 %v126, 33
    %v128 = vpop.permute.xlu0 %127
    %vm129 = vcmask 294152
    %130 = vst.msk [vmem:[#allocation0] sm:$0x1] %vm129, %v128
    %s131 = scalar_lea.vmem %s0, 10
    %v132 = vld [vmem:[%s131] sm:$0x1]
    %133 = vrot.lane.b32.xlu0 %v132, 30
    %v134 = vpop.permute.xlu0 %133
    %vm135 = vcmask 269552
    %136 = vst.msk [vmem:[#allocation0] sm:$0x1] %vm135, %v134
    %s137 = scalar_lea.vmem %s0, 9
    %v138 = vld [vmem:[%s137] sm:$0x1]
    %139 = vrot.lane.b32.xlu0 %v138, 27
    %v140 = vpop.permute.xlu0 %139
    %vm141 = vcmask 244952
    %142 = vst.msk [vmem:[#allocation0] sm:$0x1] %vm141, %v140
    %s143 = scalar_lea.vmem %s0, 8
    %v144 = vld [vmem:[%s143] sm:$0x1]
    %145 = vrot.lane.b32.xlu0 %v144, 24
    %v146 = vpop.permute.xlu0 %145
    %vm147 = vcmask 220352
    %148 = vst.msk [vmem:[#allocation0] sm:$0x1] %vm147, %v146
    %s149 = scalar_lea.vmem %s0, 7
    %v150 = vld [vmem:[%s149] sm:$0x1]
    %151 = vrot.lane.b32.xlu0 %v150, 21
    %v152 = vpop.permute.xlu0 %151
    %vm153 = vcmask 195752
    %154 = vst.msk [vmem:[#allocation0] sm:$0x1] %vm153, %v152
    %s155 = scalar_lea.vmem %s0, 6
    %v156 = vld [vmem:[%s155] sm:$0x1]
    %157 = vrot.lane.b32.xlu0 %v156, 18
    %v158 = vpop.permute.xlu0 %157
    %vm159 = vcmask 171152
    %160 = vst.msk [vmem:[#allocation0] sm:$0x1] %vm159, %v158
    %s161 = scalar_lea.vmem %s0, 5
    %v162 = vld [vmem:[%s161] sm:$0x1]
    %163 = vrot.lane.b32.xlu0 %v162, 15
    %v164 = vpop.permute.xlu0 %163
    %vm165 = vcmask 146552
    %166 = vst.msk [vmem:[#allocation0] sm:$0x1] %vm165, %v164
    %s167 = scalar_lea.vmem %s0, 4
    %v168 = vld [vmem:[%s167] sm:$0x1]
    %169 = vrot.lane.b32.xlu0 %v168, 12
    %v170 = vpop.permute.xlu0 %169
    %vm171 = vcmask 121952
    %172 = vst.msk [vmem:[#allocation0] sm:$0x1] %vm171, %v170
    %s173 = scalar_lea.vmem %s0, 3
    %v174 = vld [vmem:[%s173] sm:$0x1]
    %175 = vrot.lane.b32.xlu0 %v174, 9
    %v176 = vpop.permute.xlu0 %175
    %vm177 = vcmask 97352
    %178 = vst.msk [vmem:[#allocation0] sm:$0x1] %vm177, %v176
    %s179 = scalar_lea.vmem %s0, 2
    %v180 = vld [vmem:[%s179] sm:$0x1]
    %181 = vrot.lane.b32.xlu0 %v180, 6
    %v182 = vpop.permute.xlu0 %181
    %vm183 = vcmask 72752
    %184 = vst.msk [vmem:[#allocation0] sm:$0x1] %vm183, %v182
    %s185 = scalar_lea.vmem %s0, 1
    %v186 = vld [vmem:[%s185] sm:$0x1]
    %187 = vrot.lane.b32.xlu0 %v186, 3
    %v188 = vpop.permute.xlu0 %187
    %vm189 = vcmask 48152
    %190 = vst.msk [vmem:[#allocation0] sm:$0x1] %vm189, %v188
    %s192 = sshll.u32 1, 1
    %s193 = ssub.s32 %s192, 1
    %v195 = vld [vmem:[#allocation0] sm:%s193]
    %s196 = sshll.u32 1, 1
    %s197 = ssub.s32 %s196, 1
    %198 = vst [vmem:[%s1] sm:%s197] %v195

// kernel: tile.103
$region0: #{tile.103}
  #allocation0 [shape = 's32[1]{0}', space=sflag, size = 0x4, scoped, tag = 'scoped memory for tile.103']
  %s0 = inlined_call_operand.vmem [shape: f32[4], index: 0, kind: input, shape index: {}]
  %s1 = inlined_call_operand.vmem [shape: f32[16,4], index: 1, kind: output, shape index: {}]
  // Predicated region
  $region2: #{tile.103} parent=0 // pred_check
    _
  $region3: #{tile.103} parent=0 // pred_check_branch
    %3 = sbr.rel (0) target = $region5
  $region4: #{tile.103} parent=0 // pred_region
    _
  $region5: #{tile.103} parent=0 // pred_fallthru
    _
  %v4 = vld [vmem:[%s0] ss:$0 sm:$0xff]
  %5 = vst [vmem:[%s1] sm:$0xff] %v4
  %s6 = scalar_lea.vmem %s1, 8
  %7 = vst [vmem:[%s6] sm:$0xff] %v4

// kernel: tile.104
$region0: #{tile.104}
  %s0 = inlined_call_operand.vmem [shape: f32[16,4], index: 0, kind: input, shape index: {}]
  %s1 = inlined_call_operand.vmem [shape: f32[1,64], index: 1, kind: output, shape index: {}]
  $region1: #{tile.104} parent=0
    #allocation0 [shape = 'u8[4096]{0}', space=vmem, size = 0x1000, scoped, tag = 'scoped mem for output reshape']
    %v2 = vld [vmem:[%s0] sm:$0x1]
    %vm3 = vcmask 31744
    %4 = vst.msk [vmem:[#allocation0] sm:$0x1] %vm3, %v2
    %s5 = scalar_lea.vmem %s0, 15
    %v6 = vld [vmem:[%s5] sm:$0x1]
    %7 = vrot.lane.b32.xlu0 %v6, 60
    %v8 = vpop.permute.xlu0 %7
    %vm9 = vcmask 523744
    %10 = vst.msk [vmem:[#allocation0] sm:$0x1] %vm9, %v8
    %s11 = scalar_lea.vmem %s0, 14
    %v12 = vld [vmem:[%s11] sm:$0x1]
    %13 = vrot.lane.b32.xlu0 %v12, 56
    %v14 = vpop.permute.xlu0 %13
    %vm15 = vcmask 490944
    %16 = vst.msk [vmem:[#allocation0] sm:$0x1] %vm15, %v14
    %s17 = scalar_lea.vmem %s0, 13
    %v18 = vld [vmem:[%s17] sm:$0x1]
    %19 = vrot.lane.b32.xlu0 %v18, 52
    %v20 = vpop.permute.xlu0 %19
    %vm21 = vcmask 458144
    %22 = vst.msk [vmem:[#allocation0] sm:$0x1] %vm21, %v20
    %s23 = scalar_lea.vmem %s0, 12
    %v24 = vld [vmem:[%s23] sm:$0x1]
    %25 = vrot.lane.b32.xlu0 %v24, 48
    %v26 = vpop.permute.xlu0 %25
    %vm27 = vcmask 425344
    %28 = vst.msk [vmem:[#allocation0] sm:$0x1] %vm27, %v26
    %s29 = scalar_lea.vmem %s0, 11
    %v30 = vld [vmem:[%s29] sm:$0x1]
    %31 = vrot.lane.b32.xlu0 %v30, 44
    %v32 = vpop.permute.xlu0 %31
    %vm33 = vcmask 392544
    %34 = vst.msk [vmem:[#allocation0] sm:$0x1] %vm33, %v32
    %s35 = scalar_lea.vmem %s0, 10
    %v36 = vld [vmem:[%s35] sm:$0x1]
    %37 = vrot.lane.b32.xlu0 %v36, 40
    %v38 = vpop.permute.xlu0 %37
    %vm39 = vcmask 359744
    %40 = vst.msk [vmem:[#allocation0] sm:$0x1] %vm39, %v38
    %s41 = scalar_lea.vmem %s0, 9
    %v42 = vld [vmem:[%s41] sm:$0x1]
    %43 = vrot.lane.b32.xlu0 %v42, 36
    %v44 = vpop.permute.xlu0 %43
    %vm45 = vcmask 326944
    %46 = vst.msk [vmem:[#allocation0] sm:$0x1] %vm45, %v44
    %s47 = scalar_lea.vmem %s0, 8
    %v48 = vld [vmem:[%s47] sm:$0x1]
    %49 = vrot.lane.b32.xlu0 %v48, 32
    %v50 = vpop.permute.xlu0 %49
    %vm51 = vcmask 294144
    %52 = vst.msk [vmem:[#allocation0] sm:$0x1] %vm51, %v50
    %s53 = scalar_lea.vmem %s0, 7
    %v54 = vld [vmem:[%s53] sm:$0x1]
    %55 = vrot.lane.b32.xlu0 %v54, 28
    %v56 = vpop.permute.xlu0 %55
    %vm57 = vcmask 261344
    %58 = vst.msk [vmem:[#allocation0] sm:$0x1] %vm57, %v56
    %s59 = scalar_lea.vmem %s0, 6
    %v60 = vld [vmem:[%s59] sm:$0x1]
    %61 = vrot.lane.b32.xlu0 %v60, 24
    %v62 = vpop.permute.xlu0 %61
    %vm63 = vcmask 228544
    %64 = vst.msk [vmem:[#allocation0] sm:$0x1] %vm63, %v62
    %s65 = scalar_lea.vmem %s0, 5
    %v66 = vld [vmem:[%s65] sm:$0x1]
    %67 = vrot.lane.b32.xlu0 %v66, 20
    %v68 = vpop.permute.xlu0 %67
    %vm69 = vcmask 195744
    %70 = vst.msk [vmem:[#allocation0] sm:$0x1] %vm69, %v68
    %s71 = scalar_lea.vmem %s0, 4
    %v72 = vld [vmem:[%s71] sm:$0x1]
    %73 = vrot.lane.b32.xlu0 %v72, 16
    %v74 = vpop.permute.xlu0 %73
    %vm75 = vcmask 162944
    %76 = vst.msk [vmem:[#allocation0] sm:$0x1] %vm75, %v74
    %s77 = scalar_lea.vmem %s0, 3
    %v78 = vld [vmem:[%s77] sm:$0x1]
    %79 = vrot.lane.b32.xlu0 %v78, 12
    %v80 = vpop.permute.xlu0 %79
    %vm81 = vcmask 130144
    %82 = vst.msk [vmem:[#allocation0] sm:$0x1] %vm81, %v80
    %s83 = scalar_lea.vmem %s0, 2
    %v84 = vld [vmem:[%s83] sm:$0x1]
    %85 = vrot.lane.b32.xlu0 %v84, 8
    %v86 = vpop.permute.xlu0 %85
    %vm87 = vcmask 97344
    %88 = vst.msk [vmem:[#allocation0] sm:$0x1] %vm87, %v86
    %s89 = scalar_lea.vmem %s0, 1
    %v90 = vld [vmem:[%s89] sm:$0x1]
    %91 = vrot.lane.b32.xlu0 %v90, 4
    %v92 = vpop.permute.xlu0 %91
    %vm93 = vcmask 64544
    %94 = vst.msk [vmem:[#allocation0] sm:$0x1] %vm93, %v92
    %s96 = sshll.u32 1, 1
    %s97 = ssub.s32 %s96, 1
    %v99 = vld [vmem:[#allocation0] sm:%s97]
    %s100 = sshll.u32 1, 1
    %s101 = ssub.s32 %s100, 1
    %102 = vst [vmem:[%s1] sm:%s101] %v99

// kernel: tile.88
$region0: #{tile.88}
  #allocation0 [shape = 's32[1]{0}', space=sflag, size = 0x4, scoped, tag = 'scoped memory for tile.88']
  %s0 = inlined_call_operand.vmem [shape: f32[8], index: 0, kind: input, shape index: {}]
  %s1 = inlined_call_operand.vmem [shape: f32[8,8], index: 1, kind: output, shape index: {}]
  // Predicated region
  $region2: #{tile.88} parent=0 // pred_check
    _
  $region3: #{tile.88} parent=0 // pred_check_branch
    %3 = sbr.rel (0) target = $region5
  $region4: #{tile.88} parent=0 // pred_region
    _
  $region5: #{tile.88} parent=0 // pred_fallthru
    _
  %v4 = vld [vmem:[%s0] ss:$0 sm:$0xff]
  %5 = vst [vmem:[%s1] sm:$0xff] %v4

// kernel: tile.89
$region0: #{tile.89}
  %s0 = inlined_call_operand.vmem [shape: f32[8,8], index: 0, kind: input, shape index: {}]
  %s1 = inlined_call_operand.vmem [shape: f32[1,64], index: 1, kind: output, shape index: {}]
  $region1: #{tile.89} parent=0
    #allocation0 [shape = 'u8[4096]{0}', space=vmem, size = 0x1000, scoped, tag = 'scoped mem for output reshape']
    %v2 = vld [vmem:[%s0] sm:$0x1]
    %vm3 = vcmask 64512
    %4 = vst.msk [vmem:[#allocation0] sm:$0x1] %vm3, %v2
    %s5 = scalar_lea.vmem %s0, 7
    %v6 = vld [vmem:[%s5] sm:$0x1]
    %7 = vrot.lane.b32.xlu0 %v6, 56
    %v8 = vpop.permute.xlu0 %7
    %vm9 = vcmask 523712
    %10 = vst.msk [vmem:[#allocation0] sm:$0x1] %vm9, %v8
    %s11 = scalar_lea.vmem %s0, 6
    %v12 = vld [vmem:[%s11] sm:$0x1]
    %13 = vrot.lane.b32.xlu0 %v12, 48
    %v14 = vpop.permute.xlu0 %13
    %vm15 = vcmask 458112
    %16 = vst.msk [vmem:[#allocation0] sm:$0x1] %vm15, %v14
    %s17 = scalar_lea.vmem %s0, 5
    %v18 = vld [vmem:[%s17] sm:$0x1]
    %19 = vrot.lane.b32.xlu0 %v18, 40
    %v20 = vpop.permute.xlu0 %19
    %vm21 = vcmask 392512
    %22 = vst.msk [vmem:[#allocation0] sm:$0x1] %vm21, %v20
    %s23 = scalar_lea.vmem %s0, 4
    %v24 = vld [vmem:[%s23] sm:$0x1]
    %25 = vrot.lane.b32.xlu0 %v24, 32
    %v26 = vpop.permute.xlu0 %25
    %vm27 = vcmask 326912
    %28 = vst.msk [vmem:[#allocation0] sm:$0x1] %vm27, %v26
    %s29 = scalar_lea.vmem %s0, 3
    %v30 = vld [vmem:[%s29] sm:$0x1]
    %31 = vrot.lane.b32.xlu0 %v30, 24
    %v32 = vpop.permute.xlu0 %31
    %vm33 = vcmask 261312
    %34 = vst.msk [vmem:[#allocation0] sm:$0x1] %vm33, %v32
    %s35 = scalar_lea.vmem %s0, 2
    %v36 = vld [vmem:[%s35] sm:$0x1]
    %37 = vrot.lane.b32.xlu0 %v36, 16
    %v38 = vpop.permute.xlu0 %37
    %vm39 = vcmask 195712
    %40 = vst.msk [vmem:[#allocation0] sm:$0x1] %vm39, %v38
    %s41 = scalar_lea.vmem %s0, 1
    %v42 = vld [vmem:[%s41] sm:$0x1]
    %43 = vrot.lane.b32.xlu0 %v42, 8
    %v44 = vpop.permute.xlu0 %43
    %vm45 = vcmask 130112
    %46 = vst.msk [vmem:[#allocation0] sm:$0x1] %vm45, %v44
    %s48 = sshll.u32 1, 1
    %s49 = ssub.s32 %s48, 1
    %v51 = vld [vmem:[#allocation0] sm:%s49]
    %s52 = sshll.u32 1, 1
    %s53 = ssub.s32 %s52, 1
    %54 = vst [vmem:[%s1] sm:%s53] %v51

// kernel: tile.73
$region0: #{tile.73}
  #allocation0 [shape = 's32[1]{0}', space=sflag, size = 0x4, scoped, tag = 'scoped memory for tile.73']
  %s0 = inlined_call_operand.vmem [shape: f32[16], index: 0, kind: input, shape index: {}]
  %s1 = inlined_call_operand.vmem [shape: f32[4,16], index: 1, kind: output, shape index: {}]
  // Predicated region
  $region2: #{tile.73} parent=0 // pred_check
    _
  $region3: #{tile.73} parent=0 // pred_check_branch
    %3 = sbr.rel (0) target = $region5
  $region4: #{tile.73} parent=0 // pred_region
    _
  $region5: #{tile.73} parent=0 // pred_fallthru
    _
  %v4 = vld [vmem:[%s0] ss:$0 sm:$0xff]
  %5 = vst [vmem:[%s1] sm:$0xf] %v4

// kernel: tile.74
$region0: #{tile.74}
  %s0 = inlined_call_operand.vmem [shape: f32[4,16], index: 0, kind: input, shape index: {}]
  %s1 = inlined_call_operand.vmem [shape: f32[1,64], index: 1, kind: output, shape index: {}]
  $region1: #{tile.74} parent=0
    #allocation0 [shape = 'u8[4096]{0}', space=vmem, size = 0x1000, scoped, tag = 'scoped mem for output reshape']
    #allocation1 [shape = 'u8[4096]{0}', space=vmem, size = 0x1000, scoped, tag = 'scoped mem for input reshape']
    %s3 = sshll.u32 1, 4
    %s4 = ssub.s32 %s3, 1
    %v5 = vld [vmem:[%s0] sm:%s4]
    %6 = vst [vmem:[#allocation1] sm:%s4] %v5
    %v7 = vld [vmem:[#allocation1] sm:$0x1]
    %vm8 = vcmask 130048
    %9 = vst.msk [vmem:[#allocation0] sm:$0x1] %vm8, %v7
    %s10 = scalar_lea.vmem [#allocation1], 3
    %v11 = vld [vmem:[%s10] sm:$0x1]
    %12 = vrot.lane.b32.xlu0 %v11, 48
    %v13 = vpop.permute.xlu0 %12
    %vm14 = vcmask 523648
    %15 = vst.msk [vmem:[#allocation0] sm:$0x1] %vm14, %v13
    %s16 = scalar_lea.vmem [#allocation1], 2
    %v17 = vld [vmem:[%s16] sm:$0x1]
    %18 = vrot.lane.b32.xlu0 %v17, 32
    %v19 = vpop.permute.xlu0 %18
    %vm20 = vcmask 392448
    %21 = vst.msk [vmem:[#allocation0] sm:$0x1] %vm20, %v19
    %s22 = scalar_lea.vmem [#allocation1], 1
    %v23 = vld [vmem:[%s22] sm:$0x1]
    %24 = vrot.lane.b32.xlu0 %v23, 16
    %v25 = vpop.permute.xlu0 %24
    %vm26 = vcmask 261248
    %27 = vst.msk [vmem:[#allocation0] sm:$0x1] %vm26, %v25
    %s29 = sshll.u32 1, 1
    %s30 = ssub.s32 %s29, 1
    %v32 = vld [vmem:[#allocation0] sm:%s30]
    %s33 = sshll.u32 1, 1
    %s34 = ssub.s32 %s33, 1
    %35 = vst [vmem:[%s1] sm:%s34] %v32

// kernel: tile.63
$region0: #{tile.63}
  #allocation0 [shape = 's32[1]{0}', space=sflag, size = 0x4, scoped, tag = 'scoped memory for tile.63']
  %s0 = inlined_call_operand.vmem [shape: f32[8], index: 0, kind: input, shape index: {}]
  %s1 = inlined_call_operand.vmem [shape: f32[2,8], index: 1, kind: output, shape index: {}]
  // Predicated region
  $region2: #{tile.63} parent=0 // pred_check
    _
  $region3: #{tile.63} parent=0 // pred_check_branch
    %3 = sbr.rel (0) target = $region5
  $region4: #{tile.63} parent=0 // pred_region
    _
  $region5: #{tile.63} parent=0 // pred_fallthru
    _
  %v4 = vld [vmem:[%s0] ss:$0 sm:$0xff]
  %5 = vst [vmem:[%s1] sm:$0x3] %v4

// kernel: tile.64
$region0: #{tile.64}
  %s0 = inlined_call_operand.vmem [shape: f32[2,8], index: 0, kind: input, shape index: {}]
  %s1 = inlined_call_operand.vmem [shape: f32[1,16], index: 1, kind: output, shape index: {}]
  $region1: #{tile.64} parent=0
    #allocation0 [shape = 'u8[4096]{0}', space=vmem, size = 0x1000, scoped, tag = 'scoped mem for output reshape']
    #allocation1 [shape = 'u8[4096]{0}', space=vmem, size = 0x1000, scoped, tag = 'scoped mem for input reshape']
    %s3 = sshll.u32 1, 2
    %s4 = ssub.s32 %s3, 1
    %v5 = vld [vmem:[%s0] sm:%s4]
    %6 = vst [vmem:[#allocation1] sm:%s4] %v5
    %v7 = vld [vmem:[#allocation1] sm:$0x1]
    %vm8 = vcmask 64512
    %9 = vst.msk [vmem:[#allocation0] sm:$0x1] %vm8, %v7
    %s10 = scalar_lea.vmem [#allocation1], 1
    %v11 = vld [vmem:[%s10] sm:$0x1]
    %12 = vrot.lane.b32.xlu0 %v11, 8
    %v13 = vpop.permute.xlu0 %12
    %vm14 = vcmask 130112
    %15 = vst.msk [vmem:[#allocation0] sm:$0x1] %vm14, %v13
    %s17 = sshll.u32 1, 1
    %s18 = ssub.s32 %s17, 1
    %v20 = vld [vmem:[#allocation0] sm:%s18]
    %s21 = sshll.u32 1, 1
    %s22 = ssub.s32 %s21, 1
    %23 = vst [vmem:[%s1] sm:%s22] %v20

// kernel: generator_forward.1
$region0: #{generator_forward.1}
  #allocation0 [shape = 'u32[]', space=smem, size = 0x4, offset = 0x4, fixed_abs, tag = 'smem constant byte address 0x4 - core index']
  #allocation1 [shape = 'u32[144,128]{1,0:T(1,128)}', space=vmem, size = 0x12000, scoped, tag = 'internal scratch']
  #allocation2 [shape = 'f32[4,16]{1,0:T(4,128)}', space=vmem, size = 0x800, scoped, tag = 'scratch operand']
  %s0 = inlined_call_operand.vmem [shape: f32[2,16], index: 0, kind: input, shape index: {}]
  %s1 = inlined_call_operand.vmem [shape: f32[16,32], index: 1, kind: input, shape index: {}]
  %s2 = inlined_call_operand.vmem [shape: f32[1,32], index: 2, kind: input, shape index: {}]
  %s3 = inlined_call_operand.vmem [shape: f32[1,16], index: 3, kind: input, shape index: {}]
  %s4 = inlined_call_operand.vmem [shape: f32[1,16], index: 4, kind: input, shape index: {}]
  %s5 = inlined_call_operand.vmem [shape: f32[16,16], index: 5, kind: input, shape index: {}]
  %s6 = inlined_call_operand.vmem [shape: f32[3,16,64], index: 6, kind: input, shape index: {}]
  %s7 = inlined_call_operand.vmem [shape: f32[3,8,4], index: 7, kind: input, shape index: {}]
  %s8 = inlined_call_operand.vmem [shape: f32[1,64], index: 8, kind: input, shape index: {}]
  %s9 = inlined_call_operand.vmem [shape: f32[1,64], index: 9, kind: input, shape index: {}]
  %s10 = inlined_call_operand.vmem [shape: f32[1,64], index: 10, kind: input, shape index: {}]
  %s11 = inlined_call_operand.vmem [shape: f32[64,64], index: 11, kind: input, shape index: {}]
  %s12 = inlined_call_operand.vmem [shape: f32[3,64,64], index: 12, kind: input, shape index: {}]
  %s13 = inlined_call_operand.vmem [shape: f32[3,16,8], index: 13, kind: input, shape index: {}]
  %s14 = inlined_call_operand.vmem [shape: f32[1,64], index: 14, kind: input, shape index: {}]
  %s15 = inlined_call_operand.vmem [shape: f32[1,64], index: 15, kind: input, shape index: {}]
  %s16 = inlined_call_operand.vmem [shape: f32[1,64], index: 16, kind: input, shape index: {}]
  %s17 = inlined_call_operand.vmem [shape: f32[64,64], index: 17, kind: input, shape index: {}]
  %s18 = inlined_call_operand.vmem [shape: f32[3,64,64], index: 18, kind: input, shape index: {}]
  %s19 = inlined_call_operand.vmem [shape: f32[3,32,16], index: 19, kind: input, shape index: {}]
  %s20 = inlined_call_operand.vmem [shape: f32[1,64], index: 20, kind: input, shape index: {}]
  %s21 = inlined_call_operand.vmem [shape: f32[1,64], index: 21, kind: input, shape index: {}]
  %s22 = inlined_call_operand.vmem [shape: f32[1,64], index: 22, kind: input, shape index: {}]
  %s23 = inlined_call_operand.vmem [shape: f32[64,64], index: 23, kind: input, shape index: {}]
  %s24 = inlined_call_operand.vmem [shape: f32[3,64,96], index: 24, kind: input, shape index: {}]
  %s25 = inlined_call_operand.vmem [shape: f32[3,64,32], index: 25, kind: input, shape index: {}]
  %s26 = inlined_call_operand.vmem [shape: f32[1,96], index: 26, kind: input, shape index: {}]
  %s27 = inlined_call_operand.vmem [shape: f32[64,96], index: 27, kind: output, shape index: {}]
  %s28 = sld [smem:[#allocation0]]
  $region118: #{generator_forward.1} parent=0
    _
  %s30 = ssub.s32 1, %s28
  %s31 = scalar_select 0, %s30, %s28
  // Predicated region
  $region2: #{generator_forward.1} parent=0 // pred_check
    _
  $region3: #{generator_forward.1} parent=0 // pred_check_branch
    %33 = sbr.rel (0) target = $region5
  $region4: #{generator_forward.1} parent=0 // pred_region
    _
  $region5: #{generator_forward.1} parent=0 // pred_fallthru
    _
  // Predicated region
  $region6: #{generator_forward.1} parent=0 // pred_check
    _
  $region7: #{generator_forward.1} parent=0 // pred_check_branch
    %35 = sbr.rel (0) target = $region9
  $region8: #{generator_forward.1} parent=0 // pred_region
    _
  $region9: #{generator_forward.1} parent=0 // pred_fallthru
    _
  // Predicated region
  $region10: #{generator_forward.1} parent=0 // pred_check
    _
  $region11: #{generator_forward.1} parent=0 // pred_check_branch
    %37 = sbr.rel (0) target = $region13
  $region12: #{generator_forward.1} parent=0 // pred_region
    _
  $region13: #{generator_forward.1} parent=0 // pred_fallthru
    _
  // Predicated region
  $region14: #{generator_forward.1} parent=0 // pred_check
    _
  $region15: #{generator_forward.1} parent=0 // pred_check_branch
    %39 = sbr.rel (0) target = $region17
  $region16: #{generator_forward.1} parent=0 // pred_region
    _
  $region17: #{generator_forward.1} parent=0 // pred_fallthru
    _
  // Predicated region
  $region18: #{generator_forward.1} parent=0 // pred_check
    _
  $region19: #{generator_forward.1} parent=0 // pred_check_branch
    %41 = sbr.rel (0) target = $region21
  $region20: #{generator_forward.1} parent=0 // pred_region
    _
  $region21: #{generator_forward.1} parent=0 // pred_fallthru
    _
  // Predicated region
  $region22: #{generator_forward.1} parent=0 // pred_check
    _
  $region23: #{generator_forward.1} parent=0 // pred_check_branch
    %43 = sbr.rel (0) target = $region25
  $region24: #{generator_forward.1} parent=0 // pred_region
    _
  $region25: #{generator_forward.1} parent=0 // pred_fallthru
    _
  // Predicated region
  $region26: #{generator_forward.1} parent=0 // pred_check
    _
  $region27: #{generator_forward.1} parent=0 // pred_check_branch
    %45 = sbr.rel (0) target = $region29
  $region28: #{generator_forward.1} parent=0 // pred_region
    _
  $region29: #{generator_forward.1} parent=0 // pred_fallthru
    _
  // Predicated region
  $region30: #{generator_forward.1} parent=0 // pred_check
    _
  $region31: #{generator_forward.1} parent=0 // pred_check_branch
    %47 = sbr.rel (0) target = $region33
  $region32: #{generator_forward.1} parent=0 // pred_region
    _
  $region33: #{generator_forward.1} parent=0 // pred_fallthru
    _
  // Predicated region
  $region34: #{generator_forward.1} parent=0 // pred_check
    _
  $region35: #{generator_forward.1} parent=0 // pred_check_branch
    %49 = sbr.rel (0) target = $region37
  $region36: #{generator_forward.1} parent=0 // pred_region
    _
  $region37: #{generator_forward.1} parent=0 // pred_fallthru
    _
  // Predicated region
  $region38: #{generator_forward.1} parent=0 // pred_check
    _
  $region39: #{generator_forward.1} parent=0 // pred_check_branch
    %51 = sbr.rel (0) target = $region41
  $region40: #{generator_forward.1} parent=0 // pred_region
    _
  $region41: #{generator_forward.1} parent=0 // pred_fallthru
    _
  // Predicated region
  $region42: #{generator_forward.1} parent=0 // pred_check
    _
  $region43: #{generator_forward.1} parent=0 // pred_check_branch
    %53 = sbr.rel (0) target = $region45
  $region44: #{generator_forward.1} parent=0 // pred_region
    _
  $region45: #{generator_forward.1} parent=0 // pred_fallthru
    _
  // Predicated region
  $region46: #{generator_forward.1} parent=0 // pred_check
    _
  $region47: #{generator_forward.1} parent=0 // pred_check_branch
    %55 = sbr.rel (0) target = $region49
  $region48: #{generator_forward.1} parent=0 // pred_region
    _
  $region49: #{generator_forward.1} parent=0 // pred_fallthru
    _
  // Predicated region
  $region50: #{generator_forward.1} parent=0 // pred_check
    _
  $region51: #{generator_forward.1} parent=0 // pred_check_branch
    %57 = sbr.rel (0) target = $region53
  $region52: #{generator_forward.1} parent=0 // pred_region
    _
  $region53: #{generator_forward.1} parent=0 // pred_fallthru
    _
  // Predicated region
  $region54: #{generator_forward.1} parent=0 // pred_check
    _
  $region55: #{generator_forward.1} parent=0 // pred_check_branch
    %59 = sbr.rel (0) target = $region57
  $region56: #{generator_forward.1} parent=0 // pred_region
    _
  $region57: #{generator_forward.1} parent=0 // pred_fallthru
    _
  // Predicated region
  $region58: #{generator_forward.1} parent=0 // pred_check
    _
  $region59: #{generator_forward.1} parent=0 // pred_check_branch
    %61 = sbr.rel (0) target = $region61
  $region60: #{generator_forward.1} parent=0 // pred_region
    _
  $region61: #{generator_forward.1} parent=0 // pred_fallthru
    _
  // Predicated region
  $region62: #{generator_forward.1} parent=0 // pred_check
    _
  $region63: #{generator_forward.1} parent=0 // pred_check_branch
    %63 = sbr.rel (0) target = $region65
  $region64: #{generator_forward.1} parent=0 // pred_region
    _
  $region65: #{generator_forward.1} parent=0 // pred_fallthru
    _
  // Predicated region
  $region66: #{generator_forward.1} parent=0 // pred_check
    _
  $region67: #{generator_forward.1} parent=0 // pred_check_branch
    %65 = sbr.rel (0) target = $region69
  $region68: #{generator_forward.1} parent=0 // pred_region
    _
  $region69: #{generator_forward.1} parent=0 // pred_fallthru
    _
  // Predicated region
  $region70: #{generator_forward.1} parent=0 // pred_check
    _
  $region71: #{generator_forward.1} parent=0 // pred_check_branch
    %67 = sbr.rel (0) target = $region73
  $region72: #{generator_forward.1} parent=0 // pred_region
    _
  $region73: #{generator_forward.1} parent=0 // pred_fallthru
    _
  // Predicated region
  $region74: #{generator_forward.1} parent=0 // pred_check
    _
  $region75: #{generator_forward.1} parent=0 // pred_check_branch
    %69 = sbr.rel (0) target = $region77
  $region76: #{generator_forward.1} parent=0 // pred_region
    _
  $region77: #{generator_forward.1} parent=0 // pred_fallthru
    _
  // Predicated region
  $region78: #{generator_forward.1} parent=0 // pred_check
    _
  $region79: #{generator_forward.1} parent=0 // pred_check_branch
    %71 = sbr.rel (0) target = $region81
  $region80: #{generator_forward.1} parent=0 // pred_region
    _
  $region81: #{generator_forward.1} parent=0 // pred_fallthru
    _
  // Predicated region
  $region82: #{generator_forward.1} parent=0 // pred_check
    _
  $region83: #{generator_forward.1} parent=0 // pred_check_branch
    %73 = sbr.rel (0) target = $region85
  $region84: #{generator_forward.1} parent=0 // pred_region
    _
  $region85: #{generator_forward.1} parent=0 // pred_fallthru
    _
  // Predicated region
  $region86: #{generator_forward.1} parent=0 // pred_check
    _
  $region87: #{generator_forward.1} parent=0 // pred_check_branch
    %75 = sbr.rel (0) target = $region89
  $region88: #{generator_forward.1} parent=0 // pred_region
    _
  $region89: #{generator_forward.1} parent=0 // pred_fallthru
    _
  // Predicated region
  $region90: #{generator_forward.1} parent=0 // pred_check
    _
  $region91: #{generator_forward.1} parent=0 // pred_check_branch
    %77 = sbr.rel (0) target = $region93
  $region92: #{generator_forward.1} parent=0 // pred_region
    _
  $region93: #{generator_forward.1} parent=0 // pred_fallthru
    _
  // Predicated region
  $region94: #{generator_forward.1} parent=0 // pred_check
    _
  $region95: #{generator_forward.1} parent=0 // pred_check_branch
    %79 = sbr.rel (0) target = $region97
  $region96: #{generator_forward.1} parent=0 // pred_region
    _
  $region97: #{generator_forward.1} parent=0 // pred_fallthru
    _
  // Predicated region
  $region98: #{generator_forward.1} parent=0 // pred_check
    _
  $region99: #{generator_forward.1} parent=0 // pred_check_branch
    %81 = sbr.rel (0) target = $region101
  $region100: #{generator_forward.1} parent=0 // pred_region
    _
  $region101: #{generator_forward.1} parent=0 // pred_fallthru
    _
  // Predicated region
  $region102: #{generator_forward.1} parent=0 // pred_check
    _
  $region103: #{generator_forward.1} parent=0 // pred_check_branch
    %83 = sbr.rel (0) target = $region105
  $region104: #{generator_forward.1} parent=0 // pred_region
    _
  $region105: #{generator_forward.1} parent=0 // pred_fallthru
    _
  // Predicated region
  $region106: #{generator_forward.1} parent=0 // pred_check
    _
  $region107: #{generator_forward.1} parent=0 // pred_check_branch
    %85 = sbr.rel (0) target = $region109
  $region108: #{generator_forward.1} parent=0 // pred_region
    _
  $region109: #{generator_forward.1} parent=0 // pred_fallthru
    _
  %v86 = vld [vmem:[%s0] sm:$0x3]
  %v87 = vld [vmem:[%s1] sm:$0xff]
  %v88 = vld [vmem:[%s1 + $0x8] sm:$0xff]
  %v89 = vld [vmem:[%s2] sm:$0x1]
  %v91 = vlaneseq
  %v92 = vshrl.u32 %v91, 7
  %v93 = vsub.s32 0, %v92
  %v94 = vrot.slane %v89, %v93
  %vm96 = vcmask 130048
  %v98 = vsel %vm96, %v86, 0
  %100 = vmatprep.subr.mxu0 0.0
  %101 = vmatpush1.msra.mxu0 0.0
  %102 = vmatprep.subr.mxu0 0.0
  %103 = vmatpush1.msra.mxu0 0.0
  %104 = vmatprep.subr.mxu0 0.0
  %105 = vmatpush1.msra.mxu0 0.0
  %106 = vmatprep.subr.mxu0 0.0
  %107 = vmatpush1.msra.mxu0 0.0
  %108 = vmatprep.subr.mxu0 0.0
  %109 = vmatpush1.msra.mxu0 0.0
  %110 = vmatprep.subr.mxu0 0.0
  %111 = vmatpush1.msra.mxu0 0.0
  %112 = vmatprep.subr.mxu0 0.0
  %113 = vmatpush1.msra.mxu0 0.0
  %114 = vmatprep.subr.mxu0 0.0
  %115 = vmatpush1.msra.mxu0 0.0
  %116 = vmatprep.subr.mxu0 0.0
  %117 = vmatpush1.msra.mxu0 0.0
  %118 = vmatprep.subr.mxu0 0.0
  %119 = vmatpush1.msra.mxu0 0.0
  %120 = vmatprep.subr.mxu0 0.0
  %121 = vmatpush1.msra.mxu0 0.0
  %122 = vmatprep.subr.mxu0 0.0
  %123 = vmatpush1.msra.mxu0 0.0
  %124 = vmatprep.subr.mxu0 0.0
  %125 = vmatpush1.msra.mxu0 0.0
  %126 = vmatprep.subr.mxu0 0.0
  %127 = vmatpush1.msra.mxu0 0.0
  %128 = vmatprep.subr.mxu0 0.0
  %129 = vmatpush1.msra.mxu0 %v88
  %130 = vmatprep.subr.mxu0 0.0
  %131 = vmatpush1.msra.mxu0 %v87
  %132 = vmatprep.subr.mxu0 0.0
  %133 = vmatpush2.msra.mxu0 0.0
  %134 = vmatprep.subr.mxu0 0.0
  %135 = vmatpush2.msra.mxu0 0.0
  %136 = vmatprep.subr.mxu0 0.0
  %137 = vmatpush2.msra.mxu0 0.0
  %138 = vmatprep.subr.mxu0 0.0
  %139 = vmatpush2.msra.mxu0 0.0
  %140 = vmatprep.subr.mxu0 0.0
  %141 = vmatpush2.msra.mxu0 0.0
  %142 = vmatprep.subr.mxu0 0.0
  %143 = vmatpush2.msra.mxu0 0.0
  %144 = vmatprep.subr.mxu0 0.0
  %145 = vmatpush2.msra.mxu0 0.0
  %146 = vmatprep.subr.mxu0 0.0
  %147 = vmatpush2.msra.mxu0 0.0
  %148 = vmatprep.subr.mxu0 0.0
  %149 = vmatpush2.msra.mxu0 0.0
  %150 = vmatprep.subr.mxu0 0.0
  %151 = vmatpush2.msra.mxu0 0.0
  %152 = vmatprep.subr.mxu0 0.0
  %153 = vmatpush2.msra.mxu0 0.0
  %154 = vmatprep.subr.mxu0 0.0
  %155 = vmatpush2.msra.mxu0 0.0
  %156 = vmatprep.subr.mxu0 0.0
  %157 = vmatpush2.msra.mxu0 0.0
  %158 = vmatprep.subr.mxu0 0.0
  %159 = vmatpush2.msra.mxu0 0.0
  %160 = vmatprep.subr.mxu0 0.0
  %161 = vmatpush2.msra.mxu0 0.0
  %162 = vmatprep.subr.mxu0 0.0
  %163 = vmatpush2.msra.mxu0 0.0
  %164 = vmatprep.mubr.f32.mxu0 0.0
  %165 = vmatmul.mubr.f32.gmra.mxu0 %v98
  %v166 = vpop.f32.mrf.mxu0
  %v167 = vadd.f32 %v94, %v166
  %v168 = vpop.f32.mrf.mxu0
  %169 = vdwg.mxu0
  %vm170 = vcmask 122880
  %171 = vst.msk [vmem:[#allocation2] sm:$0x1] %vm170, %v167
  %173 = vrot.lane.b32.xlu0 %v167, 112
  %v174 = vpop.permute.xlu0 %173
  %176 = vst.msk [vmem:[#allocation2 + $0x1] sm:$0x1] %vm170, %v174
  %vm177 = vcmask 123905
  %178 = vst.msk [vmem:[#allocation2 + $0x1] sm:$0x2] %vm177, %v167
  %179 = vst.msk [vmem:[#allocation2 + $0x2] sm:$0x2] %vm177, %v174
  %v180 = vld [vmem:[#allocation2] sm:$0xf]
  %vm181 = vcmask 125952
  %v182 = vsel %vm181, %v180, 0.0
  %v183 = vrot.slane %v182, 4
  %v184 = vadd.f32 %v182, %v183
  %v185 = vrot.slane %v184, 2
  %v186 = vadd.f32 %v184, %v185
  %v187 = vrot.slane %v186, 1
  %v188 = vadd.f32 %v186, %v187
  %v189 = vld [vmem:[%s5] sm:$0xff]
  %v190 = vld [vmem:[%s5 + $0x8] sm:$0xff]
  %v192 = vsel %vm96, %v188, 0
  %194 = vmatprep.subr.mxu0 0.0
  %195 = vmatpush1.msra.mxu0 0.0
  %196 = vmatprep.subr.mxu0 0.0
  %197 = vmatpush1.msra.mxu0 0.0
  %198 = vmatprep.subr.mxu0 0.0
  %199 = vmatpush1.msra.mxu0 0.0
  %200 = vmatprep.subr.mxu0 0.0
  %201 = vmatpush1.msra.mxu0 0.0
  %202 = vmatprep.subr.mxu0 0.0
  %203 = vmatpush1.msra.mxu0 0.0
  %204 = vmatprep.subr.mxu0 0.0
  %205 = vmatpush1.msra.mxu0 0.0
  %206 = vmatprep.subr.mxu0 0.0
  %207 = vmatpush1.msra.mxu0 0.0
  %208 = vmatprep.subr.mxu0 0.0
  %209 = vmatpush1.msra.mxu0 0.0
  %210 = vmatprep.subr.mxu0 0.0
  %211 = vmatpush1.msra.mxu0 0.0
  %212 = vmatprep.subr.mxu0 0.0
  %213 = vmatpush1.msra.mxu0 0.0
  %214 = vmatprep.subr.mxu0 0.0
  %215 = vmatpush1.msra.mxu0 0.0
  %216 = vmatprep.subr.mxu0 0.0
  %217 = vmatpush1.msra.mxu0 0.0
  %218 = vmatprep.subr.mxu0 0.0
  %219 = vmatpush1.msra.mxu0 0.0
  %220 = vmatprep.subr.mxu0 0.0
  %221 = vmatpush1.msra.mxu0 0.0
  %222 = vmatprep.subr.mxu0 0.0
  %223 = vmatpush1.msra.mxu0 %v190
  %224 = vmatprep.subr.mxu0 0.0
  %225 = vmatpush1.msra.mxu0 %v189
  %226 = vmatprep.subr.mxu0 0.0
  %227 = vmatpush2.msra.mxu0 0.0
  %228 = vmatprep.subr.mxu0 0.0
  %229 = vmatpush2.msra.mxu0 0.0
  %230 = vmatprep.subr.mxu0 0.0
  %231 = vmatpush2.msra.mxu0 0.0
  %232 = vmatprep.subr.mxu0 0.0
  %233 = vmatpush2.msra.mxu0 0.0
  %234 = vmatprep.subr.mxu0 0.0
  %235 = vmatpush2.msra.mxu0 0.0
  %236 = vmatprep.subr.mxu0 0.0
  %237 = vmatpush2.msra.mxu0 0.0
  %238 = vmatprep.subr.mxu0 0.0
  %239 = vmatpush2.msra.mxu0 0.0
  %240 = vmatprep.subr.mxu0 0.0
  %241 = vmatpush2.msra.mxu0 0.0
  %242 = vmatprep.subr.mxu0 0.0
  %243 = vmatpush2.msra.mxu0 0.0
  %244 = vmatprep.subr.mxu0 0.0
  %245 = vmatpush2.msra.mxu0 0.0
  %246 = vmatprep.subr.mxu0 0.0
  %247 = vmatpush2.msra.mxu0 0.0
  %248 = vmatprep.subr.mxu0 0.0
  %249 = vmatpush2.msra.mxu0 0.0
  %250 = vmatprep.subr.mxu0 0.0
  %251 = vmatpush2.msra.mxu0 0.0
  %252 = vmatprep.subr.mxu0 0.0
  %253 = vmatpush2.msra.mxu0 0.0
  %254 = vmatprep.subr.mxu0 0.0
  %255 = vmatpush2.msra.mxu0 0.0
  %256 = vmatprep.subr.mxu0 0.0
  %257 = vmatpush2.msra.mxu0 0.0
  %258 = vmatprep.mubr.f32.mxu0 0.0
  %259 = vmatmul.mubr.f32.gmra.mxu0 %v192
  %v260 = vpop.f32.mrf.mxu0
  %v261 = vadd.f32 0.0, %v260
  %v262 = vpop.f32.mrf.mxu0
  %263 = vdwg.mxu0
  %v264 = vlaneseq
  %v265 = vshrl.u32 %v264, 7
  %v266 = vsub.s32 0, %v265
  %v267 = vrot.slane %v261, %v266
  %v268 = vsub.f32 %v180, %v267
  %v269 = vmul.f32 %v268, %v268
  %v270 = vsel %vm181, %v269, 0.0
  %v271 = vrot.slane %v270, 4
  %v272 = vadd.f32 %v270, %v271
  %v273 = vrot.slane %v272, 2
  %v274 = vadd.f32 %v272, %v273
  %v275 = vrot.slane %v274, 1
  %v276 = vadd.f32 %v274, %v275
  %v277 = vld [vmem:[%s3] sm:$0x1]
  %v279 = vsel %vm96, %v276, 0
  %281 = vmatprep.subr.mxu0 0.0
  %282 = vmatpush1.msra.mxu0 0.0
  %283 = vmatprep.subr.mxu0 0.0
  %284 = vmatpush1.msra.mxu0 0.0
  %285 = vmatprep.subr.mxu0 0.0
  %286 = vmatpush1.msra.mxu0 0.0
  %287 = vmatprep.subr.mxu0 0.0
  %288 = vmatpush1.msra.mxu0 0.0
  %289 = vmatprep.subr.mxu0 0.0
  %290 = vmatpush1.msra.mxu0 0.0
  %291 = vmatprep.subr.mxu0 0.0
  %292 = vmatpush1.msra.mxu0 0.0
  %293 = vmatprep.subr.mxu0 0.0
  %294 = vmatpush1.msra.mxu0 0.0
  %295 = vmatprep.subr.mxu0 0.0
  %296 = vmatpush1.msra.mxu0 0.0
  %297 = vmatprep.subr.mxu0 0.0
  %298 = vmatpush1.msra.mxu0 0.0
  %299 = vmatprep.subr.mxu0 0.0
  %300 = vmatpush1.msra.mxu0 0.0
  %301 = vmatprep.subr.mxu0 0.0
  %302 = vmatpush1.msra.mxu0 0.0
  %303 = vmatprep.subr.mxu0 0.0
  %304 = vmatpush1.msra.mxu0 0.0
  %305 = vmatprep.subr.mxu0 0.0
  %306 = vmatpush1.msra.mxu0 0.0
  %307 = vmatprep.subr.mxu0 0.0
  %308 = vmatpush1.msra.mxu0 0.0
  %309 = vmatprep.subr.mxu0 0.0
  %310 = vmatpush1.msra.mxu0 %v190
  %311 = vmatprep.subr.mxu0 0.0
  %312 = vmatpush1.msra.mxu0 %v189
  %313 = vmatprep.subr.mxu0 0.0
  %314 = vmatpush2.msra.mxu0 0.0
  %315 = vmatprep.subr.mxu0 0.0
  %316 = vmatpush2.msra.mxu0 0.0
  %317 = vmatprep.subr.mxu0 0.0
  %318 = vmatpush2.msra.mxu0 0.0
  %319 = vmatprep.subr.mxu0 0.0
  %320 = vmatpush2.msra.mxu0 0.0
  %321 = vmatprep.subr.mxu0 0.0
  %322 = vmatpush2.msra.mxu0 0.0
  %323 = vmatprep.subr.mxu0 0.0
  %324 = vmatpush2.msra.mxu0 0.0
  %325 = vmatprep.subr.mxu0 0.0
  %326 = vmatpush2.msra.mxu0 0.0
  %327 = vmatprep.subr.mxu0 0.0
  %328 = vmatpush2.msra.mxu0 0.0
  %329 = vmatprep.subr.mxu0 0.0
  %330 = vmatpush2.msra.mxu0 0.0
  %331 = vmatprep.subr.mxu0 0.0
  %332 = vmatpush2.msra.mxu0 0.0
  %333 = vmatprep.subr.mxu0 0.0
  %334 = vmatpush2.msra.mxu0 0.0
  %335 = vmatprep.subr.mxu0 0.0
  %336 = vmatpush2.msra.mxu0 0.0
  %337 = vmatprep.subr.mxu0 0.0
  %338 = vmatpush2.msra.mxu0 0.0
  %339 = vmatprep.subr.mxu0 0.0
  %340 = vmatpush2.msra.mxu0 0.0
  %341 = vmatprep.subr.mxu0 0.0
  %342 = vmatpush2.msra.mxu0 0.0
  %343 = vmatprep.subr.mxu0 0.0
  %344 = vmatpush2.msra.mxu0 0.0
  %345 = vmatprep.mubr.f32.mxu0 0.0
  %346 = vmatmul.mubr.f32.gmra.mxu0 %v279
  %v347 = vpop.f32.mrf.mxu0
  %v348 = vadd.f32 1e-05, %v347
  %v349 = vpop.f32.mrf.mxu0
  %350 = vdwg.mxu0
  %v351 = vrsqrt.pop %v348
  %v352 = vmul.f32 %v277, %v351
  %v354 = vlaneseq
  %v355 = vshrl.u32 %v354, 7
  %v356 = vsub.s32 0, %v355
  %v357 = vrot.slane %v352, %v356
  %v359 = vmul.f32 %v268, %v357
  %v360 = vld [vmem:[%s4] sm:$0x1]
  %v362 = vlaneseq
  %v363 = vshrl.u32 %v362, 7
  %v364 = vsub.s32 0, %v363
  %v365 = vrot.slane %v360, %v364
  %v367 = vadd.f32 %v359, %v365
  %vm368 = vcmp.gt.f32.partialorder %v367, 0.0
  %v369 = vmul.f32 %v367, 0.01
  %v370 = vsel %vm368, %v367, %v369
  %v371 = vld [vmem:[%s6] sm:$0xff]
  %v372 = vld [vmem:[%s6 + $0x8] sm:$0xff]
  %v374 = vsel %vm96, %v370, 0
  %376 = vmatprep.subr.mxu0 0.0
  %377 = vmatpush1.msra.mxu0 0.0
  %378 = vmatprep.subr.mxu0 0.0
  %379 = vmatpush1.msra.mxu0 0.0
  %380 = vmatprep.subr.mxu0 0.0
  %381 = vmatpush1.msra.mxu0 0.0
  %382 = vmatprep.subr.mxu0 0.0
  %383 = vmatpush1.msra.mxu0 0.0
  %384 = vmatprep.subr.mxu0 0.0
  %385 = vmatpush1.msra.mxu0 0.0
  %386 = vmatprep.subr.mxu0 0.0
  %387 = vmatpush1.msra.mxu0 0.0
  %388 = vmatprep.subr.mxu0 0.0
  %389 = vmatpush1.msra.mxu0 0.0
  %390 = vmatprep.subr.mxu0 0.0
  %391 = vmatpush1.msra.mxu0 0.0
  %392 = vmatprep.subr.mxu0 0.0
  %393 = vmatpush1.msra.mxu0 0.0
  %394 = vmatprep.subr.mxu0 0.0
  %395 = vmatpush1.msra.mxu0 0.0
  %396 = vmatprep.subr.mxu0 0.0
  %397 = vmatpush1.msra.mxu0 0.0
  %398 = vmatprep.subr.mxu0 0.0
  %399 = vmatpush1.msra.mxu0 0.0
  %400 = vmatprep.subr.mxu0 0.0
  %401 = vmatpush1.msra.mxu0 0.0
  %402 = vmatprep.subr.mxu0 0.0
  %403 = vmatpush1.msra.mxu0 0.0
  %404 = vmatprep.subr.mxu0 0.0
  %405 = vmatpush1.msra.mxu0 %v372
  %406 = vmatprep.subr.mxu0 0.0
  %407 = vmatpush1.msra.mxu0 %v371
  %408 = vmatprep.subr.mxu0 0.0
  %409 = vmatpush2.msra.mxu0 0.0
  %410 = vmatprep.subr.mxu0 0.0
  %411 = vmatpush2.msra.mxu0 0.0
  %412 = vmatprep.subr.mxu0 0.0
  %413 = vmatpush2.msra.mxu0 0.0
  %414 = vmatprep.subr.mxu0 0.0
  %415 = vmatpush2.msra.mxu0 0.0
  %416 = vmatprep.subr.mxu0 0.0
  %417 = vmatpush2.msra.mxu0 0.0
  %418 = vmatprep.subr.mxu0 0.0
  %419 = vmatpush2.msra.mxu0 0.0
  %420 = vmatprep.subr.mxu0 0.0
  %421 = vmatpush2.msra.mxu0 0.0
  %422 = vmatprep.subr.mxu0 0.0
  %423 = vmatpush2.msra.mxu0 0.0
  %424 = vmatprep.subr.mxu0 0.0
  %425 = vmatpush2.msra.mxu0 0.0
  %426 = vmatprep.subr.mxu0 0.0
  %427 = vmatpush2.msra.mxu0 0.0
  %428 = vmatprep.subr.mxu0 0.0
  %429 = vmatpush2.msra.mxu0 0.0
  %430 = vmatprep.subr.mxu0 0.0
  %431 = vmatpush2.msra.mxu0 0.0
  %432 = vmatprep.subr.mxu0 0.0
  %433 = vmatpush2.msra.mxu0 0.0
  %434 = vmatprep.subr.mxu0 0.0
  %435 = vmatpush2.msra.mxu0 0.0
  %436 = vmatprep.subr.mxu0 0.0
  %437 = vmatpush2.msra.mxu0 0.0
  %438 = vmatprep.subr.mxu0 0.0
  %439 = vmatpush2.msra.mxu0 0.0
  %440 = vmatprep.mubr.f32.mxu0 0.0
  %441 = vmatmul.mubr.f32.gmra.mxu0 %v374
  %v442 = vpop.f32.mrf.mxu0
  %v443 = vadd.f32 0.0, %v442
  %v444 = vpop.f32.mrf.mxu0
  %445 = vdwg.mxu0
  %v446 = vld [vmem:[%s7] sm:$0xff]
  %s447 = scalar_lea.vmem %s6, 16
  %v448 = vld [vmem:[%s447] sm:$0xff]
  %v449 = vld [vmem:[%s447 + $0x8] sm:$0xff]
  %450 = vmatprep.subr.mxu0 0.0
  %451 = vmatpush1.msra.mxu0 0.0
  %452 = vmatprep.subr.mxu0 0.0
  %453 = vmatpush1.msra.mxu0 0.0
  %454 = vmatprep.subr.mxu0 0.0
  %455 = vmatpush1.msra.mxu0 0.0
  %456 = vmatprep.subr.mxu0 0.0
  %457 = vmatpush1.msra.mxu0 0.0
  %458 = vmatprep.subr.mxu0 0.0
  %459 = vmatpush1.msra.mxu0 0.0
  %460 = vmatprep.subr.mxu0 0.0
  %461 = vmatpush1.msra.mxu0 0.0
  %462 = vmatprep.subr.mxu0 0.0
  %463 = vmatpush1.msra.mxu0 0.0
  %464 = vmatprep.subr.mxu0 0.0
  %465 = vmatpush1.msra.mxu0 0.0
  %466 = vmatprep.subr.mxu0 0.0
  %467 = vmatpush1.msra.mxu0 0.0
  %468 = vmatprep.subr.mxu0 0.0
  %469 = vmatpush1.msra.mxu0 0.0
  %470 = vmatprep.subr.mxu0 0.0
  %471 = vmatpush1.msra.mxu0 0.0
  %472 = vmatprep.subr.mxu0 0.0
  %473 = vmatpush1.msra.mxu0 0.0
  %474 = vmatprep.subr.mxu0 0.0
  %475 = vmatpush1.msra.mxu0 0.0
  %476 = vmatprep.subr.mxu0 0.0
  %477 = vmatpush1.msra.mxu0 0.0
  %478 = vmatprep.subr.mxu0 0.0
  %479 = vmatpush1.msra.mxu0 %v449
  %480 = vmatprep.subr.mxu0 0.0
  %481 = vmatpush1.msra.mxu0 %v448
  %482 = vmatprep.subr.mxu0 0.0
  %483 = vmatpush2.msra.mxu0 0.0
  %484 = vmatprep.subr.mxu0 0.0
  %485 = vmatpush2.msra.mxu0 0.0
  %486 = vmatprep.subr.mxu0 0.0
  %487 = vmatpush2.msra.mxu0 0.0
  %488 = vmatprep.subr.mxu0 0.0
  %489 = vmatpush2.msra.mxu0 0.0
  %490 = vmatprep.subr.mxu0 0.0
  %491 = vmatpush2.msra.mxu0 0.0
  %492 = vmatprep.subr.mxu0 0.0
  %493 = vmatpush2.msra.mxu0 0.0
  %494 = vmatprep.subr.mxu0 0.0
  %495 = vmatpush2.msra.mxu0 0.0
  %496 = vmatprep.subr.mxu0 0.0
  %497 = vmatpush2.msra.mxu0 0.0
  %498 = vmatprep.subr.mxu0 0.0
  %499 = vmatpush2.msra.mxu0 0.0
  %500 = vmatprep.subr.mxu0 0.0
  %501 = vmatpush2.msra.mxu0 0.0
  %502 = vmatprep.subr.mxu0 0.0
  %503 = vmatpush2.msra.mxu0 0.0
  %504 = vmatprep.subr.mxu0 0.0
  %505 = vmatpush2.msra.mxu0 0.0
  %506 = vmatprep.subr.mxu0 0.0
  %507 = vmatpush2.msra.mxu0 0.0
  %508 = vmatprep.subr.mxu0 0.0
  %509 = vmatpush2.msra.mxu0 0.0
  %510 = vmatprep.subr.mxu0 0.0
  %511 = vmatpush2.msra.mxu0 0.0
  %512 = vmatprep.subr.mxu0 0.0
  %513 = vmatpush2.msra.mxu0 0.0
  %514 = vmatprep.mubr.f32.mxu0 0.0
  %515 = vmatmul.mubr.f32.gmra.mxu0 %v374
  %v516 = vpop.f32.mrf.mxu0
  %v517 = vadd.f32 0.0, %v516
  %v518 = vpop.f32.mrf.mxu0
  %519 = vdwg.mxu0
  %s520 = scalar_lea.vmem %s7, 8
  %v521 = vld [vmem:[%s520] sm:$0xff]
  %vm522 = vcmask 31744
  %v524 = vsel %vm522, %v521, 0
  %vm526 = vcmask 1043456
  %v528 = vsel %vm526, %v517, 0
  %530 = vmatprep.subr.mxu0 0.0
  %531 = vmatpush1.msra.mxu0 0.0
  %532 = vmatprep.subr.mxu0 0.0
  %533 = vmatpush1.msra.mxu0 0.0
  %534 = vmatprep.subr.mxu0 0.0
  %535 = vmatpush1.msra.mxu0 0.0
  %536 = vmatprep.subr.mxu0 0.0
  %537 = vmatpush1.msra.mxu0 0.0
  %538 = vmatprep.subr.mxu0 0.0
  %539 = vmatpush1.msra.mxu0 0.0
  %540 = vmatprep.subr.mxu0 0.0
  %541 = vmatpush1.msra.mxu0 0.0
  %542 = vmatprep.subr.mxu0 0.0
  %543 = vmatpush1.msra.mxu0 0.0
  %544 = vmatprep.subr.mxu0 0.0
  %545 = vmatpush1.msra.mxu0 0.0
  %546 = vmatprep.subr.mxu0 0.0
  %547 = vmatpush1.msra.mxu0 0.0
  %548 = vmatprep.subr.mxu0 0.0
  %549 = vmatpush1.msra.mxu0 0.0
  %550 = vmatprep.subr.mxu0 0.0
  %551 = vmatpush1.msra.mxu0 0.0
  %552 = vmatprep.subr.mxu0 0.0
  %553 = vmatpush1.msra.mxu0 0.0
  %554 = vmatprep.subr.mxu0 0.0
  %555 = vmatpush1.msra.mxu0 0.0
  %556 = vmatprep.subr.mxu0 0.0
  %557 = vmatpush1.msra.mxu0 0.0
  %558 = vmatprep.subr.mxu0 0.0
  %559 = vmatpush1.msra.mxu0 0.0
  %560 = vmatprep.subr.mxu0 0.0
  %561 = vmatpush1.msra.mxu0 %v528
  %562 = vmatprep.subr.mxu0 0.0
  %563 = vmatpush2.msra.mxu0 0.0
  %564 = vmatprep.subr.mxu0 0.0
  %565 = vmatpush2.msra.mxu0 0.0
  %566 = vmatprep.subr.mxu0 0.0
  %567 = vmatpush2.msra.mxu0 0.0
  %568 = vmatprep.subr.mxu0 0.0
  %569 = vmatpush2.msra.mxu0 0.0
  %570 = vmatprep.subr.mxu0 0.0
  %571 = vmatpush2.msra.mxu0 0.0
  %572 = vmatprep.subr.mxu0 0.0
  %573 = vmatpush2.msra.mxu0 0.0
  %574 = vmatprep.subr.mxu0 0.0
  %575 = vmatpush2.msra.mxu0 0.0
  %576 = vmatprep.subr.mxu0 0.0
  %577 = vmatpush2.msra.mxu0 0.0
  %578 = vmatprep.subr.mxu0 0.0
  %579 = vmatpush2.msra.mxu0 0.0
  %580 = vmatprep.subr.mxu0 0.0
  %581 = vmatpush2.msra.mxu0 0.0
  %582 = vmatprep.subr.mxu0 0.0
  %583 = vmatpush2.msra.mxu0 0.0
  %584 = vmatprep.subr.mxu0 0.0
  %585 = vmatpush2.msra.mxu0 0.0
  %586 = vmatprep.subr.mxu0 0.0
  %587 = vmatpush2.msra.mxu0 0.0
  %588 = vmatprep.subr.mxu0 0.0
  %589 = vmatpush2.msra.mxu0 0.0
  %590 = vmatprep.subr.mxu0 0.0
  %591 = vmatpush2.msra.mxu0 0.0
  %592 = vmatprep.subr.mxu0 0.0
  %593 = vmatpush2.msra.mxu0 0.0
  %594 = vmatprep.mubr.f32.mxu0 0.0
  %595 = vmatmul.mubr.f32.gmra.mxu0 %v524
  %v596 = vpop.f32.mrf.mxu0
  %v597 = vadd.f32 0.0, %v596
  %v598 = vpop.f32.mrf.mxu0
  %599 = vdwg.mxu0
  %v601 = vsel %vm522, %v446, 0
  %v604 = vsel %vm526, %v443, 0
  %606 = vmatprep.subr.mxu0 0.0
  %607 = vmatpush1.msra.mxu0 0.0
  %608 = vmatprep.subr.mxu0 0.0
  %609 = vmatpush1.msra.mxu0 0.0
  %610 = vmatprep.subr.mxu0 0.0
  %611 = vmatpush1.msra.mxu0 0.0
  %612 = vmatprep.subr.mxu0 0.0
  %613 = vmatpush1.msra.mxu0 0.0
  %614 = vmatprep.subr.mxu0 0.0
  %615 = vmatpush1.msra.mxu0 0.0
  %616 = vmatprep.subr.mxu0 0.0
  %617 = vmatpush1.msra.mxu0 0.0
  %618 = vmatprep.subr.mxu0 0.0
  %619 = vmatpush1.msra.mxu0 0.0
  %620 = vmatprep.subr.mxu0 0.0
  %621 = vmatpush1.msra.mxu0 0.0
  %622 = vmatprep.subr.mxu0 0.0
  %623 = vmatpush1.msra.mxu0 0.0
  %624 = vmatprep.subr.mxu0 0.0
  %625 = vmatpush1.msra.mxu0 0.0
  %626 = vmatprep.subr.mxu0 0.0
  %627 = vmatpush1.msra.mxu0 0.0
  %628 = vmatprep.subr.mxu0 0.0
  %629 = vmatpush1.msra.mxu0 0.0
  %630 = vmatprep.subr.mxu0 0.0
  %631 = vmatpush1.msra.mxu0 0.0
  %632 = vmatprep.subr.mxu0 0.0
  %633 = vmatpush1.msra.mxu0 0.0
  %634 = vmatprep.subr.mxu0 0.0
  %635 = vmatpush1.msra.mxu0 0.0
  %636 = vmatprep.subr.mxu0 0.0
  %637 = vmatpush1.msra.mxu0 %v604
  %638 = vmatprep.subr.mxu0 0.0
  %639 = vmatpush2.msra.mxu0 0.0
  %640 = vmatprep.subr.mxu0 0.0
  %641 = vmatpush2.msra.mxu0 0.0
  %642 = vmatprep.subr.mxu0 0.0
  %643 = vmatpush2.msra.mxu0 0.0
  %644 = vmatprep.subr.mxu0 0.0
  %645 = vmatpush2.msra.mxu0 0.0
  %646 = vmatprep.subr.mxu0 0.0
  %647 = vmatpush2.msra.mxu0 0.0
  %648 = vmatprep.subr.mxu0 0.0
  %649 = vmatpush2.msra.mxu0 0.0
  %650 = vmatprep.subr.mxu0 0.0
  %651 = vmatpush2.msra.mxu0 0.0
  %652 = vmatprep.subr.mxu0 0.0
  %653 = vmatpush2.msra.mxu0 0.0
  %654 = vmatprep.subr.mxu0 0.0
  %655 = vmatpush2.msra.mxu0 0.0
  %656 = vmatprep.subr.mxu0 0.0
  %657 = vmatpush2.msra.mxu0 0.0
  %658 = vmatprep.subr.mxu0 0.0
  %659 = vmatpush2.msra.mxu0 0.0
  %660 = vmatprep.subr.mxu0 0.0
  %661 = vmatpush2.msra.mxu0 0.0
  %662 = vmatprep.subr.mxu0 0.0
  %663 = vmatpush2.msra.mxu0 0.0
  %664 = vmatprep.subr.mxu0 0.0
  %665 = vmatpush2.msra.mxu0 0.0
  %666 = vmatprep.subr.mxu0 0.0
  %667 = vmatpush2.msra.mxu0 0.0
  %668 = vmatprep.subr.mxu0 0.0
  %669 = vmatpush2.msra.mxu0 0.0
  %670 = vmatprep.mubr.f32.mxu0 0.0
  %671 = vmatmul.mubr.f32.gmra.mxu0 %v601
  %v672 = vpop.f32.mrf.mxu0
  %v673 = vadd.f32 %v597, %v672
  %v674 = vpop.f32.mrf.mxu0
  %675 = vdwg.mxu0
  %s676 = scalar_lea.vmem %s6, 32
  %v677 = vld [vmem:[%s676] sm:$0xff]
  %v678 = vld [vmem:[%s676 + $0x8] sm:$0xff]
  %679 = vmatprep.subr.mxu0 0.0
  %680 = vmatpush1.msra.mxu0 0.0
  %681 = vmatprep.subr.mxu0 0.0
  %682 = vmatpush1.msra.mxu0 0.0
  %683 = vmatprep.subr.mxu0 0.0
  %684 = vmatpush1.msra.mxu0 0.0
  %685 = vmatprep.subr.mxu0 0.0
  %686 = vmatpush1.msra.mxu0 0.0
  %687 = vmatprep.subr.mxu0 0.0
  %688 = vmatpush1.msra.mxu0 0.0
  %689 = vmatprep.subr.mxu0 0.0
  %690 = vmatpush1.msra.mxu0 0.0
  %691 = vmatprep.subr.mxu0 0.0
  %692 = vmatpush1.msra.mxu0 0.0
  %693 = vmatprep.subr.mxu0 0.0
  %694 = vmatpush1.msra.mxu0 0.0
  %695 = vmatprep.subr.mxu0 0.0
  %696 = vmatpush1.msra.mxu0 0.0
  %697 = vmatprep.subr.mxu0 0.0
  %698 = vmatpush1.msra.mxu0 0.0
  %699 = vmatprep.subr.mxu0 0.0
  %700 = vmatpush1.msra.mxu0 0.0
  %701 = vmatprep.subr.mxu0 0.0
  %702 = vmatpush1.msra.mxu0 0.0
  %703 = vmatprep.subr.mxu0 0.0
  %704 = vmatpush1.msra.mxu0 0.0
  %705 = vmatprep.subr.mxu0 0.0
  %706 = vmatpush1.msra.mxu0 0.0
  %707 = vmatprep.subr.mxu0 0.0
  %708 = vmatpush1.msra.mxu0 %v678
  %709 = vmatprep.subr.mxu0 0.0
  %710 = vmatpush1.msra.mxu0 %v677
  %711 = vmatprep.subr.mxu0 0.0
  %712 = vmatpush2.msra.mxu0 0.0
  %713 = vmatprep.subr.mxu0 0.0
  %714 = vmatpush2.msra.mxu0 0.0
  %715 = vmatprep.subr.mxu0 0.0
  %716 = vmatpush2.msra.mxu0 0.0
  %717 = vmatprep.subr.mxu0 0.0
  %718 = vmatpush2.msra.mxu0 0.0
  %719 = vmatprep.subr.mxu0 0.0
  %720 = vmatpush2.msra.mxu0 0.0
  %721 = vmatprep.subr.mxu0 0.0
  %722 = vmatpush2.msra.mxu0 0.0
  %723 = vmatprep.subr.mxu0 0.0
  %724 = vmatpush2.msra.mxu0 0.0
  %725 = vmatprep.subr.mxu0 0.0
  %726 = vmatpush2.msra.mxu0 0.0
  %727 = vmatprep.subr.mxu0 0.0
  %728 = vmatpush2.msra.mxu0 0.0
  %729 = vmatprep.subr.mxu0 0.0
  %730 = vmatpush2.msra.mxu0 0.0
  %731 = vmatprep.subr.mxu0 0.0
  %732 = vmatpush2.msra.mxu0 0.0
  %733 = vmatprep.subr.mxu0 0.0
  %734 = vmatpush2.msra.mxu0 0.0
  %735 = vmatprep.subr.mxu0 0.0
  %736 = vmatpush2.msra.mxu0 0.0
  %737 = vmatprep.subr.mxu0 0.0
  %738 = vmatpush2.msra.mxu0 0.0
  %739 = vmatprep.subr.mxu0 0.0
  %740 = vmatpush2.msra.mxu0 0.0
  %741 = vmatprep.subr.mxu0 0.0
  %742 = vmatpush2.msra.mxu0 0.0
  %743 = vmatprep.mubr.f32.mxu0 0.0
  %744 = vmatmul.mubr.f32.gmra.mxu0 %v374
  %v745 = vpop.f32.mrf.mxu0
  %v746 = vadd.f32 0.0, %v745
  %v747 = vpop.f32.mrf.mxu0
  %748 = vdwg.mxu0
  %s749 = scalar_lea.vmem %s7, 16
  %v750 = vld [vmem:[%s749] sm:$0xff]
  %v752 = vsel %vm522, %v750, 0
  %v755 = vsel %vm526, %v746, 0
  %757 = vmatprep.subr.mxu0 0.0
  %758 = vmatpush1.msra.mxu0 0.0
  %759 = vmatprep.subr.mxu0 0.0
  %760 = vmatpush1.msra.mxu0 0.0
  %761 = vmatprep.subr.mxu0 0.0
  %762 = vmatpush1.msra.mxu0 0.0
  %763 = vmatprep.subr.mxu0 0.0
  %764 = vmatpush1.msra.mxu0 0.0
  %765 = vmatprep.subr.mxu0 0.0
  %766 = vmatpush1.msra.mxu0 0.0
  %767 = vmatprep.subr.mxu0 0.0
  %768 = vmatpush1.msra.mxu0 0.0
  %769 = vmatprep.subr.mxu0 0.0
  %770 = vmatpush1.msra.mxu0 0.0
  %771 = vmatprep.subr.mxu0 0.0
  %772 = vmatpush1.msra.mxu0 0.0
  %773 = vmatprep.subr.mxu0 0.0
  %774 = vmatpush1.msra.mxu0 0.0
  %775 = vmatprep.subr.mxu0 0.0
  %776 = vmatpush1.msra.mxu0 0.0
  %777 = vmatprep.subr.mxu0 0.0
  %778 = vmatpush1.msra.mxu0 0.0
  %779 = vmatprep.subr.mxu0 0.0
  %780 = vmatpush1.msra.mxu0 0.0
  %781 = vmatprep.subr.mxu0 0.0
  %782 = vmatpush1.msra.mxu0 0.0
  %783 = vmatprep.subr.mxu0 0.0
  %784 = vmatpush1.msra.mxu0 0.0
  %785 = vmatprep.subr.mxu0 0.0
  %786 = vmatpush1.msra.mxu0 0.0
  %787 = vmatprep.subr.mxu0 0.0
  %788 = vmatpush1.msra.mxu0 %v755
  %789 = vmatprep.subr.mxu0 0.0
  %790 = vmatpush2.msra.mxu0 0.0
  %791 = vmatprep.subr.mxu0 0.0
  %792 = vmatpush2.msra.mxu0 0.0
  %793 = vmatprep.subr.mxu0 0.0
  %794 = vmatpush2.msra.mxu0 0.0
  %795 = vmatprep.subr.mxu0 0.0
  %796 = vmatpush2.msra.mxu0 0.0
  %797 = vmatprep.subr.mxu0 0.0
  %798 = vmatpush2.msra.mxu0 0.0
  %799 = vmatprep.subr.mxu0 0.0
  %800 = vmatpush2.msra.mxu0 0.0
  %801 = vmatprep.subr.mxu0 0.0
  %802 = vmatpush2.msra.mxu0 0.0
  %803 = vmatprep.subr.mxu0 0.0
  %804 = vmatpush2.msra.mxu0 0.0
  %805 = vmatprep.subr.mxu0 0.0
  %806 = vmatpush2.msra.mxu0 0.0
  %807 = vmatprep.subr.mxu0 0.0
  %808 = vmatpush2.msra.mxu0 0.0
  %809 = vmatprep.subr.mxu0 0.0
  %810 = vmatpush2.msra.mxu0 0.0
  %811 = vmatprep.subr.mxu0 0.0
  %812 = vmatpush2.msra.mxu0 0.0
  %813 = vmatprep.subr.mxu0 0.0
  %814 = vmatpush2.msra.mxu0 0.0
  %815 = vmatprep.subr.mxu0 0.0
  %816 = vmatpush2.msra.mxu0 0.0
  %817 = vmatprep.subr.mxu0 0.0
  %818 = vmatpush2.msra.mxu0 0.0
  %819 = vmatprep.subr.mxu0 0.0
  %820 = vmatpush2.msra.mxu0 0.0
  %821 = vmatprep.mubr.f32.mxu0 0.0
  %822 = vmatmul.mubr.f32.gmra.mxu0 %v752
  %v823 = vpop.f32.mrf.mxu0
  %v824 = vadd.f32 0.0, %v823
  %v825 = vpop.f32.mrf.mxu0
  %826 = vdwg.mxu0
  %v827 = vadd.f32 %v673, %v824
  %v828 = vld [vmem:[%s8] sm:$0x1]
  %v830 = vlaneseq
  %v831 = vshrl.u32 %v830, 7
  %v832 = vsub.s32 0, %v831
  %v833 = vrot.slane %v828, %v832
  %v835 = vadd.f32 %v827, %v833
  %vm836 = vcmask 523264
  %v837 = vsel %vm836, %v835, 0.0
  %v838 = vrot.slane %v837, 4
  %v839 = vadd.f32 %v837, %v838
  %v840 = vrot.slane %v839, 2
  %v841 = vadd.f32 %v839, %v840
  %v842 = vrot.slane %v841, 1
  %v843 = vadd.f32 %v841, %v842
  %v844 = vld [vmem:[%s11] sm:$0xff]
  %v845 = vld [vmem:[%s11 + $0x8] sm:$0xff]
  %v846 = vld [vmem:[%s11 + $0x10] sm:$0xff]
  %v847 = vld [vmem:[%s11 + $0x18] sm:$0xff]
  %v848 = vld [vmem:[%s11 + $0x20] sm:$0xff]
  %v849 = vld [vmem:[%s11 + $0x28] sm:$0xff]
  %v850 = vld [vmem:[%s11 + $0x30] sm:$0xff]
  %v851 = vld [vmem:[%s11 + $0x38] sm:$0xff]
  %v853 = vsel %vm836, %v843, 0
  %855 = vmatprep.subr.mxu0 0.0
  %856 = vmatpush1.msra.mxu0 0.0
  %857 = vmatprep.subr.mxu0 0.0
  %858 = vmatpush1.msra.mxu0 0.0
  %859 = vmatprep.subr.mxu0 0.0
  %860 = vmatpush1.msra.mxu0 0.0
  %861 = vmatprep.subr.mxu0 0.0
  %862 = vmatpush1.msra.mxu0 0.0
  %863 = vmatprep.subr.mxu0 0.0
  %864 = vmatpush1.msra.mxu0 0.0
  %865 = vmatprep.subr.mxu0 0.0
  %866 = vmatpush1.msra.mxu0 0.0
  %867 = vmatprep.subr.mxu0 0.0
  %868 = vmatpush1.msra.mxu0 0.0
  %869 = vmatprep.subr.mxu0 0.0
  %870 = vmatpush1.msra.mxu0 0.0
  %871 = vmatprep.subr.mxu0 0.0
  %872 = vmatpush1.msra.mxu0 %v851
  %873 = vmatprep.subr.mxu0 0.0
  %874 = vmatpush1.msra.mxu0 %v850
  %875 = vmatprep.subr.mxu0 0.0
  %876 = vmatpush1.msra.mxu0 %v849
  %877 = vmatprep.subr.mxu0 0.0
  %878 = vmatpush1.msra.mxu0 %v848
  %879 = vmatprep.subr.mxu0 0.0
  %880 = vmatpush1.msra.mxu0 %v847
  %881 = vmatprep.subr.mxu0 0.0
  %882 = vmatpush1.msra.mxu0 %v846
  %883 = vmatprep.subr.mxu0 0.0
  %884 = vmatpush1.msra.mxu0 %v845
  %885 = vmatprep.subr.mxu0 0.0
  %886 = vmatpush1.msra.mxu0 %v844
  %887 = vmatprep.subr.mxu0 0.0
  %888 = vmatpush2.msra.mxu0 0.0
  %889 = vmatprep.subr.mxu0 0.0
  %890 = vmatpush2.msra.mxu0 0.0
  %891 = vmatprep.subr.mxu0 0.0
  %892 = vmatpush2.msra.mxu0 0.0
  %893 = vmatprep.subr.mxu0 0.0
  %894 = vmatpush2.msra.mxu0 0.0
  %895 = vmatprep.subr.mxu0 0.0
  %896 = vmatpush2.msra.mxu0 0.0
  %897 = vmatprep.subr.mxu0 0.0
  %898 = vmatpush2.msra.mxu0 0.0
  %899 = vmatprep.subr.mxu0 0.0
  %900 = vmatpush2.msra.mxu0 0.0
  %901 = vmatprep.subr.mxu0 0.0
  %902 = vmatpush2.msra.mxu0 0.0
  %903 = vmatprep.subr.mxu0 0.0
  %904 = vmatpush2.msra.mxu0 0.0
  %905 = vmatprep.subr.mxu0 0.0
  %906 = vmatpush2.msra.mxu0 0.0
  %907 = vmatprep.subr.mxu0 0.0
  %908 = vmatpush2.msra.mxu0 0.0
  %909 = vmatprep.subr.mxu0 0.0
  %910 = vmatpush2.msra.mxu0 0.0
  %911 = vmatprep.subr.mxu0 0.0
  %912 = vmatpush2.msra.mxu0 0.0
  %913 = vmatprep.subr.mxu0 0.0
  %914 = vmatpush2.msra.mxu0 0.0
  %915 = vmatprep.subr.mxu0 0.0
  %916 = vmatpush2.msra.mxu0 0.0
  %917 = vmatprep.subr.mxu0 0.0
  %918 = vmatpush2.msra.mxu0 0.0
  %919 = vmatprep.mubr.f32.mxu0 0.0
  %920 = vmatmul.mubr.f32.gmra.mxu0 %v853
  %v921 = vpop.f32.mrf.mxu0
  %v922 = vadd.f32 0.0, %v921
  %v923 = vpop.f32.mrf.mxu0
  %924 = vdwg.mxu0
  %v925 = vlaneseq
  %v926 = vshrl.u32 %v925, 7
  %v927 = vsub.s32 0, %v926
  %v928 = vrot.slane %v922, %v927
  %v929 = vsub.f32 %v835, %v928
  %v930 = vmul.f32 %v929, %v929
  %v931 = vsel %vm836, %v930, 0.0
  %v932 = vrot.slane %v931, 4
  %v933 = vadd.f32 %v931, %v932
  %v934 = vrot.slane %v933, 2
  %v935 = vadd.f32 %v933, %v934
  %v936 = vrot.slane %v935, 1
  %v937 = vadd.f32 %v935, %v936
  %v938 = vld [vmem:[%s9] sm:$0x1]
  %v940 = vsel %vm836, %v937, 0
  %942 = vmatprep.subr.mxu0 0.0
  %943 = vmatpush1.msra.mxu0 0.0
  %944 = vmatprep.subr.mxu0 0.0
  %945 = vmatpush1.msra.mxu0 0.0
  %946 = vmatprep.subr.mxu0 0.0
  %947 = vmatpush1.msra.mxu0 0.0
  %948 = vmatprep.subr.mxu0 0.0
  %949 = vmatpush1.msra.mxu0 0.0
  %950 = vmatprep.subr.mxu0 0.0
  %951 = vmatpush1.msra.mxu0 0.0
  %952 = vmatprep.subr.mxu0 0.0
  %953 = vmatpush1.msra.mxu0 0.0
  %954 = vmatprep.subr.mxu0 0.0
  %955 = vmatpush1.msra.mxu0 0.0
  %956 = vmatprep.subr.mxu0 0.0
  %957 = vmatpush1.msra.mxu0 0.0
  %958 = vmatprep.subr.mxu0 0.0
  %959 = vmatpush1.msra.mxu0 %v851
  %960 = vmatprep.subr.mxu0 0.0
  %961 = vmatpush1.msra.mxu0 %v850
  %962 = vmatprep.subr.mxu0 0.0
  %963 = vmatpush1.msra.mxu0 %v849
  %964 = vmatprep.subr.mxu0 0.0
  %965 = vmatpush1.msra.mxu0 %v848
  %966 = vmatprep.subr.mxu0 0.0
  %967 = vmatpush1.msra.mxu0 %v847
  %968 = vmatprep.subr.mxu0 0.0
  %969 = vmatpush1.msra.mxu0 %v846
  %970 = vmatprep.subr.mxu0 0.0
  %971 = vmatpush1.msra.mxu0 %v845
  %972 = vmatprep.subr.mxu0 0.0
  %973 = vmatpush1.msra.mxu0 %v844
  %974 = vmatprep.subr.mxu0 0.0
  %975 = vmatpush2.msra.mxu0 0.0
  %976 = vmatprep.subr.mxu0 0.0
  %977 = vmatpush2.msra.mxu0 0.0
  %978 = vmatprep.subr.mxu0 0.0
  %979 = vmatpush2.msra.mxu0 0.0
  %980 = vmatprep.subr.mxu0 0.0
  %981 = vmatpush2.msra.mxu0 0.0
  %982 = vmatprep.subr.mxu0 0.0
  %983 = vmatpush2.msra.mxu0 0.0
  %984 = vmatprep.subr.mxu0 0.0
  %985 = vmatpush2.msra.mxu0 0.0
  %986 = vmatprep.subr.mxu0 0.0
  %987 = vmatpush2.msra.mxu0 0.0
  %988 = vmatprep.subr.mxu0 0.0
  %989 = vmatpush2.msra.mxu0 0.0
  %990 = vmatprep.subr.mxu0 0.0
  %991 = vmatpush2.msra.mxu0 0.0
  %992 = vmatprep.subr.mxu0 0.0
  %993 = vmatpush2.msra.mxu0 0.0
  %994 = vmatprep.subr.mxu0 0.0
  %995 = vmatpush2.msra.mxu0 0.0
  %996 = vmatprep.subr.mxu0 0.0
  %997 = vmatpush2.msra.mxu0 0.0
  %998 = vmatprep.subr.mxu0 0.0
  %999 = vmatpush2.msra.mxu0 0.0
  %1000 = vmatprep.subr.mxu0 0.0
  %1001 = vmatpush2.msra.mxu0 0.0
  %1002 = vmatprep.subr.mxu0 0.0
  %1003 = vmatpush2.msra.mxu0 0.0
  %1004 = vmatprep.subr.mxu0 0.0
  %1005 = vmatpush2.msra.mxu0 0.0
  %1006 = vmatprep.mubr.f32.mxu0 0.0
  %1007 = vmatmul.mubr.f32.gmra.mxu0 %v940
  %v1008 = vpop.f32.mrf.mxu0
  %v1009 = vadd.f32 1e-05, %v1008
  %v1010 = vpop.f32.mrf.mxu0
  %1011 = vdwg.mxu0
  %v1012 = vrsqrt.pop %v1009
  %v1013 = vmul.f32 %v938, %v1012
  %v1015 = vlaneseq
  %v1016 = vshrl.u32 %v1015, 7
  %v1017 = vsub.s32 0, %v1016
  %v1018 = vrot.slane %v1013, %v1017
  %v1020 = vmul.f32 %v929, %v1018
  %v1021 = vld [vmem:[%s10] sm:$0x1]
  %v1023 = vlaneseq
  %v1024 = vshrl.u32 %v1023, 7
  %v1025 = vsub.s32 0, %v1024
  %v1026 = vrot.slane %v1021, %v1025
  %v1028 = vadd.f32 %v1020, %v1026
  %vm1029 = vcmp.gt.f32.partialorder %v1028, 0.0
  %v1030 = vmul.f32 %v1028, 0.01
  %v1031 = vsel %vm1029, %v1028, %v1030
  %v1032 = vld [vmem:[%s12] sm:$0xff]
  %v1033 = vld [vmem:[%s12 + $0x8] sm:$0xff]
  %v1034 = vld [vmem:[%s12 + $0x10] sm:$0xff]
  %v1035 = vld [vmem:[%s12 + $0x18] sm:$0xff]
  %v1036 = vld [vmem:[%s12 + $0x20] sm:$0xff]
  %v1037 = vld [vmem:[%s12 + $0x28] sm:$0xff]
  %v1038 = vld [vmem:[%s12 + $0x30] sm:$0xff]
  %v1039 = vld [vmem:[%s12 + $0x38] sm:$0xff]
  %v1041 = vsel %vm836, %v1031, 0
  %1043 = vmatprep.subr.mxu0 0.0
  %1044 = vmatpush1.msra.mxu0 0.0
  %1045 = vmatprep.subr.mxu0 0.0
  %1046 = vmatpush1.msra.mxu0 0.0
  %1047 = vmatprep.subr.mxu0 0.0
  %1048 = vmatpush1.msra.mxu0 0.0
  %1049 = vmatprep.subr.mxu0 0.0
  %1050 = vmatpush1.msra.mxu0 0.0
  %1051 = vmatprep.subr.mxu0 0.0
  %1052 = vmatpush1.msra.mxu0 0.0
  %1053 = vmatprep.subr.mxu0 0.0
  %1054 = vmatpush1.msra.mxu0 0.0
  %1055 = vmatprep.subr.mxu0 0.0
  %1056 = vmatpush1.msra.mxu0 0.0
  %1057 = vmatprep.subr.mxu0 0.0
  %1058 = vmatpush1.msra.mxu0 0.0
  %1059 = vmatprep.subr.mxu0 0.0
  %1060 = vmatpush1.msra.mxu0 %v1039
  %1061 = vmatprep.subr.mxu0 0.0
  %1062 = vmatpush1.msra.mxu0 %v1038
  %1063 = vmatprep.subr.mxu0 0.0
  %1064 = vmatpush1.msra.mxu0 %v1037
  %1065 = vmatprep.subr.mxu0 0.0
  %1066 = vmatpush1.msra.mxu0 %v1036
  %1067 = vmatprep.subr.mxu0 0.0
  %1068 = vmatpush1.msra.mxu0 %v1035
  %1069 = vmatprep.subr.mxu0 0.0
  %1070 = vmatpush1.msra.mxu0 %v1034
  %1071 = vmatprep.subr.mxu0 0.0
  %1072 = vmatpush1.msra.mxu0 %v1033
  %1073 = vmatprep.subr.mxu0 0.0
  %1074 = vmatpush1.msra.mxu0 %v1032
  %1075 = vmatprep.subr.mxu0 0.0
  %1076 = vmatpush2.msra.mxu0 0.0
  %1077 = vmatprep.subr.mxu0 0.0
  %1078 = vmatpush2.msra.mxu0 0.0
  %1079 = vmatprep.subr.mxu0 0.0
  %1080 = vmatpush2.msra.mxu0 0.0
  %1081 = vmatprep.subr.mxu0 0.0
  %1082 = vmatpush2.msra.mxu0 0.0
  %1083 = vmatprep.subr.mxu0 0.0
  %1084 = vmatpush2.msra.mxu0 0.0
  %1085 = vmatprep.subr.mxu0 0.0
  %1086 = vmatpush2.msra.mxu0 0.0
  %1087 = vmatprep.subr.mxu0 0.0
  %1088 = vmatpush2.msra.mxu0 0.0
  %1089 = vmatprep.subr.mxu0 0.0
  %1090 = vmatpush2.msra.mxu0 0.0
  %1091 = vmatprep.subr.mxu0 0.0
  %1092 = vmatpush2.msra.mxu0 0.0
  %1093 = vmatprep.subr.mxu0 0.0
  %1094 = vmatpush2.msra.mxu0 0.0
  %1095 = vmatprep.subr.mxu0 0.0
  %1096 = vmatpush2.msra.mxu0 0.0
  %1097 = vmatprep.subr.mxu0 0.0
  %1098 = vmatpush2.msra.mxu0 0.0
  %1099 = vmatprep.subr.mxu0 0.0
  %1100 = vmatpush2.msra.mxu0 0.0
  %1101 = vmatprep.subr.mxu0 0.0
  %1102 = vmatpush2.msra.mxu0 0.0
  %1103 = vmatprep.subr.mxu0 0.0
  %1104 = vmatpush2.msra.mxu0 0.0
  %1105 = vmatprep.subr.mxu0 0.0
  %1106 = vmatpush2.msra.mxu0 0.0
  %1107 = vmatprep.mubr.f32.mxu0 0.0
  %1108 = vmatmul.mubr.f32.gmra.mxu0 %v1041
  %v1109 = vpop.f32.mrf.mxu0
  %v1110 = vadd.f32 0.0, %v1109
  %v1111 = vpop.f32.mrf.mxu0
  %1112 = vdwg.mxu0
  %v1113 = vld [vmem:[%s13] sm:$0xff]
  %v1114 = vld [vmem:[%s13 + $0x8] sm:$0xff]
  %s1115 = scalar_lea.vmem %s12, 64
  %v1116 = vld [vmem:[%s1115] sm:$0xff]
  %v1117 = vld [vmem:[%s1115 + $0x8] sm:$0xff]
  %v1118 = vld [vmem:[%s1115 + $0x10] sm:$0xff]
  %v1119 = vld [vmem:[%s1115 + $0x18] sm:$0xff]
  %v1120 = vld [vmem:[%s1115 + $0x20] sm:$0xff]
  %v1121 = vld [vmem:[%s1115 + $0x28] sm:$0xff]
  %v1122 = vld [vmem:[%s1115 + $0x30] sm:$0xff]
  %v1123 = vld [vmem:[%s1115 + $0x38] sm:$0xff]
  %1124 = vmatprep.subr.mxu0 0.0
  %1125 = vmatpush1.msra.mxu0 0.0
  %1126 = vmatprep.subr.mxu0 0.0
  %1127 = vmatpush1.msra.mxu0 0.0
  %1128 = vmatprep.subr.mxu0 0.0
  %1129 = vmatpush1.msra.mxu0 0.0
  %1130 = vmatprep.subr.mxu0 0.0
  %1131 = vmatpush1.msra.mxu0 0.0
  %1132 = vmatprep.subr.mxu0 0.0
  %1133 = vmatpush1.msra.mxu0 0.0
  %1134 = vmatprep.subr.mxu0 0.0
  %1135 = vmatpush1.msra.mxu0 0.0
  %1136 = vmatprep.subr.mxu0 0.0
  %1137 = vmatpush1.msra.mxu0 0.0
  %1138 = vmatprep.subr.mxu0 0.0
  %1139 = vmatpush1.msra.mxu0 0.0
  %1140 = vmatprep.subr.mxu0 0.0
  %1141 = vmatpush1.msra.mxu0 %v1123
  %1142 = vmatprep.subr.mxu0 0.0
  %1143 = vmatpush1.msra.mxu0 %v1122
  %1144 = vmatprep.subr.mxu0 0.0
  %1145 = vmatpush1.msra.mxu0 %v1121
  %1146 = vmatprep.subr.mxu0 0.0
  %1147 = vmatpush1.msra.mxu0 %v1120
  %1148 = vmatprep.subr.mxu0 0.0
  %1149 = vmatpush1.msra.mxu0 %v1119
  %1150 = vmatprep.subr.mxu0 0.0
  %1151 = vmatpush1.msra.mxu0 %v1118
  %1152 = vmatprep.subr.mxu0 0.0
  %1153 = vmatpush1.msra.mxu0 %v1117
  %1154 = vmatprep.subr.mxu0 0.0
  %1155 = vmatpush1.msra.mxu0 %v1116
  %1156 = vmatprep.subr.mxu0 0.0
  %1157 = vmatpush2.msra.mxu0 0.0
  %1158 = vmatprep.subr.mxu0 0.0
  %1159 = vmatpush2.msra.mxu0 0.0
  %1160 = vmatprep.subr.mxu0 0.0
  %1161 = vmatpush2.msra.mxu0 0.0
  %1162 = vmatprep.subr.mxu0 0.0
  %1163 = vmatpush2.msra.mxu0 0.0
  %1164 = vmatprep.subr.mxu0 0.0
  %1165 = vmatpush2.msra.mxu0 0.0
  %1166 = vmatprep.subr.mxu0 0.0
  %1167 = vmatpush2.msra.mxu0 0.0
  %1168 = vmatprep.subr.mxu0 0.0
  %1169 = vmatpush2.msra.mxu0 0.0
  %1170 = vmatprep.subr.mxu0 0.0
  %1171 = vmatpush2.msra.mxu0 0.0
  %1172 = vmatprep.subr.mxu0 0.0
  %1173 = vmatpush2.msra.mxu0 0.0
  %1174 = vmatprep.subr.mxu0 0.0
  %1175 = vmatpush2.msra.mxu0 0.0
  %1176 = vmatprep.subr.mxu0 0.0
  %1177 = vmatpush2.msra.mxu0 0.0
  %1178 = vmatprep.subr.mxu0 0.0
  %1179 = vmatpush2.msra.mxu0 0.0
  %1180 = vmatprep.subr.mxu0 0.0
  %1181 = vmatpush2.msra.mxu0 0.0
  %1182 = vmatprep.subr.mxu0 0.0
  %1183 = vmatpush2.msra.mxu0 0.0
  %1184 = vmatprep.subr.mxu0 0.0
  %1185 = vmatpush2.msra.mxu0 0.0
  %1186 = vmatprep.subr.mxu0 0.0
  %1187 = vmatpush2.msra.mxu0 0.0
  %1188 = vmatprep.mubr.f32.mxu0 0.0
  %1189 = vmatmul.mubr.f32.gmra.mxu0 %v1041
  %v1190 = vpop.f32.mrf.mxu0
  %v1191 = vadd.f32 0.0, %v1190
  %v1192 = vpop.f32.mrf.mxu0
  %1193 = vdwg.mxu0
  %s1194 = scalar_lea.vmem %s13, 16
  %v1195 = vld [vmem:[%s1194] sm:$0xff]
  %v1196 = vld [vmem:[%s1194 + $0x8] sm:$0xff]
  %vm1197 = vcmask 64512
  %v1199 = vsel %vm1197, %v1195, 0
  %v1202 = vsel %vm1197, %v1196, 0
  %1204 = vmatprep.subr.mxu0 0.0
  %1205 = vmatpush1.msra.mxu0 0.0
  %1206 = vmatprep.subr.mxu0 0.0
  %1207 = vmatpush1.msra.mxu0 0.0
  %1208 = vmatprep.subr.mxu0 0.0
  %1209 = vmatpush1.msra.mxu0 0.0
  %1210 = vmatprep.subr.mxu0 0.0
  %1211 = vmatpush1.msra.mxu0 0.0
  %1212 = vmatprep.subr.mxu0 0.0
  %1213 = vmatpush1.msra.mxu0 0.0
  %1214 = vmatprep.subr.mxu0 0.0
  %1215 = vmatpush1.msra.mxu0 0.0
  %1216 = vmatprep.subr.mxu0 0.0
  %1217 = vmatpush1.msra.mxu0 0.0
  %1218 = vmatprep.subr.mxu0 0.0
  %1219 = vmatpush1.msra.mxu0 0.0
  %1220 = vmatprep.subr.mxu0 0.0
  %1221 = vmatpush1.msra.mxu0 0.0
  %1222 = vmatprep.subr.mxu0 0.0
  %1223 = vmatpush1.msra.mxu0 0.0
  %1224 = vmatprep.subr.mxu0 0.0
  %1225 = vmatpush1.msra.mxu0 0.0
  %1226 = vmatprep.subr.mxu0 0.0
  %1227 = vmatpush1.msra.mxu0 0.0
  %1228 = vmatprep.subr.mxu0 0.0
  %1229 = vmatpush1.msra.mxu0 0.0
  %1230 = vmatprep.subr.mxu0 0.0
  %1231 = vmatpush1.msra.mxu0 0.0
  %1232 = vmatprep.subr.mxu0 0.0
  %1233 = vmatpush1.msra.mxu0 0.0
  %1234 = vmatprep.subr.mxu0 0.0
  %1235 = vmatpush1.msra.mxu0 %v1191
  %1236 = vmatprep.subr.mxu0 0.0
  %1237 = vmatpush2.msra.mxu0 0.0
  %1238 = vmatprep.subr.mxu0 0.0
  %1239 = vmatpush2.msra.mxu0 0.0
  %1240 = vmatprep.subr.mxu0 0.0
  %1241 = vmatpush2.msra.mxu0 0.0
  %1242 = vmatprep.subr.mxu0 0.0
  %1243 = vmatpush2.msra.mxu0 0.0
  %1244 = vmatprep.subr.mxu0 0.0
  %1245 = vmatpush2.msra.mxu0 0.0
  %1246 = vmatprep.subr.mxu0 0.0
  %1247 = vmatpush2.msra.mxu0 0.0
  %1248 = vmatprep.subr.mxu0 0.0
  %1249 = vmatpush2.msra.mxu0 0.0
  %1250 = vmatprep.subr.mxu0 0.0
  %1251 = vmatpush2.msra.mxu0 0.0
  %1252 = vmatprep.subr.mxu0 0.0
  %1253 = vmatpush2.msra.mxu0 0.0
  %1254 = vmatprep.subr.mxu0 0.0
  %1255 = vmatpush2.msra.mxu0 0.0
  %1256 = vmatprep.subr.mxu0 0.0
  %1257 = vmatpush2.msra.mxu0 0.0
  %1258 = vmatprep.subr.mxu0 0.0
  %1259 = vmatpush2.msra.mxu0 0.0
  %1260 = vmatprep.subr.mxu0 0.0
  %1261 = vmatpush2.msra.mxu0 0.0
  %1262 = vmatprep.subr.mxu0 0.0
  %1263 = vmatpush2.msra.mxu0 0.0
  %1264 = vmatprep.subr.mxu0 0.0
  %1265 = vmatpush2.msra.mxu0 0.0
  %1266 = vmatprep.subr.mxu0 0.0
  %1267 = vmatpush2.msra.mxu0 0.0
  %1268 = vmatprep.mubr.f32.mxu0 0.0
  %1269 = vmatmul.mubr.f32.gmra.mxu0 %v1199
  %v1270 = vpop.f32.mrf.mxu0
  %v1271 = vadd.f32 0.0, %v1270
  %v1272 = vpop.f32.mrf.mxu0
  %1273 = vmatprep.mubr.f32.mxu0 0.0
  %1274 = vmatmul.mubr.f32.gmra.mxu0 %v1202
  %v1275 = vpop.f32.mrf.mxu0
  %v1276 = vadd.f32 0.0, %v1275
  %v1277 = vpop.f32.mrf.mxu0
  %1278 = vdwg.mxu0
  %v1280 = vsel %vm1197, %v1113, 0
  %v1283 = vsel %vm1197, %v1114, 0
  %1285 = vmatprep.subr.mxu0 0.0
  %1286 = vmatpush1.msra.mxu0 0.0
  %1287 = vmatprep.subr.mxu0 0.0
  %1288 = vmatpush1.msra.mxu0 0.0
  %1289 = vmatprep.subr.mxu0 0.0
  %1290 = vmatpush1.msra.mxu0 0.0
  %1291 = vmatprep.subr.mxu0 0.0
  %1292 = vmatpush1.msra.mxu0 0.0
  %1293 = vmatprep.subr.mxu0 0.0
  %1294 = vmatpush1.msra.mxu0 0.0
  %1295 = vmatprep.subr.mxu0 0.0
  %1296 = vmatpush1.msra.mxu0 0.0
  %1297 = vmatprep.subr.mxu0 0.0
  %1298 = vmatpush1.msra.mxu0 0.0
  %1299 = vmatprep.subr.mxu0 0.0
  %1300 = vmatpush1.msra.mxu0 0.0
  %1301 = vmatprep.subr.mxu0 0.0
  %1302 = vmatpush1.msra.mxu0 0.0
  %1303 = vmatprep.subr.mxu0 0.0
  %1304 = vmatpush1.msra.mxu0 0.0
  %1305 = vmatprep.subr.mxu0 0.0
  %1306 = vmatpush1.msra.mxu0 0.0
  %1307 = vmatprep.subr.mxu0 0.0
  %1308 = vmatpush1.msra.mxu0 0.0
  %1309 = vmatprep.subr.mxu0 0.0
  %1310 = vmatpush1.msra.mxu0 0.0
  %1311 = vmatprep.subr.mxu0 0.0
  %1312 = vmatpush1.msra.mxu0 0.0
  %1313 = vmatprep.subr.mxu0 0.0
  %1314 = vmatpush1.msra.mxu0 0.0
  %1315 = vmatprep.subr.mxu0 0.0
  %1316 = vmatpush1.msra.mxu0 %v1110
  %1317 = vmatprep.subr.mxu0 0.0
  %1318 = vmatpush2.msra.mxu0 0.0
  %1319 = vmatprep.subr.mxu0 0.0
  %1320 = vmatpush2.msra.mxu0 0.0
  %1321 = vmatprep.subr.mxu0 0.0
  %1322 = vmatpush2.msra.mxu0 0.0
  %1323 = vmatprep.subr.mxu0 0.0
  %1324 = vmatpush2.msra.mxu0 0.0
  %1325 = vmatprep.subr.mxu0 0.0
  %1326 = vmatpush2.msra.mxu0 0.0
  %1327 = vmatprep.subr.mxu0 0.0
  %1328 = vmatpush2.msra.mxu0 0.0
  %1329 = vmatprep.subr.mxu0 0.0
  %1330 = vmatpush2.msra.mxu0 0.0
  %1331 = vmatprep.subr.mxu0 0.0
  %1332 = vmatpush2.msra.mxu0 0.0
  %1333 = vmatprep.subr.mxu0 0.0
  %1334 = vmatpush2.msra.mxu0 0.0
  %1335 = vmatprep.subr.mxu0 0.0
  %1336 = vmatpush2.msra.mxu0 0.0
  %1337 = vmatprep.subr.mxu0 0.0
  %1338 = vmatpush2.msra.mxu0 0.0
  %1339 = vmatprep.subr.mxu0 0.0
  %1340 = vmatpush2.msra.mxu0 0.0
  %1341 = vmatprep.subr.mxu0 0.0
  %1342 = vmatpush2.msra.mxu0 0.0
  %1343 = vmatprep.subr.mxu0 0.0
  %1344 = vmatpush2.msra.mxu0 0.0
  %1345 = vmatprep.subr.mxu0 0.0
  %1346 = vmatpush2.msra.mxu0 0.0
  %1347 = vmatprep.subr.mxu0 0.0
  %1348 = vmatpush2.msra.mxu0 0.0
  %1349 = vmatprep.mubr.f32.mxu0 0.0
  %1350 = vmatmul.mubr.f32.gmra.mxu0 %v1280
  %v1351 = vpop.f32.mrf.mxu0
  %v1352 = vadd.f32 %v1271, %v1351
  %v1353 = vpop.f32.mrf.mxu0
  %1354 = vmatprep.mubr.f32.mxu0 0.0
  %1355 = vmatmul.mubr.f32.gmra.mxu0 %v1283
  %v1356 = vpop.f32.mrf.mxu0
  %v1357 = vadd.f32 %v1276, %v1356
  %v1358 = vpop.f32.mrf.mxu0
  %1359 = vdwg.mxu0
  %s1360 = scalar_lea.vmem %s12, 128
  %v1361 = vld [vmem:[%s1360] sm:$0xff]
  %v1362 = vld [vmem:[%s1360 + $0x8] sm:$0xff]
  %v1363 = vld [vmem:[%s1360 + $0x10] sm:$0xff]
  %v1364 = vld [vmem:[%s1360 + $0x18] sm:$0xff]
  %v1365 = vld [vmem:[%s1360 + $0x20] sm:$0xff]
  %v1366 = vld [vmem:[%s1360 + $0x28] sm:$0xff]
  %v1367 = vld [vmem:[%s1360 + $0x30] sm:$0xff]
  %v1368 = vld [vmem:[%s1360 + $0x38] sm:$0xff]
  %1369 = vmatprep.subr.mxu0 0.0
  %1370 = vmatpush1.msra.mxu0 0.0
  %1371 = vmatprep.subr.mxu0 0.0
  %1372 = vmatpush1.msra.mxu0 0.0
  %1373 = vmatprep.subr.mxu0 0.0
  %1374 = vmatpush1.msra.mxu0 0.0
  %1375 = vmatprep.subr.mxu0 0.0
  %1376 = vmatpush1.msra.mxu0 0.0
  %1377 = vmatprep.subr.mxu0 0.0
  %1378 = vmatpush1.msra.mxu0 0.0
  %1379 = vmatprep.subr.mxu0 0.0
  %1380 = vmatpush1.msra.mxu0 0.0
  %1381 = vmatprep.subr.mxu0 0.0
  %1382 = vmatpush1.msra.mxu0 0.0
  %1383 = vmatprep.subr.mxu0 0.0
  %1384 = vmatpush1.msra.mxu0 0.0
  %1385 = vmatprep.subr.mxu0 0.0
  %1386 = vmatpush1.msra.mxu0 %v1368
  %1387 = vmatprep.subr.mxu0 0.0
  %1388 = vmatpush1.msra.mxu0 %v1367
  %1389 = vmatprep.subr.mxu0 0.0
  %1390 = vmatpush1.msra.mxu0 %v1366
  %1391 = vmatprep.subr.mxu0 0.0
  %1392 = vmatpush1.msra.mxu0 %v1365
  %1393 = vmatprep.subr.mxu0 0.0
  %1394 = vmatpush1.msra.mxu0 %v1364
  %1395 = vmatprep.subr.mxu0 0.0
  %1396 = vmatpush1.msra.mxu0 %v1363
  %1397 = vmatprep.subr.mxu0 0.0
  %1398 = vmatpush1.msra.mxu0 %v1362
  %1399 = vmatprep.subr.mxu0 0.0
  %1400 = vmatpush1.msra.mxu0 %v1361
  %1401 = vmatprep.subr.mxu0 0.0
  %1402 = vmatpush2.msra.mxu0 0.0
  %1403 = vmatprep.subr.mxu0 0.0
  %1404 = vmatpush2.msra.mxu0 0.0
  %1405 = vmatprep.subr.mxu0 0.0
  %1406 = vmatpush2.msra.mxu0 0.0
  %1407 = vmatprep.subr.mxu0 0.0
  %1408 = vmatpush2.msra.mxu0 0.0
  %1409 = vmatprep.subr.mxu0 0.0
  %1410 = vmatpush2.msra.mxu0 0.0
  %1411 = vmatprep.subr.mxu0 0.0
  %1412 = vmatpush2.msra.mxu0 0.0
  %1413 = vmatprep.subr.mxu0 0.0
  %1414 = vmatpush2.msra.mxu0 0.0
  %1415 = vmatprep.subr.mxu0 0.0
  %1416 = vmatpush2.msra.mxu0 0.0
  %1417 = vmatprep.subr.mxu0 0.0
  %1418 = vmatpush2.msra.mxu0 0.0
  %1419 = vmatprep.subr.mxu0 0.0
  %1420 = vmatpush2.msra.mxu0 0.0
  %1421 = vmatprep.subr.mxu0 0.0
  %1422 = vmatpush2.msra.mxu0 0.0
  %1423 = vmatprep.subr.mxu0 0.0
  %1424 = vmatpush2.msra.mxu0 0.0
  %1425 = vmatprep.subr.mxu0 0.0
  %1426 = vmatpush2.msra.mxu0 0.0
  %1427 = vmatprep.subr.mxu0 0.0
  %1428 = vmatpush2.msra.mxu0 0.0
  %1429 = vmatprep.subr.mxu0 0.0
  %1430 = vmatpush2.msra.mxu0 0.0
  %1431 = vmatprep.subr.mxu0 0.0
  %1432 = vmatpush2.msra.mxu0 0.0
  %1433 = vmatprep.mubr.f32.mxu0 0.0
  %1434 = vmatmul.mubr.f32.gmra.mxu0 %v1041
  %v1435 = vpop.f32.mrf.mxu0
  %v1436 = vadd.f32 0.0, %v1435
  %v1437 = vpop.f32.mrf.mxu0
  %1438 = vdwg.mxu0
  %s1439 = scalar_lea.vmem %s13, 32
  %v1440 = vld [vmem:[%s1439] sm:$0xff]
  %v1441 = vld [vmem:[%s1439 + $0x8] sm:$0xff]
  %v1443 = vsel %vm1197, %v1440, 0
  %v1446 = vsel %vm1197, %v1441, 0
  %1448 = vmatprep.subr.mxu0 0.0
  %1449 = vmatpush1.msra.mxu0 0.0
  %1450 = vmatprep.subr.mxu0 0.0
  %1451 = vmatpush1.msra.mxu0 0.0
  %1452 = vmatprep.subr.mxu0 0.0
  %1453 = vmatpush1.msra.mxu0 0.0
  %1454 = vmatprep.subr.mxu0 0.0
  %1455 = vmatpush1.msra.mxu0 0.0
  %1456 = vmatprep.subr.mxu0 0.0
  %1457 = vmatpush1.msra.mxu0 0.0
  %1458 = vmatprep.subr.mxu0 0.0
  %1459 = vmatpush1.msra.mxu0 0.0
  %1460 = vmatprep.subr.mxu0 0.0
  %1461 = vmatpush1.msra.mxu0 0.0
  %1462 = vmatprep.subr.mxu0 0.0
  %1463 = vmatpush1.msra.mxu0 0.0
  %1464 = vmatprep.subr.mxu0 0.0
  %1465 = vmatpush1.msra.mxu0 0.0
  %1466 = vmatprep.subr.mxu0 0.0
  %1467 = vmatpush1.msra.mxu0 0.0
  %1468 = vmatprep.subr.mxu0 0.0
  %1469 = vmatpush1.msra.mxu0 0.0
  %1470 = vmatprep.subr.mxu0 0.0
  %1471 = vmatpush1.msra.mxu0 0.0
  %1472 = vmatprep.subr.mxu0 0.0
  %1473 = vmatpush1.msra.mxu0 0.0
  %1474 = vmatprep.subr.mxu0 0.0
  %1475 = vmatpush1.msra.mxu0 0.0
  %1476 = vmatprep.subr.mxu0 0.0
  %1477 = vmatpush1.msra.mxu0 0.0
  %1478 = vmatprep.subr.mxu0 0.0
  %1479 = vmatpush1.msra.mxu0 %v1436
  %1480 = vmatprep.subr.mxu0 0.0
  %1481 = vmatpush2.msra.mxu0 0.0
  %1482 = vmatprep.subr.mxu0 0.0
  %1483 = vmatpush2.msra.mxu0 0.0
  %1484 = vmatprep.subr.mxu0 0.0
  %1485 = vmatpush2.msra.mxu0 0.0
  %1486 = vmatprep.subr.mxu0 0.0
  %1487 = vmatpush2.msra.mxu0 0.0
  %1488 = vmatprep.subr.mxu0 0.0
  %1489 = vmatpush2.msra.mxu0 0.0
  %1490 = vmatprep.subr.mxu0 0.0
  %1491 = vmatpush2.msra.mxu0 0.0
  %1492 = vmatprep.subr.mxu0 0.0
  %1493 = vmatpush2.msra.mxu0 0.0
  %1494 = vmatprep.subr.mxu0 0.0
  %1495 = vmatpush2.msra.mxu0 0.0
  %1496 = vmatprep.subr.mxu0 0.0
  %1497 = vmatpush2.msra.mxu0 0.0
  %1498 = vmatprep.subr.mxu0 0.0
  %1499 = vmatpush2.msra.mxu0 0.0
  %1500 = vmatprep.subr.mxu0 0.0
  %1501 = vmatpush2.msra.mxu0 0.0
  %1502 = vmatprep.subr.mxu0 0.0
  %1503 = vmatpush2.msra.mxu0 0.0
  %1504 = vmatprep.subr.mxu0 0.0
  %1505 = vmatpush2.msra.mxu0 0.0
  %1506 = vmatprep.subr.mxu0 0.0
  %1507 = vmatpush2.msra.mxu0 0.0
  %1508 = vmatprep.subr.mxu0 0.0
  %1509 = vmatpush2.msra.mxu0 0.0
  %1510 = vmatprep.subr.mxu0 0.0
  %1511 = vmatpush2.msra.mxu0 0.0
  %1512 = vmatprep.mubr.f32.mxu0 0.0
  %1513 = vmatmul.mubr.f32.gmra.mxu0 %v1443
  %v1514 = vpop.f32.mrf.mxu0
  %v1515 = vadd.f32 0.0, %v1514
  %v1516 = vpop.f32.mrf.mxu0
  %1517 = vmatprep.mubr.f32.mxu0 0.0
  %1518 = vmatmul.mubr.f32.gmra.mxu0 %v1446
  %v1519 = vpop.f32.mrf.mxu0
  %v1520 = vadd.f32 0.0, %v1519
  %v1521 = vpop.f32.mrf.mxu0
  %1522 = vdwg.mxu0
  %v1523 = vadd.f32 %v1352, %v1515
  %v1524 = vadd.f32 %v1357, %v1520
  %v1525 = vld [vmem:[%s14] sm:$0x1]
  %v1527 = vlaneseq
  %v1528 = vshrl.u32 %v1527, 7
  %v1529 = vsub.s32 0, %v1528
  %v1530 = vrot.slane %v1525, %v1529
  %v1532 = vadd.f32 %v1523, %v1530
  %v1533 = vadd.f32 %v1524, %v1530
  %v1534 = vsel %vm836, %v1532, 0.0
  %v1535 = vsel %vm836, %v1533, 0.0
  %v1536 = vadd.f32 %v1534, %v1535
  %v1537 = vrot.slane %v1536, 4
  %v1538 = vadd.f32 %v1536, %v1537
  %v1539 = vrot.slane %v1538, 2
  %v1540 = vadd.f32 %v1538, %v1539
  %v1541 = vrot.slane %v1540, 1
  %v1542 = vadd.f32 %v1540, %v1541
  %v1543 = vld [vmem:[%s17] sm:$0xff]
  %v1544 = vld [vmem:[%s17 + $0x8] sm:$0xff]
  %v1545 = vld [vmem:[%s17 + $0x10] sm:$0xff]
  %v1546 = vld [vmem:[%s17 + $0x18] sm:$0xff]
  %v1547 = vld [vmem:[%s17 + $0x20] sm:$0xff]
  %v1548 = vld [vmem:[%s17 + $0x28] sm:$0xff]
  %v1549 = vld [vmem:[%s17 + $0x30] sm:$0xff]
  %v1550 = vld [vmem:[%s17 + $0x38] sm:$0xff]
  %v1552 = vsel %vm836, %v1542, 0
  %1554 = vmatprep.subr.mxu0 0.0
  %1555 = vmatpush1.msra.mxu0 0.0
  %1556 = vmatprep.subr.mxu0 0.0
  %1557 = vmatpush1.msra.mxu0 0.0
  %1558 = vmatprep.subr.mxu0 0.0
  %1559 = vmatpush1.msra.mxu0 0.0
  %1560 = vmatprep.subr.mxu0 0.0
  %1561 = vmatpush1.msra.mxu0 0.0
  %1562 = vmatprep.subr.mxu0 0.0
  %1563 = vmatpush1.msra.mxu0 0.0
  %1564 = vmatprep.subr.mxu0 0.0
  %1565 = vmatpush1.msra.mxu0 0.0
  %1566 = vmatprep.subr.mxu0 0.0
  %1567 = vmatpush1.msra.mxu0 0.0
  %1568 = vmatprep.subr.mxu0 0.0
  %1569 = vmatpush1.msra.mxu0 0.0
  %1570 = vmatprep.subr.mxu0 0.0
  %1571 = vmatpush1.msra.mxu0 %v1550
  %1572 = vmatprep.subr.mxu0 0.0
  %1573 = vmatpush1.msra.mxu0 %v1549
  %1574 = vmatprep.subr.mxu0 0.0
  %1575 = vmatpush1.msra.mxu0 %v1548
  %1576 = vmatprep.subr.mxu0 0.0
  %1577 = vmatpush1.msra.mxu0 %v1547
  %1578 = vmatprep.subr.mxu0 0.0
  %1579 = vmatpush1.msra.mxu0 %v1546
  %1580 = vmatprep.subr.mxu0 0.0
  %1581 = vmatpush1.msra.mxu0 %v1545
  %1582 = vmatprep.subr.mxu0 0.0
  %1583 = vmatpush1.msra.mxu0 %v1544
  %1584 = vmatprep.subr.mxu0 0.0
  %1585 = vmatpush1.msra.mxu0 %v1543
  %1586 = vmatprep.subr.mxu0 0.0
  %1587 = vmatpush2.msra.mxu0 0.0
  %1588 = vmatprep.subr.mxu0 0.0
  %1589 = vmatpush2.msra.mxu0 0.0
  %1590 = vmatprep.subr.mxu0 0.0
  %1591 = vmatpush2.msra.mxu0 0.0
  %1592 = vmatprep.subr.mxu0 0.0
  %1593 = vmatpush2.msra.mxu0 0.0
  %1594 = vmatprep.subr.mxu0 0.0
  %1595 = vmatpush2.msra.mxu0 0.0
  %1596 = vmatprep.subr.mxu0 0.0
  %1597 = vmatpush2.msra.mxu0 0.0
  %1598 = vmatprep.subr.mxu0 0.0
  %1599 = vmatpush2.msra.mxu0 0.0
  %1600 = vmatprep.subr.mxu0 0.0
  %1601 = vmatpush2.msra.mxu0 0.0
  %1602 = vmatprep.subr.mxu0 0.0
  %1603 = vmatpush2.msra.mxu0 0.0
  %1604 = vmatprep.subr.mxu0 0.0
  %1605 = vmatpush2.msra.mxu0 0.0
  %1606 = vmatprep.subr.mxu0 0.0
  %1607 = vmatpush2.msra.mxu0 0.0
  %1608 = vmatprep.subr.mxu0 0.0
  %1609 = vmatpush2.msra.mxu0 0.0
  %1610 = vmatprep.subr.mxu0 0.0
  %1611 = vmatpush2.msra.mxu0 0.0
  %1612 = vmatprep.subr.mxu0 0.0
  %1613 = vmatpush2.msra.mxu0 0.0
  %1614 = vmatprep.subr.mxu0 0.0
  %1615 = vmatpush2.msra.mxu0 0.0
  %1616 = vmatprep.subr.mxu0 0.0
  %1617 = vmatpush2.msra.mxu0 0.0
  %1618 = vmatprep.mubr.f32.mxu0 0.0
  %1619 = vmatmul.mubr.f32.gmra.mxu0 %v1552
  %v1620 = vpop.f32.mrf.mxu0
  %v1621 = vadd.f32 0.0, %v1620
  %v1622 = vpop.f32.mrf.mxu0
  %1623 = vdwg.mxu0
  %v1624 = vlaneseq
  %v1625 = vshrl.u32 %v1624, 7
  %v1626 = vsub.s32 0, %v1625
  %v1627 = vrot.slane %v1621, %v1626
  %v1628 = vsub.f32 %v1532, %v1627
  %v1629 = vsub.f32 %v1533, %v1627
  %v1630 = vmul.f32 %v1628, %v1628
  %v1631 = vmul.f32 %v1629, %v1629
  %v1632 = vsel %vm836, %v1630, 0.0
  %v1633 = vsel %vm836, %v1631, 0.0
  %v1634 = vadd.f32 %v1632, %v1633
  %v1635 = vrot.slane %v1634, 4
  %v1636 = vadd.f32 %v1634, %v1635
  %v1637 = vrot.slane %v1636, 2
  %v1638 = vadd.f32 %v1636, %v1637
  %v1639 = vrot.slane %v1638, 1
  %v1640 = vadd.f32 %v1638, %v1639
  %v1641 = vld [vmem:[%s15] sm:$0x1]
  %v1643 = vsel %vm836, %v1640, 0
  %1645 = vmatprep.subr.mxu0 0.0
  %1646 = vmatpush1.msra.mxu0 0.0
  %1647 = vmatprep.subr.mxu0 0.0
  %1648 = vmatpush1.msra.mxu0 0.0
  %1649 = vmatprep.subr.mxu0 0.0
  %1650 = vmatpush1.msra.mxu0 0.0
  %1651 = vmatprep.subr.mxu0 0.0
  %1652 = vmatpush1.msra.mxu0 0.0
  %1653 = vmatprep.subr.mxu0 0.0
  %1654 = vmatpush1.msra.mxu0 0.0
  %1655 = vmatprep.subr.mxu0 0.0
  %1656 = vmatpush1.msra.mxu0 0.0
  %1657 = vmatprep.subr.mxu0 0.0
  %1658 = vmatpush1.msra.mxu0 0.0
  %1659 = vmatprep.subr.mxu0 0.0
  %1660 = vmatpush1.msra.mxu0 0.0
  %1661 = vmatprep.subr.mxu0 0.0
  %1662 = vmatpush1.msra.mxu0 %v1550
  %1663 = vmatprep.subr.mxu0 0.0
  %1664 = vmatpush1.msra.mxu0 %v1549
  %1665 = vmatprep.subr.mxu0 0.0
  %1666 = vmatpush1.msra.mxu0 %v1548
  %1667 = vmatprep.subr.mxu0 0.0
  %1668 = vmatpush1.msra.mxu0 %v1547
  %1669 = vmatprep.subr.mxu0 0.0
  %1670 = vmatpush1.msra.mxu0 %v1546
  %1671 = vmatprep.subr.mxu0 0.0
  %1672 = vmatpush1.msra.mxu0 %v1545
  %1673 = vmatprep.subr.mxu0 0.0
  %1674 = vmatpush1.msra.mxu0 %v1544
  %1675 = vmatprep.subr.mxu0 0.0
  %1676 = vmatpush1.msra.mxu0 %v1543
  %1677 = vmatprep.subr.mxu0 0.0
  %1678 = vmatpush2.msra.mxu0 0.0
  %1679 = vmatprep.subr.mxu0 0.0
  %1680 = vmatpush2.msra.mxu0 0.0
  %1681 = vmatprep.subr.mxu0 0.0
  %1682 = vmatpush2.msra.mxu0 0.0
  %1683 = vmatprep.subr.mxu0 0.0
  %1684 = vmatpush2.msra.mxu0 0.0
  %1685 = vmatprep.subr.mxu0 0.0
  %1686 = vmatpush2.msra.mxu0 0.0
  %1687 = vmatprep.subr.mxu0 0.0
  %1688 = vmatpush2.msra.mxu0 0.0
  %1689 = vmatprep.subr.mxu0 0.0
  %1690 = vmatpush2.msra.mxu0 0.0
  %1691 = vmatprep.subr.mxu0 0.0
  %1692 = vmatpush2.msra.mxu0 0.0
  %1693 = vmatprep.subr.mxu0 0.0
  %1694 = vmatpush2.msra.mxu0 0.0
  %1695 = vmatprep.subr.mxu0 0.0
  %1696 = vmatpush2.msra.mxu0 0.0
  %1697 = vmatprep.subr.mxu0 0.0
  %1698 = vmatpush2.msra.mxu0 0.0
  %1699 = vmatprep.subr.mxu0 0.0
  %1700 = vmatpush2.msra.mxu0 0.0
  %1701 = vmatprep.subr.mxu0 0.0
  %1702 = vmatpush2.msra.mxu0 0.0
  %1703 = vmatprep.subr.mxu0 0.0
  %1704 = vmatpush2.msra.mxu0 0.0
  %1705 = vmatprep.subr.mxu0 0.0
  %1706 = vmatpush2.msra.mxu0 0.0
  %1707 = vmatprep.subr.mxu0 0.0
  %1708 = vmatpush2.msra.mxu0 0.0
  %1709 = vmatprep.mubr.f32.mxu0 0.0
  %1710 = vmatmul.mubr.f32.gmra.mxu0 %v1643
  %v1711 = vpop.f32.mrf.mxu0
  %v1712 = vadd.f32 1e-05, %v1711
  %v1713 = vpop.f32.mrf.mxu0
  %1714 = vdwg.mxu0
  %v1715 = vrsqrt.pop %v1712
  %v1716 = vmul.f32 %v1641, %v1715
  %v1718 = vlaneseq
  %v1719 = vshrl.u32 %v1718, 7
  %v1720 = vsub.s32 0, %v1719
  %v1721 = vrot.slane %v1716, %v1720
  %v1723 = vmul.f32 %v1628, %v1721
  %v1724 = vmul.f32 %v1629, %v1721
  %v1725 = vld [vmem:[%s16] sm:$0x1]
  %v1727 = vlaneseq
  %v1728 = vshrl.u32 %v1727, 7
  %v1729 = vsub.s32 0, %v1728
  %v1730 = vrot.slane %v1725, %v1729
  %v1732 = vadd.f32 %v1723, %v1730
  %v1733 = vadd.f32 %v1724, %v1730
  %vm1734 = vcmp.gt.f32.partialorder %v1732, 0.0
  %vm1735 = vcmp.gt.f32.partialorder %v1733, 0.0
  %v1736 = vmul.f32 %v1732, 0.01
  %v1737 = vmul.f32 %v1733, 0.01
  %v1738 = vsel %vm1734, %v1732, %v1736
  %v1739 = vsel %vm1735, %v1733, %v1737
  %v1740 = vld [vmem:[%s18] sm:$0xff]
  %v1741 = vld [vmem:[%s18 + $0x8] sm:$0xff]
  %v1742 = vld [vmem:[%s18 + $0x10] sm:$0xff]
  %v1743 = vld [vmem:[%s18 + $0x18] sm:$0xff]
  %v1744 = vld [vmem:[%s18 + $0x20] sm:$0xff]
  %v1745 = vld [vmem:[%s18 + $0x28] sm:$0xff]
  %v1746 = vld [vmem:[%s18 + $0x30] sm:$0xff]
  %v1747 = vld [vmem:[%s18 + $0x38] sm:$0xff]
  %v1749 = vsel %vm836, %v1738, 0
  %v1752 = vsel %vm836, %v1739, 0
  %1754 = vmatprep.subr.mxu0 0.0
  %1755 = vmatpush1.msra.mxu0 0.0
  %1756 = vmatprep.subr.mxu0 0.0
  %1757 = vmatpush1.msra.mxu0 0.0
  %1758 = vmatprep.subr.mxu0 0.0
  %1759 = vmatpush1.msra.mxu0 0.0
  %1760 = vmatprep.subr.mxu0 0.0
  %1761 = vmatpush1.msra.mxu0 0.0
  %1762 = vmatprep.subr.mxu0 0.0
  %1763 = vmatpush1.msra.mxu0 0.0
  %1764 = vmatprep.subr.mxu0 0.0
  %1765 = vmatpush1.msra.mxu0 0.0
  %1766 = vmatprep.subr.mxu0 0.0
  %1767 = vmatpush1.msra.mxu0 0.0
  %1768 = vmatprep.subr.mxu0 0.0
  %1769 = vmatpush1.msra.mxu0 0.0
  %1770 = vmatprep.subr.mxu0 0.0
  %1771 = vmatpush1.msra.mxu0 %v1747
  %1772 = vmatprep.subr.mxu0 0.0
  %1773 = vmatpush1.msra.mxu0 %v1746
  %1774 = vmatprep.subr.mxu0 0.0
  %1775 = vmatpush1.msra.mxu0 %v1745
  %1776 = vmatprep.subr.mxu0 0.0
  %1777 = vmatpush1.msra.mxu0 %v1744
  %1778 = vmatprep.subr.mxu0 0.0
  %1779 = vmatpush1.msra.mxu0 %v1743
  %1780 = vmatprep.subr.mxu0 0.0
  %1781 = vmatpush1.msra.mxu0 %v1742
  %1782 = vmatprep.subr.mxu0 0.0
  %1783 = vmatpush1.msra.mxu0 %v1741
  %1784 = vmatprep.subr.mxu0 0.0
  %1785 = vmatpush1.msra.mxu0 %v1740
  %1786 = vmatprep.subr.mxu0 0.0
  %1787 = vmatpush2.msra.mxu0 0.0
  %1788 = vmatprep.subr.mxu0 0.0
  %1789 = vmatpush2.msra.mxu0 0.0
  %1790 = vmatprep.subr.mxu0 0.0
  %1791 = vmatpush2.msra.mxu0 0.0
  %1792 = vmatprep.subr.mxu0 0.0
  %1793 = vmatpush2.msra.mxu0 0.0
  %1794 = vmatprep.subr.mxu0 0.0
  %1795 = vmatpush2.msra.mxu0 0.0
  %1796 = vmatprep.subr.mxu0 0.0
  %1797 = vmatpush2.msra.mxu0 0.0
  %1798 = vmatprep.subr.mxu0 0.0
  %1799 = vmatpush2.msra.mxu0 0.0
  %1800 = vmatprep.subr.mxu0 0.0
  %1801 = vmatpush2.msra.mxu0 0.0
  %1802 = vmatprep.subr.mxu0 0.0
  %1803 = vmatpush2.msra.mxu0 0.0
  %1804 = vmatprep.subr.mxu0 0.0
  %1805 = vmatpush2.msra.mxu0 0.0
  %1806 = vmatprep.subr.mxu0 0.0
  %1807 = vmatpush2.msra.mxu0 0.0
  %1808 = vmatprep.subr.mxu0 0.0
  %1809 = vmatpush2.msra.mxu0 0.0
  %1810 = vmatprep.subr.mxu0 0.0
  %1811 = vmatpush2.msra.mxu0 0.0
  %1812 = vmatprep.subr.mxu0 0.0
  %1813 = vmatpush2.msra.mxu0 0.0
  %1814 = vmatprep.subr.mxu0 0.0
  %1815 = vmatpush2.msra.mxu0 0.0
  %1816 = vmatprep.subr.mxu0 0.0
  %1817 = vmatpush2.msra.mxu0 0.0
  %1818 = vmatprep.mubr.f32.mxu0 0.0
  %1819 = vmatmul.mubr.f32.gmra.mxu0 %v1749
  %v1820 = vpop.f32.mrf.mxu0
  %v1821 = vadd.f32 0.0, %v1820
  %v1822 = vpop.f32.mrf.mxu0
  %1823 = vmatprep.mubr.f32.mxu0 0.0
  %1824 = vmatmul.mubr.f32.gmra.mxu0 %v1752
  %v1825 = vpop.f32.mrf.mxu0
  %v1826 = vadd.f32 0.0, %v1825
  %v1827 = vpop.f32.mrf.mxu0
  %1828 = vdwg.mxu0
  %v1829 = vld [vmem:[%s19] sm:$0xff]
  %v1830 = vld [vmem:[%s19 + $0x8] sm:$0xff]
  %v1831 = vld [vmem:[%s19 + $0x10] sm:$0xff]
  %v1832 = vld [vmem:[%s19 + $0x18] sm:$0xff]
  %s1833 = scalar_lea.vmem %s18, 64
  %v1834 = vld [vmem:[%s1833] sm:$0xff]
  %v1835 = vld [vmem:[%s1833 + $0x8] sm:$0xff]
  %v1836 = vld [vmem:[%s1833 + $0x10] sm:$0xff]
  %v1837 = vld [vmem:[%s1833 + $0x18] sm:$0xff]
  %v1838 = vld [vmem:[%s1833 + $0x20] sm:$0xff]
  %v1839 = vld [vmem:[%s1833 + $0x28] sm:$0xff]
  %v1840 = vld [vmem:[%s1833 + $0x30] sm:$0xff]
  %v1841 = vld [vmem:[%s1833 + $0x38] sm:$0xff]
  %1842 = vmatprep.subr.mxu0 0.0
  %1843 = vmatpush1.msra.mxu0 0.0
  %1844 = vmatprep.subr.mxu0 0.0
  %1845 = vmatpush1.msra.mxu0 0.0
  %1846 = vmatprep.subr.mxu0 0.0
  %1847 = vmatpush1.msra.mxu0 0.0
  %1848 = vmatprep.subr.mxu0 0.0
  %1849 = vmatpush1.msra.mxu0 0.0
  %1850 = vmatprep.subr.mxu0 0.0
  %1851 = vmatpush1.msra.mxu0 0.0
  %1852 = vmatprep.subr.mxu0 0.0
  %1853 = vmatpush1.msra.mxu0 0.0
  %1854 = vmatprep.subr.mxu0 0.0
  %1855 = vmatpush1.msra.mxu0 0.0
  %1856 = vmatprep.subr.mxu0 0.0
  %1857 = vmatpush1.msra.mxu0 0.0
  %1858 = vmatprep.subr.mxu0 0.0
  %1859 = vmatpush1.msra.mxu0 %v1841
  %1860 = vmatprep.subr.mxu0 0.0
  %1861 = vmatpush1.msra.mxu0 %v1840
  %1862 = vmatprep.subr.mxu0 0.0
  %1863 = vmatpush1.msra.mxu0 %v1839
  %1864 = vmatprep.subr.mxu0 0.0
  %1865 = vmatpush1.msra.mxu0 %v1838
  %1866 = vmatprep.subr.mxu0 0.0
  %1867 = vmatpush1.msra.mxu0 %v1837
  %1868 = vmatprep.subr.mxu0 0.0
  %1869 = vmatpush1.msra.mxu0 %v1836
  %1870 = vmatprep.subr.mxu0 0.0
  %1871 = vmatpush1.msra.mxu0 %v1835
  %1872 = vmatprep.subr.mxu0 0.0
  %1873 = vmatpush1.msra.mxu0 %v1834
  %1874 = vmatprep.subr.mxu0 0.0
  %1875 = vmatpush2.msra.mxu0 0.0
  %1876 = vmatprep.subr.mxu0 0.0
  %1877 = vmatpush2.msra.mxu0 0.0
  %1878 = vmatprep.subr.mxu0 0.0
  %1879 = vmatpush2.msra.mxu0 0.0
  %1880 = vmatprep.subr.mxu0 0.0
  %1881 = vmatpush2.msra.mxu0 0.0
  %1882 = vmatprep.subr.mxu0 0.0
  %1883 = vmatpush2.msra.mxu0 0.0
  %1884 = vmatprep.subr.mxu0 0.0
  %1885 = vmatpush2.msra.mxu0 0.0
  %1886 = vmatprep.subr.mxu0 0.0
  %1887 = vmatpush2.msra.mxu0 0.0
  %1888 = vmatprep.subr.mxu0 0.0
  %1889 = vmatpush2.msra.mxu0 0.0
  %1890 = vmatprep.subr.mxu0 0.0
  %1891 = vmatpush2.msra.mxu0 0.0
  %1892 = vmatprep.subr.mxu0 0.0
  %1893 = vmatpush2.msra.mxu0 0.0
  %1894 = vmatprep.subr.mxu0 0.0
  %1895 = vmatpush2.msra.mxu0 0.0
  %1896 = vmatprep.subr.mxu0 0.0
  %1897 = vmatpush2.msra.mxu0 0.0
  %1898 = vmatprep.subr.mxu0 0.0
  %1899 = vmatpush2.msra.mxu0 0.0
  %1900 = vmatprep.subr.mxu0 0.0
  %1901 = vmatpush2.msra.mxu0 0.0
  %1902 = vmatprep.subr.mxu0 0.0
  %1903 = vmatpush2.msra.mxu0 0.0
  %1904 = vmatprep.subr.mxu0 0.0
  %1905 = vmatpush2.msra.mxu0 0.0
  %1906 = vmatprep.mubr.f32.mxu0 0.0
  %1907 = vmatmul.mubr.f32.gmra.mxu0 %v1749
  %v1908 = vpop.f32.mrf.mxu0
  %v1909 = vadd.f32 0.0, %v1908
  %v1910 = vpop.f32.mrf.mxu0
  %1911 = vmatprep.mubr.f32.mxu0 0.0
  %1912 = vmatmul.mubr.f32.gmra.mxu0 %v1752
  %v1913 = vpop.f32.mrf.mxu0
  %v1914 = vadd.f32 0.0, %v1913
  %v1915 = vpop.f32.mrf.mxu0
  %1916 = vdwg.mxu0
  %s1917 = scalar_lea.vmem %s19, 32
  %v1918 = vld [vmem:[%s1917] sm:$0xff]
  %v1919 = vld [vmem:[%s1917 + $0x8] sm:$0xff]
  %v1920 = vld [vmem:[%s1917 + $0x10] sm:$0xff]
  %v1921 = vld [vmem:[%s1917 + $0x18] sm:$0xff]
  %v1923 = vsel %vm96, %v1918, 0
  %v1926 = vsel %vm96, %v1919, 0
  %v1929 = vsel %vm96, %v1920, 0
  %v1932 = vsel %vm96, %v1921, 0
  %1934 = vmatprep.subr.mxu0 0.0
  %1935 = vmatpush1.msra.mxu0 0.0
  %1936 = vmatprep.subr.mxu0 0.0
  %1937 = vmatpush1.msra.mxu0 0.0
  %1938 = vmatprep.subr.mxu0 0.0
  %1939 = vmatpush1.msra.mxu0 0.0
  %1940 = vmatprep.subr.mxu0 0.0
  %1941 = vmatpush1.msra.mxu0 0.0
  %1942 = vmatprep.subr.mxu0 0.0
  %1943 = vmatpush1.msra.mxu0 0.0
  %1944 = vmatprep.subr.mxu0 0.0
  %1945 = vmatpush1.msra.mxu0 0.0
  %1946 = vmatprep.subr.mxu0 0.0
  %1947 = vmatpush1.msra.mxu0 0.0
  %1948 = vmatprep.subr.mxu0 0.0
  %1949 = vmatpush1.msra.mxu0 0.0
  %1950 = vmatprep.subr.mxu0 0.0
  %1951 = vmatpush1.msra.mxu0 0.0
  %1952 = vmatprep.subr.mxu0 0.0
  %1953 = vmatpush1.msra.mxu0 0.0
  %1954 = vmatprep.subr.mxu0 0.0
  %1955 = vmatpush1.msra.mxu0 0.0
  %1956 = vmatprep.subr.mxu0 0.0
  %1957 = vmatpush1.msra.mxu0 0.0
  %1958 = vmatprep.subr.mxu0 0.0
  %1959 = vmatpush1.msra.mxu0 0.0
  %1960 = vmatprep.subr.mxu0 0.0
  %1961 = vmatpush1.msra.mxu0 0.0
  %1962 = vmatprep.subr.mxu0 0.0
  %1963 = vmatpush1.msra.mxu0 %v1914
  %1964 = vmatprep.subr.mxu0 0.0
  %1965 = vmatpush1.msra.mxu0 %v1909
  %1966 = vmatprep.subr.mxu0 0.0
  %1967 = vmatpush2.msra.mxu0 0.0
  %1968 = vmatprep.subr.mxu0 0.0
  %1969 = vmatpush2.msra.mxu0 0.0
  %1970 = vmatprep.subr.mxu0 0.0
  %1971 = vmatpush2.msra.mxu0 0.0
  %1972 = vmatprep.subr.mxu0 0.0
  %1973 = vmatpush2.msra.mxu0 0.0
  %1974 = vmatprep.subr.mxu0 0.0
  %1975 = vmatpush2.msra.mxu0 0.0
  %1976 = vmatprep.subr.mxu0 0.0
  %1977 = vmatpush2.msra.mxu0 0.0
  %1978 = vmatprep.subr.mxu0 0.0
  %1979 = vmatpush2.msra.mxu0 0.0
  %1980 = vmatprep.subr.mxu0 0.0
  %1981 = vmatpush2.msra.mxu0 0.0
  %1982 = vmatprep.subr.mxu0 0.0
  %1983 = vmatpush2.msra.mxu0 0.0
  %1984 = vmatprep.subr.mxu0 0.0
  %1985 = vmatpush2.msra.mxu0 0.0
  %1986 = vmatprep.subr.mxu0 0.0
  %1987 = vmatpush2.msra.mxu0 0.0
  %1988 = vmatprep.subr.mxu0 0.0
  %1989 = vmatpush2.msra.mxu0 0.0
  %1990 = vmatprep.subr.mxu0 0.0
  %1991 = vmatpush2.msra.mxu0 0.0
  %1992 = vmatprep.subr.mxu0 0.0
  %1993 = vmatpush2.msra.mxu0 0.0
  %1994 = vmatprep.subr.mxu0 0.0
  %1995 = vmatpush2.msra.mxu0 0.0
  %1996 = vmatprep.subr.mxu0 0.0
  %1997 = vmatpush2.msra.mxu0 0.0
  %1998 = vmatprep.mubr.f32.mxu0 0.0
  %1999 = vmatmul.mubr.f32.gmra.mxu0 %v1923
  %v2000 = vpop.f32.mrf.mxu0
  %v2001 = vadd.f32 0.0, %v2000
  %v2002 = vpop.f32.mrf.mxu0
  %2003 = vmatprep.mubr.f32.mxu0 0.0
  %2004 = vmatmul.mubr.f32.gmra.mxu0 %v1926
  %v2005 = vpop.f32.mrf.mxu0
  %v2006 = vadd.f32 0.0, %v2005
  %v2007 = vpop.f32.mrf.mxu0
  %2008 = vmatprep.mubr.f32.mxu0 0.0
  %2009 = vmatmul.mubr.f32.gmra.mxu0 %v1929
  %v2010 = vpop.f32.mrf.mxu0
  %v2011 = vadd.f32 0.0, %v2010
  %v2012 = vpop.f32.mrf.mxu0
  %2013 = vmatprep.mubr.f32.mxu0 0.0
  %2014 = vmatmul.mubr.f32.gmra.mxu0 %v1932
  %v2015 = vpop.f32.mrf.mxu0
  %v2016 = vadd.f32 0.0, %v2015
  %v2017 = vpop.f32.mrf.mxu0
  %2018 = vdwg.mxu0
  %v2020 = vsel %vm96, %v1829, 0
  %v2023 = vsel %vm96, %v1830, 0
  %v2026 = vsel %vm96, %v1831, 0
  %v2029 = vsel %vm96, %v1832, 0
  %2031 = vmatprep.subr.mxu0 0.0
  %2032 = vmatpush1.msra.mxu0 0.0
  %2033 = vmatprep.subr.mxu0 0.0
  %2034 = vmatpush1.msra.mxu0 0.0
  %2035 = vmatprep.subr.mxu0 0.0
  %2036 = vmatpush1.msra.mxu0 0.0
  %2037 = vmatprep.subr.mxu0 0.0
  %2038 = vmatpush1.msra.mxu0 0.0
  %2039 = vmatprep.subr.mxu0 0.0
  %2040 = vmatpush1.msra.mxu0 0.0
  %2041 = vmatprep.subr.mxu0 0.0
  %2042 = vmatpush1.msra.mxu0 0.0
  %2043 = vmatprep.subr.mxu0 0.0
  %2044 = vmatpush1.msra.mxu0 0.0
  %2045 = vmatprep.subr.mxu0 0.0
  %2046 = vmatpush1.msra.mxu0 0.0
  %2047 = vmatprep.subr.mxu0 0.0
  %2048 = vmatpush1.msra.mxu0 0.0
  %2049 = vmatprep.subr.mxu0 0.0
  %2050 = vmatpush1.msra.mxu0 0.0
  %2051 = vmatprep.subr.mxu0 0.0
  %2052 = vmatpush1.msra.mxu0 0.0
  %2053 = vmatprep.subr.mxu0 0.0
  %2054 = vmatpush1.msra.mxu0 0.0
  %2055 = vmatprep.subr.mxu0 0.0
  %2056 = vmatpush1.msra.mxu0 0.0
  %2057 = vmatprep.subr.mxu0 0.0
  %2058 = vmatpush1.msra.mxu0 0.0
  %2059 = vmatprep.subr.mxu0 0.0
  %2060 = vmatpush1.msra.mxu0 %v1826
  %2061 = vmatprep.subr.mxu0 0.0
  %2062 = vmatpush1.msra.mxu0 %v1821
  %2063 = vmatprep.subr.mxu0 0.0
  %2064 = vmatpush2.msra.mxu0 0.0
  %2065 = vmatprep.subr.mxu0 0.0
  %2066 = vmatpush2.msra.mxu0 0.0
  %2067 = vmatprep.subr.mxu0 0.0
  %2068 = vmatpush2.msra.mxu0 0.0
  %2069 = vmatprep.subr.mxu0 0.0
  %2070 = vmatpush2.msra.mxu0 0.0
  %2071 = vmatprep.subr.mxu0 0.0
  %2072 = vmatpush2.msra.mxu0 0.0
  %2073 = vmatprep.subr.mxu0 0.0
  %2074 = vmatpush2.msra.mxu0 0.0
  %2075 = vmatprep.subr.mxu0 0.0
  %2076 = vmatpush2.msra.mxu0 0.0
  %2077 = vmatprep.subr.mxu0 0.0
  %2078 = vmatpush2.msra.mxu0 0.0
  %2079 = vmatprep.subr.mxu0 0.0
  %2080 = vmatpush2.msra.mxu0 0.0
  %2081 = vmatprep.subr.mxu0 0.0
  %2082 = vmatpush2.msra.mxu0 0.0
  %2083 = vmatprep.subr.mxu0 0.0
  %2084 = vmatpush2.msra.mxu0 0.0
  %2085 = vmatprep.subr.mxu0 0.0
  %2086 = vmatpush2.msra.mxu0 0.0
  %2087 = vmatprep.subr.mxu0 0.0
  %2088 = vmatpush2.msra.mxu0 0.0
  %2089 = vmatprep.subr.mxu0 0.0
  %2090 = vmatpush2.msra.mxu0 0.0
  %2091 = vmatprep.subr.mxu0 0.0
  %2092 = vmatpush2.msra.mxu0 0.0
  %2093 = vmatprep.subr.mxu0 0.0
  %2094 = vmatpush2.msra.mxu0 0.0
  %2095 = vmatprep.mubr.f32.mxu0 0.0
  %2096 = vmatmul.mubr.f32.gmra.mxu0 %v2020
  %v2097 = vpop.f32.mrf.mxu0
  %v2098 = vadd.f32 %v2001, %v2097
  %v2099 = vpop.f32.mrf.mxu0
  %2100 = vmatprep.mubr.f32.mxu0 0.0
  %2101 = vmatmul.mubr.f32.gmra.mxu0 %v2023
  %v2102 = vpop.f32.mrf.mxu0
  %v2103 = vadd.f32 %v2006, %v2102
  %v2104 = vpop.f32.mrf.mxu0
  %2105 = vmatprep.mubr.f32.mxu0 0.0
  %2106 = vmatmul.mubr.f32.gmra.mxu0 %v2026
  %v2107 = vpop.f32.mrf.mxu0
  %v2108 = vadd.f32 %v2011, %v2107
  %v2109 = vpop.f32.mrf.mxu0
  %2110 = vmatprep.mubr.f32.mxu0 0.0
  %2111 = vmatmul.mubr.f32.gmra.mxu0 %v2029
  %v2112 = vpop.f32.mrf.mxu0
  %v2113 = vadd.f32 %v2016, %v2112
  %v2114 = vpop.f32.mrf.mxu0
  %2115 = vdwg.mxu0
  %s2116 = scalar_lea.vmem %s18, 128
  %v2117 = vld [vmem:[%s2116] sm:$0xff]
  %v2118 = vld [vmem:[%s2116 + $0x8] sm:$0xff]
  %v2119 = vld [vmem:[%s2116 + $0x10] sm:$0xff]
  %v2120 = vld [vmem:[%s2116 + $0x18] sm:$0xff]
  %v2121 = vld [vmem:[%s2116 + $0x20] sm:$0xff]
  %v2122 = vld [vmem:[%s2116 + $0x28] sm:$0xff]
  %v2123 = vld [vmem:[%s2116 + $0x30] sm:$0xff]
  %v2124 = vld [vmem:[%s2116 + $0x38] sm:$0xff]
  %2125 = vmatprep.subr.mxu0 0.0
  %2126 = vmatpush1.msra.mxu0 0.0
  %2127 = vmatprep.subr.mxu0 0.0
  %2128 = vmatpush1.msra.mxu0 0.0
  %2129 = vmatprep.subr.mxu0 0.0
  %2130 = vmatpush1.msra.mxu0 0.0
  %2131 = vmatprep.subr.mxu0 0.0
  %2132 = vmatpush1.msra.mxu0 0.0
  %2133 = vmatprep.subr.mxu0 0.0
  %2134 = vmatpush1.msra.mxu0 0.0
  %2135 = vmatprep.subr.mxu0 0.0
  %2136 = vmatpush1.msra.mxu0 0.0
  %2137 = vmatprep.subr.mxu0 0.0
  %2138 = vmatpush1.msra.mxu0 0.0
  %2139 = vmatprep.subr.mxu0 0.0
  %2140 = vmatpush1.msra.mxu0 0.0
  %2141 = vmatprep.subr.mxu0 0.0
  %2142 = vmatpush1.msra.mxu0 %v2124
  %2143 = vmatprep.subr.mxu0 0.0
  %2144 = vmatpush1.msra.mxu0 %v2123
  %2145 = vmatprep.subr.mxu0 0.0
  %2146 = vmatpush1.msra.mxu0 %v2122
  %2147 = vmatprep.subr.mxu0 0.0
  %2148 = vmatpush1.msra.mxu0 %v2121
  %2149 = vmatprep.subr.mxu0 0.0
  %2150 = vmatpush1.msra.mxu0 %v2120
  %2151 = vmatprep.subr.mxu0 0.0
  %2152 = vmatpush1.msra.mxu0 %v2119
  %2153 = vmatprep.subr.mxu0 0.0
  %2154 = vmatpush1.msra.mxu0 %v2118
  %2155 = vmatprep.subr.mxu0 0.0
  %2156 = vmatpush1.msra.mxu0 %v2117
  %2157 = vmatprep.subr.mxu0 0.0
  %2158 = vmatpush2.msra.mxu0 0.0
  %2159 = vmatprep.subr.mxu0 0.0
  %2160 = vmatpush2.msra.mxu0 0.0
  %2161 = vmatprep.subr.mxu0 0.0
  %2162 = vmatpush2.msra.mxu0 0.0
  %2163 = vmatprep.subr.mxu0 0.0
  %2164 = vmatpush2.msra.mxu0 0.0
  %2165 = vmatprep.subr.mxu0 0.0
  %2166 = vmatpush2.msra.mxu0 0.0
  %2167 = vmatprep.subr.mxu0 0.0
  %2168 = vmatpush2.msra.mxu0 0.0
  %2169 = vmatprep.subr.mxu0 0.0
  %2170 = vmatpush2.msra.mxu0 0.0
  %2171 = vmatprep.subr.mxu0 0.0
  %2172 = vmatpush2.msra.mxu0 0.0
  %2173 = vmatprep.subr.mxu0 0.0
  %2174 = vmatpush2.msra.mxu0 0.0
  %2175 = vmatprep.subr.mxu0 0.0
  %2176 = vmatpush2.msra.mxu0 0.0
  %2177 = vmatprep.subr.mxu0 0.0
  %2178 = vmatpush2.msra.mxu0 0.0
  %2179 = vmatprep.subr.mxu0 0.0
  %2180 = vmatpush2.msra.mxu0 0.0
  %2181 = vmatprep.subr.mxu0 0.0
  %2182 = vmatpush2.msra.mxu0 0.0
  %2183 = vmatprep.subr.mxu0 0.0
  %2184 = vmatpush2.msra.mxu0 0.0
  %2185 = vmatprep.subr.mxu0 0.0
  %2186 = vmatpush2.msra.mxu0 0.0
  %2187 = vmatprep.subr.mxu0 0.0
  %2188 = vmatpush2.msra.mxu0 0.0
  %2189 = vmatprep.mubr.f32.mxu0 0.0
  %2190 = vmatmul.mubr.f32.gmra.mxu0 %v1749
  %v2191 = vpop.f32.mrf.mxu0
  %v2192 = vadd.f32 0.0, %v2191
  %v2193 = vpop.f32.mrf.mxu0
  %2194 = vmatprep.mubr.f32.mxu0 0.0
  %2195 = vmatmul.mubr.f32.gmra.mxu0 %v1752
  %v2196 = vpop.f32.mrf.mxu0
  %v2197 = vadd.f32 0.0, %v2196
  %v2198 = vpop.f32.mrf.mxu0
  %2199 = vdwg.mxu0
  %s2200 = scalar_lea.vmem %s19, 64
  %v2201 = vld [vmem:[%s2200] sm:$0xff]
  %v2202 = vld [vmem:[%s2200 + $0x8] sm:$0xff]
  %v2203 = vld [vmem:[%s2200 + $0x10] sm:$0xff]
  %v2204 = vld [vmem:[%s2200 + $0x18] sm:$0xff]
  %v2206 = vsel %vm96, %v2201, 0
  %v2209 = vsel %vm96, %v2202, 0
  %v2212 = vsel %vm96, %v2203, 0
  %v2215 = vsel %vm96, %v2204, 0
  %2217 = vmatprep.subr.mxu0 0.0
  %2218 = vmatpush1.msra.mxu0 0.0
  %2219 = vmatprep.subr.mxu0 0.0
  %2220 = vmatpush1.msra.mxu0 0.0
  %2221 = vmatprep.subr.mxu0 0.0
  %2222 = vmatpush1.msra.mxu0 0.0
  %2223 = vmatprep.subr.mxu0 0.0
  %2224 = vmatpush1.msra.mxu0 0.0
  %2225 = vmatprep.subr.mxu0 0.0
  %2226 = vmatpush1.msra.mxu0 0.0
  %2227 = vmatprep.subr.mxu0 0.0
  %2228 = vmatpush1.msra.mxu0 0.0
  %2229 = vmatprep.subr.mxu0 0.0
  %2230 = vmatpush1.msra.mxu0 0.0
  %2231 = vmatprep.subr.mxu0 0.0
  %2232 = vmatpush1.msra.mxu0 0.0
  %2233 = vmatprep.subr.mxu0 0.0
  %2234 = vmatpush1.msra.mxu0 0.0
  %2235 = vmatprep.subr.mxu0 0.0
  %2236 = vmatpush1.msra.mxu0 0.0
  %2237 = vmatprep.subr.mxu0 0.0
  %2238 = vmatpush1.msra.mxu0 0.0
  %2239 = vmatprep.subr.mxu0 0.0
  %2240 = vmatpush1.msra.mxu0 0.0
  %2241 = vmatprep.subr.mxu0 0.0
  %2242 = vmatpush1.msra.mxu0 0.0
  %2243 = vmatprep.subr.mxu0 0.0
  %2244 = vmatpush1.msra.mxu0 0.0
  %2245 = vmatprep.subr.mxu0 0.0
  %2246 = vmatpush1.msra.mxu0 %v2197
  %2247 = vmatprep.subr.mxu0 0.0
  %2248 = vmatpush1.msra.mxu0 %v2192
  %2249 = vmatprep.subr.mxu0 0.0
  %2250 = vmatpush2.msra.mxu0 0.0
  %2251 = vmatprep.subr.mxu0 0.0
  %2252 = vmatpush2.msra.mxu0 0.0
  %2253 = vmatprep.subr.mxu0 0.0
  %2254 = vmatpush2.msra.mxu0 0.0
  %2255 = vmatprep.subr.mxu0 0.0
  %2256 = vmatpush2.msra.mxu0 0.0
  %2257 = vmatprep.subr.mxu0 0.0
  %2258 = vmatpush2.msra.mxu0 0.0
  %2259 = vmatprep.subr.mxu0 0.0
  %2260 = vmatpush2.msra.mxu0 0.0
  %2261 = vmatprep.subr.mxu0 0.0
  %2262 = vmatpush2.msra.mxu0 0.0
  %2263 = vmatprep.subr.mxu0 0.0
  %2264 = vmatpush2.msra.mxu0 0.0
  %2265 = vmatprep.subr.mxu0 0.0
  %2266 = vmatpush2.msra.mxu0 0.0
  %2267 = vmatprep.subr.mxu0 0.0
  %2268 = vmatpush2.msra.mxu0 0.0
  %2269 = vmatprep.subr.mxu0 0.0
  %2270 = vmatpush2.msra.mxu0 0.0
  %2271 = vmatprep.subr.mxu0 0.0
  %2272 = vmatpush2.msra.mxu0 0.0
  %2273 = vmatprep.subr.mxu0 0.0
  %2274 = vmatpush2.msra.mxu0 0.0
  %2275 = vmatprep.subr.mxu0 0.0
  %2276 = vmatpush2.msra.mxu0 0.0
  %2277 = vmatprep.subr.mxu0 0.0
  %2278 = vmatpush2.msra.mxu0 0.0
  %2279 = vmatprep.subr.mxu0 0.0
  %2280 = vmatpush2.msra.mxu0 0.0
  %2281 = vmatprep.mubr.f32.mxu0 0.0
  %2282 = vmatmul.mubr.f32.gmra.mxu0 %v2206
  %v2283 = vpop.f32.mrf.mxu0
  %v2284 = vadd.f32 0.0, %v2283
  %v2285 = vpop.f32.mrf.mxu0
  %2286 = vmatprep.mubr.f32.mxu0 0.0
  %2287 = vmatmul.mubr.f32.gmra.mxu0 %v2209
  %v2288 = vpop.f32.mrf.mxu0
  %v2289 = vadd.f32 0.0, %v2288
  %v2290 = vpop.f32.mrf.mxu0
  %2291 = vmatprep.mubr.f32.mxu0 0.0
  %2292 = vmatmul.mubr.f32.gmra.mxu0 %v2212
  %v2293 = vpop.f32.mrf.mxu0
  %v2294 = vadd.f32 0.0, %v2293
  %v2295 = vpop.f32.mrf.mxu0
  %2296 = vmatprep.mubr.f32.mxu0 0.0
  %2297 = vmatmul.mubr.f32.gmra.mxu0 %v2215
  %v2298 = vpop.f32.mrf.mxu0
  %v2299 = vadd.f32 0.0, %v2298
  %v2300 = vpop.f32.mrf.mxu0
  %2301 = vdwg.mxu0
  %v2302 = vadd.f32 %v2098, %v2284
  %v2303 = vadd.f32 %v2103, %v2289
  %v2304 = vadd.f32 %v2108, %v2294
  %v2305 = vadd.f32 %v2113, %v2299
  %v2306 = vld [vmem:[%s20] sm:$0x1]
  %v2308 = vlaneseq
  %v2309 = vshrl.u32 %v2308, 7
  %v2310 = vsub.s32 0, %v2309
  %v2311 = vrot.slane %v2306, %v2310
  %v2313 = vadd.f32 %v2302, %v2311
  %v2314 = vadd.f32 %v2303, %v2311
  %v2315 = vadd.f32 %v2304, %v2311
  %v2316 = vadd.f32 %v2305, %v2311
  %v2317 = vsel %vm836, %v2313, 0.0
  %v2318 = vsel %vm836, %v2314, 0.0
  %v2319 = vadd.f32 %v2317, %v2318
  %v2320 = vsel %vm836, %v2315, 0.0
  %v2321 = vadd.f32 %v2319, %v2320
  %v2322 = vsel %vm836, %v2316, 0.0
  %v2323 = vadd.f32 %v2321, %v2322
  %v2324 = vrot.slane %v2323, 4
  %v2325 = vadd.f32 %v2323, %v2324
  %v2326 = vrot.slane %v2325, 2
  %v2327 = vadd.f32 %v2325, %v2326
  %v2328 = vrot.slane %v2327, 1
  %v2329 = vadd.f32 %v2327, %v2328
  %v2330 = vld [vmem:[%s23] sm:$0xff]
  %v2331 = vld [vmem:[%s23 + $0x8] sm:$0xff]
  %v2332 = vld [vmem:[%s23 + $0x10] sm:$0xff]
  %v2333 = vld [vmem:[%s23 + $0x18] sm:$0xff]
  %v2334 = vld [vmem:[%s23 + $0x20] sm:$0xff]
  %v2335 = vld [vmem:[%s23 + $0x28] sm:$0xff]
  %v2336 = vld [vmem:[%s23 + $0x30] sm:$0xff]
  %v2337 = vld [vmem:[%s23 + $0x38] sm:$0xff]
  %v2339 = vsel %vm836, %v2329, 0
  %2341 = vmatprep.subr.mxu0 0.0
  %2342 = vmatpush1.msra.mxu0 0.0
  %2343 = vmatprep.subr.mxu0 0.0
  %2344 = vmatpush1.msra.mxu0 0.0
  %2345 = vmatprep.subr.mxu0 0.0
  %2346 = vmatpush1.msra.mxu0 0.0
  %2347 = vmatprep.subr.mxu0 0.0
  %2348 = vmatpush1.msra.mxu0 0.0
  %2349 = vmatprep.subr.mxu0 0.0
  %2350 = vmatpush1.msra.mxu0 0.0
  %2351 = vmatprep.subr.mxu0 0.0
  %2352 = vmatpush1.msra.mxu0 0.0
  %2353 = vmatprep.subr.mxu0 0.0
  %2354 = vmatpush1.msra.mxu0 0.0
  %2355 = vmatprep.subr.mxu0 0.0
  %2356 = vmatpush1.msra.mxu0 0.0
  %2357 = vmatprep.subr.mxu0 0.0
  %2358 = vmatpush1.msra.mxu0 %v2337
  %2359 = vmatprep.subr.mxu0 0.0
  %2360 = vmatpush1.msra.mxu0 %v2336
  %2361 = vmatprep.subr.mxu0 0.0
  %2362 = vmatpush1.msra.mxu0 %v2335
  %2363 = vmatprep.subr.mxu0 0.0
  %2364 = vmatpush1.msra.mxu0 %v2334
  %2365 = vmatprep.subr.mxu0 0.0
  %2366 = vmatpush1.msra.mxu0 %v2333
  %2367 = vmatprep.subr.mxu0 0.0
  %2368 = vmatpush1.msra.mxu0 %v2332
  %2369 = vmatprep.subr.mxu0 0.0
  %2370 = vmatpush1.msra.mxu0 %v2331
  %2371 = vmatprep.subr.mxu0 0.0
  %2372 = vmatpush1.msra.mxu0 %v2330
  %2373 = vmatprep.subr.mxu0 0.0
  %2374 = vmatpush2.msra.mxu0 0.0
  %2375 = vmatprep.subr.mxu0 0.0
  %2376 = vmatpush2.msra.mxu0 0.0
  %2377 = vmatprep.subr.mxu0 0.0
  %2378 = vmatpush2.msra.mxu0 0.0
  %2379 = vmatprep.subr.mxu0 0.0
  %2380 = vmatpush2.msra.mxu0 0.0
  %2381 = vmatprep.subr.mxu0 0.0
  %2382 = vmatpush2.msra.mxu0 0.0
  %2383 = vmatprep.subr.mxu0 0.0
  %2384 = vmatpush2.msra.mxu0 0.0
  %2385 = vmatprep.subr.mxu0 0.0
  %2386 = vmatpush2.msra.mxu0 0.0
  %2387 = vmatprep.subr.mxu0 0.0
  %2388 = vmatpush2.msra.mxu0 0.0
  %2389 = vmatprep.subr.mxu0 0.0
  %2390 = vmatpush2.msra.mxu0 0.0
  %2391 = vmatprep.subr.mxu0 0.0
  %2392 = vmatpush2.msra.mxu0 0.0
  %2393 = vmatprep.subr.mxu0 0.0
  %2394 = vmatpush2.msra.mxu0 0.0
  %2395 = vmatprep.subr.mxu0 0.0
  %2396 = vmatpush2.msra.mxu0 0.0
  %2397 = vmatprep.subr.mxu0 0.0
  %2398 = vmatpush2.msra.mxu0 0.0
  %2399 = vmatprep.subr.mxu0 0.0
  %2400 = vmatpush2.msra.mxu0 0.0
  %2401 = vmatprep.subr.mxu0 0.0
  %2402 = vmatpush2.msra.mxu0 0.0
  %2403 = vmatprep.subr.mxu0 0.0
  %2404 = vmatpush2.msra.mxu0 0.0
  %2405 = vmatprep.mubr.f32.mxu0 0.0
  %2406 = vmatmul.mubr.f32.gmra.mxu0 %v2339
  %v2407 = vpop.f32.mrf.mxu0
  %v2408 = vadd.f32 0.0, %v2407
  %v2409 = vpop.f32.mrf.mxu0
  %2410 = vdwg.mxu0
  %v2411 = vlaneseq
  %v2412 = vshrl.u32 %v2411, 7
  %v2413 = vsub.s32 0, %v2412
  %v2414 = vrot.slane %v2408, %v2413
  %v2415 = vsub.f32 %v2313, %v2414
  %v2416 = vsub.f32 %v2314, %v2414
  %v2417 = vsub.f32 %v2315, %v2414
  %v2418 = vsub.f32 %v2316, %v2414
  %v2419 = vmul.f32 %v2415, %v2415
  %v2420 = vmul.f32 %v2416, %v2416
  %v2421 = vmul.f32 %v2417, %v2417
  %v2422 = vmul.f32 %v2418, %v2418
  %v2423 = vsel %vm836, %v2419, 0.0
  %v2424 = vsel %vm836, %v2420, 0.0
  %v2425 = vadd.f32 %v2423, %v2424
  %v2426 = vsel %vm836, %v2421, 0.0
  %v2427 = vadd.f32 %v2425, %v2426
  %v2428 = vsel %vm836, %v2422, 0.0
  %v2429 = vadd.f32 %v2427, %v2428
  %v2430 = vrot.slane %v2429, 4
  %v2431 = vadd.f32 %v2429, %v2430
  %v2432 = vrot.slane %v2431, 2
  %v2433 = vadd.f32 %v2431, %v2432
  %v2434 = vrot.slane %v2433, 1
  %v2435 = vadd.f32 %v2433, %v2434
  %v2436 = vld [vmem:[%s21] sm:$0x1]
  %v2438 = vsel %vm836, %v2435, 0
  %2440 = vmatprep.subr.mxu0 0.0
  %2441 = vmatpush1.msra.mxu0 0.0
  %2442 = vmatprep.subr.mxu0 0.0
  %2443 = vmatpush1.msra.mxu0 0.0
  %2444 = vmatprep.subr.mxu0 0.0
  %2445 = vmatpush1.msra.mxu0 0.0
  %2446 = vmatprep.subr.mxu0 0.0
  %2447 = vmatpush1.msra.mxu0 0.0
  %2448 = vmatprep.subr.mxu0 0.0
  %2449 = vmatpush1.msra.mxu0 0.0
  %2450 = vmatprep.subr.mxu0 0.0
  %2451 = vmatpush1.msra.mxu0 0.0
  %2452 = vmatprep.subr.mxu0 0.0
  %2453 = vmatpush1.msra.mxu0 0.0
  %2454 = vmatprep.subr.mxu0 0.0
  %2455 = vmatpush1.msra.mxu0 0.0
  %2456 = vmatprep.subr.mxu0 0.0
  %2457 = vmatpush1.msra.mxu0 %v2337
  %2458 = vmatprep.subr.mxu0 0.0
  %2459 = vmatpush1.msra.mxu0 %v2336
  %2460 = vmatprep.subr.mxu0 0.0
  %2461 = vmatpush1.msra.mxu0 %v2335
  %2462 = vmatprep.subr.mxu0 0.0
  %2463 = vmatpush1.msra.mxu0 %v2334
  %2464 = vmatprep.subr.mxu0 0.0
  %2465 = vmatpush1.msra.mxu0 %v2333
  %2466 = vmatprep.subr.mxu0 0.0
  %2467 = vmatpush1.msra.mxu0 %v2332
  %2468 = vmatprep.subr.mxu0 0.0
  %2469 = vmatpush1.msra.mxu0 %v2331
  %2470 = vmatprep.subr.mxu0 0.0
  %2471 = vmatpush1.msra.mxu0 %v2330
  %2472 = vmatprep.subr.mxu0 0.0
  %2473 = vmatpush2.msra.mxu0 0.0
  %2474 = vmatprep.subr.mxu0 0.0
  %2475 = vmatpush2.msra.mxu0 0.0
  %2476 = vmatprep.subr.mxu0 0.0
  %2477 = vmatpush2.msra.mxu0 0.0
  %2478 = vmatprep.subr.mxu0 0.0
  %2479 = vmatpush2.msra.mxu0 0.0
  %2480 = vmatprep.subr.mxu0 0.0
  %2481 = vmatpush2.msra.mxu0 0.0
  %2482 = vmatprep.subr.mxu0 0.0
  %2483 = vmatpush2.msra.mxu0 0.0
  %2484 = vmatprep.subr.mxu0 0.0
  %2485 = vmatpush2.msra.mxu0 0.0
  %2486 = vmatprep.subr.mxu0 0.0
  %2487 = vmatpush2.msra.mxu0 0.0
  %2488 = vmatprep.subr.mxu0 0.0
  %2489 = vmatpush2.msra.mxu0 0.0
  %2490 = vmatprep.subr.mxu0 0.0
  %2491 = vmatpush2.msra.mxu0 0.0
  %2492 = vmatprep.subr.mxu0 0.0
  %2493 = vmatpush2.msra.mxu0 0.0
  %2494 = vmatprep.subr.mxu0 0.0
  %2495 = vmatpush2.msra.mxu0 0.0
  %2496 = vmatprep.subr.mxu0 0.0
  %2497 = vmatpush2.msra.mxu0 0.0
  %2498 = vmatprep.subr.mxu0 0.0
  %2499 = vmatpush2.msra.mxu0 0.0
  %2500 = vmatprep.subr.mxu0 0.0
  %2501 = vmatpush2.msra.mxu0 0.0
  %2502 = vmatprep.subr.mxu0 0.0
  %2503 = vmatpush2.msra.mxu0 0.0
  %2504 = vmatprep.mubr.f32.mxu0 0.0
  %2505 = vmatmul.mubr.f32.gmra.mxu0 %v2438
  %v2506 = vpop.f32.mrf.mxu0
  %v2507 = vadd.f32 1e-05, %v2506
  %v2508 = vpop.f32.mrf.mxu0
  %2509 = vdwg.mxu0
  %v2510 = vrsqrt.pop %v2507
  %v2511 = vmul.f32 %v2436, %v2510
  %v2513 = vlaneseq
  %v2514 = vshrl.u32 %v2513, 7
  %v2515 = vsub.s32 0, %v2514
  %v2516 = vrot.slane %v2511, %v2515
  %v2518 = vmul.f32 %v2415, %v2516
  %v2519 = vmul.f32 %v2416, %v2516
  %v2520 = vmul.f32 %v2417, %v2516
  %v2521 = vmul.f32 %v2418, %v2516
  %v2522 = vld [vmem:[%s22] sm:$0x1]
  %v2524 = vlaneseq
  %v2525 = vshrl.u32 %v2524, 7
  %v2526 = vsub.s32 0, %v2525
  %v2527 = vrot.slane %v2522, %v2526
  %v2529 = vadd.f32 %v2518, %v2527
  %v2530 = vadd.f32 %v2519, %v2527
  %v2531 = vadd.f32 %v2520, %v2527
  %v2532 = vadd.f32 %v2521, %v2527
  %vm2533 = vcmp.gt.f32.partialorder %v2529, 0.0
  %vm2534 = vcmp.gt.f32.partialorder %v2530, 0.0
  %vm2535 = vcmp.gt.f32.partialorder %v2531, 0.0
  %vm2536 = vcmp.gt.f32.partialorder %v2532, 0.0
  %v2537 = vmul.f32 %v2529, 0.01
  %v2538 = vmul.f32 %v2530, 0.01
  %v2539 = vmul.f32 %v2531, 0.01
  %v2540 = vmul.f32 %v2532, 0.01
  %v2541 = vsel %vm2533, %v2529, %v2537
  %v2542 = vsel %vm2534, %v2530, %v2538
  %v2543 = vsel %vm2535, %v2531, %v2539
  %v2544 = vsel %vm2536, %v2532, %v2540
  %v2545 = vld [vmem:[%s24] sm:$0xff]
  %v2546 = vld [vmem:[%s24 + $0x8] sm:$0xff]
  %v2547 = vld [vmem:[%s24 + $0x10] sm:$0xff]
  %v2548 = vld [vmem:[%s24 + $0x18] sm:$0xff]
  %v2549 = vld [vmem:[%s24 + $0x20] sm:$0xff]
  %v2550 = vld [vmem:[%s24 + $0x28] sm:$0xff]
  %v2551 = vld [vmem:[%s24 + $0x30] sm:$0xff]
  %v2552 = vld [vmem:[%s24 + $0x38] sm:$0xff]
  %v2554 = vsel %vm836, %v2541, 0
  %v2557 = vsel %vm836, %v2542, 0
  %v2560 = vsel %vm836, %v2543, 0
  %v2563 = vsel %vm836, %v2544, 0
  %2565 = vmatprep.subr.mxu0 0.0
  %2566 = vmatpush1.msra.mxu0 0.0
  %2567 = vmatprep.subr.mxu0 0.0
  %2568 = vmatpush1.msra.mxu0 0.0
  %2569 = vmatprep.subr.mxu0 0.0
  %2570 = vmatpush1.msra.mxu0 0.0
  %2571 = vmatprep.subr.mxu0 0.0
  %2572 = vmatpush1.msra.mxu0 0.0
  %2573 = vmatprep.subr.mxu0 0.0
  %2574 = vmatpush1.msra.mxu0 0.0
  %2575 = vmatprep.subr.mxu0 0.0
  %2576 = vmatpush1.msra.mxu0 0.0
  %2577 = vmatprep.subr.mxu0 0.0
  %2578 = vmatpush1.msra.mxu0 0.0
  %2579 = vmatprep.subr.mxu0 0.0
  %2580 = vmatpush1.msra.mxu0 0.0
  %2581 = vmatprep.subr.mxu0 0.0
  %2582 = vmatpush1.msra.mxu0 %v2552
  %2583 = vmatprep.subr.mxu0 0.0
  %2584 = vmatpush1.msra.mxu0 %v2551
  %2585 = vmatprep.subr.mxu0 0.0
  %2586 = vmatpush1.msra.mxu0 %v2550
  %2587 = vmatprep.subr.mxu0 0.0
  %2588 = vmatpush1.msra.mxu0 %v2549
  %2589 = vmatprep.subr.mxu0 0.0
  %2590 = vmatpush1.msra.mxu0 %v2548
  %2591 = vmatprep.subr.mxu0 0.0
  %2592 = vmatpush1.msra.mxu0 %v2547
  %2593 = vmatprep.subr.mxu0 0.0
  %2594 = vmatpush1.msra.mxu0 %v2546
  %2595 = vmatprep.subr.mxu0 0.0
  %2596 = vmatpush1.msra.mxu0 %v2545
  %2597 = vmatprep.subr.mxu0 0.0
  %2598 = vmatpush2.msra.mxu0 0.0
  %2599 = vmatprep.subr.mxu0 0.0
  %2600 = vmatpush2.msra.mxu0 0.0
  %2601 = vmatprep.subr.mxu0 0.0
  %2602 = vmatpush2.msra.mxu0 0.0
  %2603 = vmatprep.subr.mxu0 0.0
  %2604 = vmatpush2.msra.mxu0 0.0
  %2605 = vmatprep.subr.mxu0 0.0
  %2606 = vmatpush2.msra.mxu0 0.0
  %2607 = vmatprep.subr.mxu0 0.0
  %2608 = vmatpush2.msra.mxu0 0.0
  %2609 = vmatprep.subr.mxu0 0.0
  %2610 = vmatpush2.msra.mxu0 0.0
  %2611 = vmatprep.subr.mxu0 0.0
  %2612 = vmatpush2.msra.mxu0 0.0
  %2613 = vmatprep.subr.mxu0 0.0
  %2614 = vmatpush2.msra.mxu0 0.0
  %2615 = vmatprep.subr.mxu0 0.0
  %2616 = vmatpush2.msra.mxu0 0.0
  %2617 = vmatprep.subr.mxu0 0.0
  %2618 = vmatpush2.msra.mxu0 0.0
  %2619 = vmatprep.subr.mxu0 0.0
  %2620 = vmatpush2.msra.mxu0 0.0
  %2621 = vmatprep.subr.mxu0 0.0
  %2622 = vmatpush2.msra.mxu0 0.0
  %2623 = vmatprep.subr.mxu0 0.0
  %2624 = vmatpush2.msra.mxu0 0.0
  %2625 = vmatprep.subr.mxu0 0.0
  %2626 = vmatpush2.msra.mxu0 0.0
  %2627 = vmatprep.subr.mxu0 0.0
  %2628 = vmatpush2.msra.mxu0 0.0
  %2629 = vmatprep.mubr.f32.mxu0 0.0
  %2630 = vmatmul.mubr.f32.gmra.mxu0 %v2554
  %v2631 = vpop.f32.mrf.mxu0
  %v2632 = vadd.f32 0.0, %v2631
  %v2633 = vpop.f32.mrf.mxu0
  %2634 = vmatprep.mubr.f32.mxu0 0.0
  %2635 = vmatmul.mubr.f32.gmra.mxu0 %v2557
  %v2636 = vpop.f32.mrf.mxu0
  %v2637 = vadd.f32 0.0, %v2636
  %v2638 = vpop.f32.mrf.mxu0
  %2639 = vmatprep.mubr.f32.mxu0 0.0
  %2640 = vmatmul.mubr.f32.gmra.mxu0 %v2560
  %v2641 = vpop.f32.mrf.mxu0
  %v2642 = vadd.f32 0.0, %v2641
  %v2643 = vpop.f32.mrf.mxu0
  %2644 = vmatprep.mubr.f32.mxu0 0.0
  %2645 = vmatmul.mubr.f32.gmra.mxu0 %v2563
  %v2646 = vpop.f32.mrf.mxu0
  %v2647 = vadd.f32 0.0, %v2646
  %v2648 = vpop.f32.mrf.mxu0
  %2649 = vdwg.mxu0
  %v2650 = vld [vmem:[%s25] sm:$0xff]
  %v2651 = vld [vmem:[%s25 + $0x8] sm:$0xff]
  %v2652 = vld [vmem:[%s25 + $0x10] sm:$0xff]
  %v2653 = vld [vmem:[%s25 + $0x18] sm:$0xff]
  %v2654 = vld [vmem:[%s25 + $0x20] sm:$0xff]
  %v2655 = vld [vmem:[%s25 + $0x28] sm:$0xff]
  %v2656 = vld [vmem:[%s25 + $0x30] sm:$0xff]
  %v2657 = vld [vmem:[%s25 + $0x38] sm:$0xff]
  %s2658 = scalar_lea.vmem %s24, 64
  %v2659 = vld [vmem:[%s2658] sm:$0xff]
  %v2660 = vld [vmem:[%s2658 + $0x8] sm:$0xff]
  %v2661 = vld [vmem:[%s2658 + $0x10] sm:$0xff]
  %v2662 = vld [vmem:[%s2658 + $0x18] sm:$0xff]
  %v2663 = vld [vmem:[%s2658 + $0x20] sm:$0xff]
  %v2664 = vld [vmem:[%s2658 + $0x28] sm:$0xff]
  %v2665 = vld [vmem:[%s2658 + $0x30] sm:$0xff]
  %v2666 = vld [vmem:[%s2658 + $0x38] sm:$0xff]
  %2667 = vmatprep.subr.mxu0 0.0
  %2668 = vmatpush1.msra.mxu0 0.0
  %2669 = vmatprep.subr.mxu0 0.0
  %2670 = vmatpush1.msra.mxu0 0.0
  %2671 = vmatprep.subr.mxu0 0.0
  %2672 = vmatpush1.msra.mxu0 0.0
  %2673 = vmatprep.subr.mxu0 0.0
  %2674 = vmatpush1.msra.mxu0 0.0
  %2675 = vmatprep.subr.mxu0 0.0
  %2676 = vmatpush1.msra.mxu0 0.0
  %2677 = vmatprep.subr.mxu0 0.0
  %2678 = vmatpush1.msra.mxu0 0.0
  %2679 = vmatprep.subr.mxu0 0.0
  %2680 = vmatpush1.msra.mxu0 0.0
  %2681 = vmatprep.subr.mxu0 0.0
  %2682 = vmatpush1.msra.mxu0 0.0
  %2683 = vmatprep.subr.mxu0 0.0
  %2684 = vmatpush1.msra.mxu0 %v2666
  %2685 = vmatprep.subr.mxu0 0.0
  %2686 = vmatpush1.msra.mxu0 %v2665
  %2687 = vmatprep.subr.mxu0 0.0
  %2688 = vmatpush1.msra.mxu0 %v2664
  %2689 = vmatprep.subr.mxu0 0.0
  %2690 = vmatpush1.msra.mxu0 %v2663
  %2691 = vmatprep.subr.mxu0 0.0
  %2692 = vmatpush1.msra.mxu0 %v2662
  %2693 = vmatprep.subr.mxu0 0.0
  %2694 = vmatpush1.msra.mxu0 %v2661
  %2695 = vmatprep.subr.mxu0 0.0
  %2696 = vmatpush1.msra.mxu0 %v2660
  %2697 = vmatprep.subr.mxu0 0.0
  %2698 = vmatpush1.msra.mxu0 %v2659
  %2699 = vmatprep.subr.mxu0 0.0
  %2700 = vmatpush2.msra.mxu0 0.0
  %2701 = vmatprep.subr.mxu0 0.0
  %2702 = vmatpush2.msra.mxu0 0.0
  %2703 = vmatprep.subr.mxu0 0.0
  %2704 = vmatpush2.msra.mxu0 0.0
  %2705 = vmatprep.subr.mxu0 0.0
  %2706 = vmatpush2.msra.mxu0 0.0
  %2707 = vmatprep.subr.mxu0 0.0
  %2708 = vmatpush2.msra.mxu0 0.0
  %2709 = vmatprep.subr.mxu0 0.0
  %2710 = vmatpush2.msra.mxu0 0.0
  %2711 = vmatprep.subr.mxu0 0.0
  %2712 = vmatpush2.msra.mxu0 0.0
  %2713 = vmatprep.subr.mxu0 0.0
  %2714 = vmatpush2.msra.mxu0 0.0
  %2715 = vmatprep.subr.mxu0 0.0
  %2716 = vmatpush2.msra.mxu0 0.0
  %2717 = vmatprep.subr.mxu0 0.0
  %2718 = vmatpush2.msra.mxu0 0.0
  %2719 = vmatprep.subr.mxu0 0.0
  %2720 = vmatpush2.msra.mxu0 0.0
  %2721 = vmatprep.subr.mxu0 0.0
  %2722 = vmatpush2.msra.mxu0 0.0
  %2723 = vmatprep.subr.mxu0 0.0
  %2724 = vmatpush2.msra.mxu0 0.0
  %2725 = vmatprep.subr.mxu0 0.0
  %2726 = vmatpush2.msra.mxu0 0.0
  %2727 = vmatprep.subr.mxu0 0.0
  %2728 = vmatpush2.msra.mxu0 0.0
  %2729 = vmatprep.subr.mxu0 0.0
  %2730 = vmatpush2.msra.mxu0 0.0
  %2731 = vmatprep.mubr.f32.mxu0 0.0
  %2732 = vmatmul.mubr.f32.gmra.mxu0 %v2554
  %v2733 = vpop.f32.mrf.mxu0
  %v2734 = vadd.f32 0.0, %v2733
  %v2735 = vpop.f32.mrf.mxu0
  %2736 = vmatprep.mubr.f32.mxu0 0.0
  %2737 = vmatmul.mubr.f32.gmra.mxu0 %v2557
  %v2738 = vpop.f32.mrf.mxu0
  %v2739 = vadd.f32 0.0, %v2738
  %v2740 = vpop.f32.mrf.mxu0
  %2741 = vmatprep.mubr.f32.mxu0 0.0
  %2742 = vmatmul.mubr.f32.gmra.mxu0 %v2560
  %v2743 = vpop.f32.mrf.mxu0
  %v2744 = vadd.f32 0.0, %v2743
  %v2745 = vpop.f32.mrf.mxu0
  %2746 = vmatprep.mubr.f32.mxu0 0.0
  %2747 = vmatmul.mubr.f32.gmra.mxu0 %v2563
  %v2748 = vpop.f32.mrf.mxu0
  %v2749 = vadd.f32 0.0, %v2748
  %v2750 = vpop.f32.mrf.mxu0
  %2751 = vdwg.mxu0
  %s2752 = scalar_lea.vmem %s25, 64
  %v2753 = vld [vmem:[%s2752] sm:$0xff]
  %v2754 = vld [vmem:[%s2752 + $0x8] sm:$0xff]
  %v2755 = vld [vmem:[%s2752 + $0x10] sm:$0xff]
  %v2756 = vld [vmem:[%s2752 + $0x18] sm:$0xff]
  %v2757 = vld [vmem:[%s2752 + $0x20] sm:$0xff]
  %v2758 = vld [vmem:[%s2752 + $0x28] sm:$0xff]
  %v2759 = vld [vmem:[%s2752 + $0x30] sm:$0xff]
  %v2760 = vld [vmem:[%s2752 + $0x38] sm:$0xff]
  %vm2761 = vcmask 261120
  %v2763 = vsel %vm2761, %v2753, 0
  %v2766 = vsel %vm2761, %v2754, 0
  %v2769 = vsel %vm2761, %v2755, 0
  %v2772 = vsel %vm2761, %v2756, 0
  %v2775 = vsel %vm2761, %v2757, 0
  %v2778 = vsel %vm2761, %v2758, 0
  %v2781 = vsel %vm2761, %v2759, 0
  %v2784 = vsel %vm2761, %v2760, 0
  %2786 = vmatprep.subr.mxu0 0.0
  %2787 = vmatpush1.msra.mxu0 0.0
  %2788 = vmatprep.subr.mxu0 0.0
  %2789 = vmatpush1.msra.mxu0 0.0
  %2790 = vmatprep.subr.mxu0 0.0
  %2791 = vmatpush1.msra.mxu0 0.0
  %2792 = vmatprep.subr.mxu0 0.0
  %2793 = vmatpush1.msra.mxu0 0.0
  %2794 = vmatprep.subr.mxu0 0.0
  %2795 = vmatpush1.msra.mxu0 0.0
  %2796 = vmatprep.subr.mxu0 0.0
  %2797 = vmatpush1.msra.mxu0 0.0
  %2798 = vmatprep.subr.mxu0 0.0
  %2799 = vmatpush1.msra.mxu0 0.0
  %2800 = vmatprep.subr.mxu0 0.0
  %2801 = vmatpush1.msra.mxu0 0.0
  %2802 = vmatprep.subr.mxu0 0.0
  %2803 = vmatpush1.msra.mxu0 0.0
  %2804 = vmatprep.subr.mxu0 0.0
  %2805 = vmatpush1.msra.mxu0 0.0
  %2806 = vmatprep.subr.mxu0 0.0
  %2807 = vmatpush1.msra.mxu0 0.0
  %2808 = vmatprep.subr.mxu0 0.0
  %2809 = vmatpush1.msra.mxu0 0.0
  %2810 = vmatprep.subr.mxu0 0.0
  %2811 = vmatpush1.msra.mxu0 %v2749
  %2812 = vmatprep.subr.mxu0 0.0
  %2813 = vmatpush1.msra.mxu0 %v2744
  %2814 = vmatprep.subr.mxu0 0.0
  %2815 = vmatpush1.msra.mxu0 %v2739
  %2816 = vmatprep.subr.mxu0 0.0
  %2817 = vmatpush1.msra.mxu0 %v2734
  %2818 = vmatprep.subr.mxu0 0.0
  %2819 = vmatpush2.msra.mxu0 0.0
  %2820 = vmatprep.subr.mxu0 0.0
  %2821 = vmatpush2.msra.mxu0 0.0
  %2822 = vmatprep.subr.mxu0 0.0
  %2823 = vmatpush2.msra.mxu0 0.0
  %2824 = vmatprep.subr.mxu0 0.0
  %2825 = vmatpush2.msra.mxu0 0.0
  %2826 = vmatprep.subr.mxu0 0.0
  %2827 = vmatpush2.msra.mxu0 0.0
  %2828 = vmatprep.subr.mxu0 0.0
  %2829 = vmatpush2.msra.mxu0 0.0
  %2830 = vmatprep.subr.mxu0 0.0
  %2831 = vmatpush2.msra.mxu0 0.0
  %2832 = vmatprep.subr.mxu0 0.0
  %2833 = vmatpush2.msra.mxu0 0.0
  %2834 = vmatprep.subr.mxu0 0.0
  %2835 = vmatpush2.msra.mxu0 0.0
  %2836 = vmatprep.subr.mxu0 0.0
  %2837 = vmatpush2.msra.mxu0 0.0
  %2838 = vmatprep.subr.mxu0 0.0
  %2839 = vmatpush2.msra.mxu0 0.0
  %2840 = vmatprep.subr.mxu0 0.0
  %2841 = vmatpush2.msra.mxu0 0.0
  %2842 = vmatprep.subr.mxu0 0.0
  %2843 = vmatpush2.msra.mxu0 0.0
  %2844 = vmatprep.subr.mxu0 0.0
  %2845 = vmatpush2.msra.mxu0 0.0
  %2846 = vmatprep.subr.mxu0 0.0
  %2847 = vmatpush2.msra.mxu0 0.0
  %2848 = vmatprep.subr.mxu0 0.0
  %2849 = vmatpush2.msra.mxu0 0.0
  %2850 = vmatprep.mubr.f32.mxu0 0.0
  %2851 = vmatmul.mubr.f32.gmra.mxu0 %v2763
  %v2852 = vpop.f32.mrf.mxu0
  %v2853 = vadd.f32 0.0, %v2852
  %v2854 = vpop.f32.mrf.mxu0
  %2855 = vmatprep.mubr.f32.mxu0 0.0
  %2856 = vmatmul.mubr.f32.gmra.mxu0 %v2766
  %v2857 = vpop.f32.mrf.mxu0
  %v2858 = vadd.f32 0.0, %v2857
  %v2859 = vpop.f32.mrf.mxu0
  %2860 = vmatprep.mubr.f32.mxu0 0.0
  %2861 = vmatmul.mubr.f32.gmra.mxu0 %v2769
  %v2862 = vpop.f32.mrf.mxu0
  %v2863 = vadd.f32 0.0, %v2862
  %v2864 = vpop.f32.mrf.mxu0
  %2865 = vmatprep.mubr.f32.mxu0 0.0
  %2866 = vmatmul.mubr.f32.gmra.mxu0 %v2772
  %v2867 = vpop.f32.mrf.mxu0
  %v2868 = vadd.f32 0.0, %v2867
  %v2869 = vpop.f32.mrf.mxu0
  %2870 = vmatprep.mubr.f32.mxu0 0.0
  %2871 = vmatmul.mubr.f32.gmra.mxu0 %v2775
  %v2872 = vpop.f32.mrf.mxu0
  %v2873 = vadd.f32 0.0, %v2872
  %v2874 = vpop.f32.mrf.mxu0
  %2875 = vmatprep.mubr.f32.mxu0 0.0
  %2876 = vmatmul.mubr.f32.gmra.mxu0 %v2778
  %v2877 = vpop.f32.mrf.mxu0
  %v2878 = vadd.f32 0.0, %v2877
  %v2879 = vpop.f32.mrf.mxu0
  %2880 = vmatprep.mubr.f32.mxu0 0.0
  %2881 = vmatmul.mubr.f32.gmra.mxu0 %v2781
  %v2882 = vpop.f32.mrf.mxu0
  %v2883 = vadd.f32 0.0, %v2882
  %v2884 = vpop.f32.mrf.mxu0
  %2885 = vmatprep.mubr.f32.mxu0 0.0
  %2886 = vmatmul.mubr.f32.gmra.mxu0 %v2784
  %v2887 = vpop.f32.mrf.mxu0
  %v2888 = vadd.f32 0.0, %v2887
  %v2889 = vpop.f32.mrf.mxu0
  %2890 = vdwg.mxu0
  %v2892 = vsel %vm2761, %v2650, 0
  %v2895 = vsel %vm2761, %v2651, 0
  %v2898 = vsel %vm2761, %v2652, 0
  %v2901 = vsel %vm2761, %v2653, 0
  %v2904 = vsel %vm2761, %v2654, 0
  %v2907 = vsel %vm2761, %v2655, 0
  %v2910 = vsel %vm2761, %v2656, 0
  %v2913 = vsel %vm2761, %v2657, 0
  %2915 = vmatprep.subr.mxu0 0.0
  %2916 = vmatpush1.msra.mxu0 0.0
  %2917 = vmatprep.subr.mxu0 0.0
  %2918 = vmatpush1.msra.mxu0 0.0
  %2919 = vmatprep.subr.mxu0 0.0
  %2920 = vmatpush1.msra.mxu0 0.0
  %2921 = vmatprep.subr.mxu0 0.0
  %2922 = vmatpush1.msra.mxu0 0.0
  %2923 = vmatprep.subr.mxu0 0.0
  %2924 = vmatpush1.msra.mxu0 0.0
  %2925 = vmatprep.subr.mxu0 0.0
  %2926 = vmatpush1.msra.mxu0 0.0
  %2927 = vmatprep.subr.mxu0 0.0
  %2928 = vmatpush1.msra.mxu0 0.0
  %2929 = vmatprep.subr.mxu0 0.0
  %2930 = vmatpush1.msra.mxu0 0.0
  %2931 = vmatprep.subr.mxu0 0.0
  %2932 = vmatpush1.msra.mxu0 0.0
  %2933 = vmatprep.subr.mxu0 0.0
  %2934 = vmatpush1.msra.mxu0 0.0
  %2935 = vmatprep.subr.mxu0 0.0
  %2936 = vmatpush1.msra.mxu0 0.0
  %2937 = vmatprep.subr.mxu0 0.0
  %2938 = vmatpush1.msra.mxu0 0.0
  %2939 = vmatprep.subr.mxu0 0.0
  %2940 = vmatpush1.msra.mxu0 %v2647
  %2941 = vmatprep.subr.mxu0 0.0
  %2942 = vmatpush1.msra.mxu0 %v2642
  %2943 = vmatprep.subr.mxu0 0.0
  %2944 = vmatpush1.msra.mxu0 %v2637
  %2945 = vmatprep.subr.mxu0 0.0
  %2946 = vmatpush1.msra.mxu0 %v2632
  %2947 = vmatprep.subr.mxu0 0.0
  %2948 = vmatpush2.msra.mxu0 0.0
  %2949 = vmatprep.subr.mxu0 0.0
  %2950 = vmatpush2.msra.mxu0 0.0
  %2951 = vmatprep.subr.mxu0 0.0
  %2952 = vmatpush2.msra.mxu0 0.0
  %2953 = vmatprep.subr.mxu0 0.0
  %2954 = vmatpush2.msra.mxu0 0.0
  %2955 = vmatprep.subr.mxu0 0.0
  %2956 = vmatpush2.msra.mxu0 0.0
  %2957 = vmatprep.subr.mxu0 0.0
  %2958 = vmatpush2.msra.mxu0 0.0
  %2959 = vmatprep.subr.mxu0 0.0
  %2960 = vmatpush2.msra.mxu0 0.0
  %2961 = vmatprep.subr.mxu0 0.0
  %2962 = vmatpush2.msra.mxu0 0.0
  %2963 = vmatprep.subr.mxu0 0.0
  %2964 = vmatpush2.msra.mxu0 0.0
  %2965 = vmatprep.subr.mxu0 0.0
  %2966 = vmatpush2.msra.mxu0 0.0
  %2967 = vmatprep.subr.mxu0 0.0
  %2968 = vmatpush2.msra.mxu0 0.0
  %2969 = vmatprep.subr.mxu0 0.0
  %2970 = vmatpush2.msra.mxu0 0.0
  %2971 = vmatprep.subr.mxu0 0.0
  %2972 = vmatpush2.msra.mxu0 0.0
  %2973 = vmatprep.subr.mxu0 0.0
  %2974 = vmatpush2.msra.mxu0 0.0
  %2975 = vmatprep.subr.mxu0 0.0
  %2976 = vmatpush2.msra.mxu0 0.0
  %2977 = vmatprep.subr.mxu0 0.0
  %2978 = vmatpush2.msra.mxu0 0.0
  %2979 = vmatprep.mubr.f32.mxu0 0.0
  %2980 = vmatmul.mubr.f32.gmra.mxu0 %v2892
  %v2981 = vpop.f32.mrf.mxu0
  %v2982 = vadd.f32 %v2853, %v2981
  %v2983 = vpop.f32.mrf.mxu0
  %2984 = vmatprep.mubr.f32.mxu0 0.0
  %2985 = vmatmul.mubr.f32.gmra.mxu0 %v2895
  %v2986 = vpop.f32.mrf.mxu0
  %v2987 = vadd.f32 %v2858, %v2986
  %v2988 = vpop.f32.mrf.mxu0
  %2989 = vmatprep.mubr.f32.mxu0 0.0
  %2990 = vmatmul.mubr.f32.gmra.mxu0 %v2898
  %v2991 = vpop.f32.mrf.mxu0
  %v2992 = vadd.f32 %v2863, %v2991
  %v2993 = vpop.f32.mrf.mxu0
  %2994 = vmatprep.mubr.f32.mxu0 0.0
  %2995 = vmatmul.mubr.f32.gmra.mxu0 %v2901
  %v2996 = vpop.f32.mrf.mxu0
  %v2997 = vadd.f32 %v2868, %v2996
  %v2998 = vpop.f32.mrf.mxu0
  %2999 = vmatprep.mubr.f32.mxu0 0.0
  %3000 = vmatmul.mubr.f32.gmra.mxu0 %v2904
  %v3001 = vpop.f32.mrf.mxu0
  %v3002 = vadd.f32 %v2873, %v3001
  %v3003 = vpop.f32.mrf.mxu0
  %3004 = vmatprep.mubr.f32.mxu0 0.0
  %3005 = vmatmul.mubr.f32.gmra.mxu0 %v2907
  %v3006 = vpop.f32.mrf.mxu0
  %v3007 = vadd.f32 %v2878, %v3006
  %v3008 = vpop.f32.mrf.mxu0
  %3009 = vmatprep.mubr.f32.mxu0 0.0
  %3010 = vmatmul.mubr.f32.gmra.mxu0 %v2910
  %v3011 = vpop.f32.mrf.mxu0
  %v3012 = vadd.f32 %v2883, %v3011
  %v3013 = vpop.f32.mrf.mxu0
  %3014 = vmatprep.mubr.f32.mxu0 0.0
  %3015 = vmatmul.mubr.f32.gmra.mxu0 %v2913
  %v3016 = vpop.f32.mrf.mxu0
  %v3017 = vadd.f32 %v2888, %v3016
  %v3018 = vpop.f32.mrf.mxu0
  %3019 = vdwg.mxu0
  %s3020 = scalar_lea.vmem %s24, 128
  %v3021 = vld [vmem:[%s3020] sm:$0xff]
  %v3022 = vld [vmem:[%s3020 + $0x8] sm:$0xff]
  %v3023 = vld [vmem:[%s3020 + $0x10] sm:$0xff]
  %v3024 = vld [vmem:[%s3020 + $0x18] sm:$0xff]
  %v3025 = vld [vmem:[%s3020 + $0x20] sm:$0xff]
  %v3026 = vld [vmem:[%s3020 + $0x28] sm:$0xff]
  %v3027 = vld [vmem:[%s3020 + $0x30] sm:$0xff]
  %v3028 = vld [vmem:[%s3020 + $0x38] sm:$0xff]
  %3029 = vmatprep.subr.mxu0 0.0
  %3030 = vmatpush1.msra.mxu0 0.0
  %3031 = vmatprep.subr.mxu0 0.0
  %3032 = vmatpush1.msra.mxu0 0.0
  %3033 = vmatprep.subr.mxu0 0.0
  %3034 = vmatpush1.msra.mxu0 0.0
  %3035 = vmatprep.subr.mxu0 0.0
  %3036 = vmatpush1.msra.mxu0 0.0
  %3037 = vmatprep.subr.mxu0 0.0
  %3038 = vmatpush1.msra.mxu0 0.0
  %3039 = vmatprep.subr.mxu0 0.0
  %3040 = vmatpush1.msra.mxu0 0.0
  %3041 = vmatprep.subr.mxu0 0.0
  %3042 = vmatpush1.msra.mxu0 0.0
  %3043 = vmatprep.subr.mxu0 0.0
  %3044 = vmatpush1.msra.mxu0 0.0
  %3045 = vmatprep.subr.mxu0 0.0
  %3046 = vmatpush1.msra.mxu0 %v3028
  %3047 = vmatprep.subr.mxu0 0.0
  %3048 = vmatpush1.msra.mxu0 %v3027
  %3049 = vmatprep.subr.mxu0 0.0
  %3050 = vmatpush1.msra.mxu0 %v3026
  %3051 = vmatprep.subr.mxu0 0.0
  %3052 = vmatpush1.msra.mxu0 %v3025
  %3053 = vmatprep.subr.mxu0 0.0
  %3054 = vmatpush1.msra.mxu0 %v3024
  %3055 = vmatprep.subr.mxu0 0.0
  %3056 = vmatpush1.msra.mxu0 %v3023
  %3057 = vmatprep.subr.mxu0 0.0
  %3058 = vmatpush1.msra.mxu0 %v3022
  %3059 = vmatprep.subr.mxu0 0.0
  %3060 = vmatpush1.msra.mxu0 %v3021
  %3061 = vmatprep.subr.mxu0 0.0
  %3062 = vmatpush2.msra.mxu0 0.0
  %3063 = vmatprep.subr.mxu0 0.0
  %3064 = vmatpush2.msra.mxu0 0.0
  %3065 = vmatprep.subr.mxu0 0.0
  %3066 = vmatpush2.msra.mxu0 0.0
  %3067 = vmatprep.subr.mxu0 0.0
  %3068 = vmatpush2.msra.mxu0 0.0
  %3069 = vmatprep.subr.mxu0 0.0
  %3070 = vmatpush2.msra.mxu0 0.0
  %3071 = vmatprep.subr.mxu0 0.0
  %3072 = vmatpush2.msra.mxu0 0.0
  %3073 = vmatprep.subr.mxu0 0.0
  %3074 = vmatpush2.msra.mxu0 0.0
  %3075 = vmatprep.subr.mxu0 0.0
  %3076 = vmatpush2.msra.mxu0 0.0
  %3077 = vmatprep.subr.mxu0 0.0
  %3078 = vmatpush2.msra.mxu0 0.0
  %3079 = vmatprep.subr.mxu0 0.0
  %3080 = vmatpush2.msra.mxu0 0.0
  %3081 = vmatprep.subr.mxu0 0.0
  %3082 = vmatpush2.msra.mxu0 0.0
  %3083 = vmatprep.subr.mxu0 0.0
  %3084 = vmatpush2.msra.mxu0 0.0
  %3085 = vmatprep.subr.mxu0 0.0
  %3086 = vmatpush2.msra.mxu0 0.0
  %3087 = vmatprep.subr.mxu0 0.0
  %3088 = vmatpush2.msra.mxu0 0.0
  %3089 = vmatprep.subr.mxu0 0.0
  %3090 = vmatpush2.msra.mxu0 0.0
  %3091 = vmatprep.subr.mxu0 0.0
  %3092 = vmatpush2.msra.mxu0 0.0
  %3093 = vmatprep.mubr.f32.mxu0 0.0
  %3094 = vmatmul.mubr.f32.gmra.mxu0 %v2554
  %v3095 = vpop.f32.mrf.mxu0
  %v3096 = vadd.f32 0.0, %v3095
  %v3097 = vpop.f32.mrf.mxu0
  %3098 = vmatprep.mubr.f32.mxu0 0.0
  %3099 = vmatmul.mubr.f32.gmra.mxu0 %v2557
  %v3100 = vpop.f32.mrf.mxu0
  %v3101 = vadd.f32 0.0, %v3100
  %v3102 = vpop.f32.mrf.mxu0
  %3103 = vmatprep.mubr.f32.mxu0 0.0
  %3104 = vmatmul.mubr.f32.gmra.mxu0 %v2560
  %v3105 = vpop.f32.mrf.mxu0
  %v3106 = vadd.f32 0.0, %v3105
  %v3107 = vpop.f32.mrf.mxu0
  %3108 = vmatprep.mubr.f32.mxu0 0.0
  %3109 = vmatmul.mubr.f32.gmra.mxu0 %v2563
  %v3110 = vpop.f32.mrf.mxu0
  %v3111 = vadd.f32 0.0, %v3110
  %v3112 = vpop.f32.mrf.mxu0
  %3113 = vdwg.mxu0
  %s3114 = scalar_lea.vmem %s25, 128
  %v3115 = vld [vmem:[%s3114] sm:$0xff]
  %v3116 = vld [vmem:[%s3114 + $0x8] sm:$0xff]
  %v3117 = vld [vmem:[%s3114 + $0x10] sm:$0xff]
  %v3118 = vld [vmem:[%s3114 + $0x18] sm:$0xff]
  %v3119 = vld [vmem:[%s3114 + $0x20] sm:$0xff]
  %v3120 = vld [vmem:[%s3114 + $0x28] sm:$0xff]
  %v3121 = vld [vmem:[%s3114 + $0x30] sm:$0xff]
  %v3122 = vld [vmem:[%s3114 + $0x38] sm:$0xff]
  %v3124 = vsel %vm2761, %v3115, 0
  %v3127 = vsel %vm2761, %v3116, 0
  %v3130 = vsel %vm2761, %v3117, 0
  %v3133 = vsel %vm2761, %v3118, 0
  %v3136 = vsel %vm2761, %v3119, 0
  %v3139 = vsel %vm2761, %v3120, 0
  %v3142 = vsel %vm2761, %v3121, 0
  %v3145 = vsel %vm2761, %v3122, 0
  %3147 = vmatprep.subr.mxu0 0.0
  %3148 = vmatpush1.msra.mxu0 0.0
  %3149 = vmatprep.subr.mxu0 0.0
  %3150 = vmatpush1.msra.mxu0 0.0
  %3151 = vmatprep.subr.mxu0 0.0
  %3152 = vmatpush1.msra.mxu0 0.0
  %3153 = vmatprep.subr.mxu0 0.0
  %3154 = vmatpush1.msra.mxu0 0.0
  %3155 = vmatprep.subr.mxu0 0.0
  %3156 = vmatpush1.msra.mxu0 0.0
  %3157 = vmatprep.subr.mxu0 0.0
  %3158 = vmatpush1.msra.mxu0 0.0
  %3159 = vmatprep.subr.mxu0 0.0
  %3160 = vmatpush1.msra.mxu0 0.0
  %3161 = vmatprep.subr.mxu0 0.0
  %3162 = vmatpush1.msra.mxu0 0.0
  %3163 = vmatprep.subr.mxu0 0.0
  %3164 = vmatpush1.msra.mxu0 0.0
  %3165 = vmatprep.subr.mxu0 0.0
  %3166 = vmatpush1.msra.mxu0 0.0
  %3167 = vmatprep.subr.mxu0 0.0
  %3168 = vmatpush1.msra.mxu0 0.0
  %3169 = vmatprep.subr.mxu0 0.0
  %3170 = vmatpush1.msra.mxu0 0.0
  %3171 = vmatprep.subr.mxu0 0.0
  %3172 = vmatpush1.msra.mxu0 %v3111
  %3173 = vmatprep.subr.mxu0 0.0
  %3174 = vmatpush1.msra.mxu0 %v3106
  %3175 = vmatprep.subr.mxu0 0.0
  %3176 = vmatpush1.msra.mxu0 %v3101
  %3177 = vmatprep.subr.mxu0 0.0
  %3178 = vmatpush1.msra.mxu0 %v3096
  %3179 = vmatprep.subr.mxu0 0.0
  %3180 = vmatpush2.msra.mxu0 0.0
  %3181 = vmatprep.subr.mxu0 0.0
  %3182 = vmatpush2.msra.mxu0 0.0
  %3183 = vmatprep.subr.mxu0 0.0
  %3184 = vmatpush2.msra.mxu0 0.0
  %3185 = vmatprep.subr.mxu0 0.0
  %3186 = vmatpush2.msra.mxu0 0.0
  %3187 = vmatprep.subr.mxu0 0.0
  %3188 = vmatpush2.msra.mxu0 0.0
  %3189 = vmatprep.subr.mxu0 0.0
  %3190 = vmatpush2.msra.mxu0 0.0
  %3191 = vmatprep.subr.mxu0 0.0
  %3192 = vmatpush2.msra.mxu0 0.0
  %3193 = vmatprep.subr.mxu0 0.0
  %3194 = vmatpush2.msra.mxu0 0.0
  %3195 = vmatprep.subr.mxu0 0.0
  %3196 = vmatpush2.msra.mxu0 0.0
  %3197 = vmatprep.subr.mxu0 0.0
  %3198 = vmatpush2.msra.mxu0 0.0
  %3199 = vmatprep.subr.mxu0 0.0
  %3200 = vmatpush2.msra.mxu0 0.0
  %3201 = vmatprep.subr.mxu0 0.0
  %3202 = vmatpush2.msra.mxu0 0.0
  %3203 = vmatprep.subr.mxu0 0.0
  %3204 = vmatpush2.msra.mxu0 0.0
  %3205 = vmatprep.subr.mxu0 0.0
  %3206 = vmatpush2.msra.mxu0 0.0
  %3207 = vmatprep.subr.mxu0 0.0
  %3208 = vmatpush2.msra.mxu0 0.0
  %3209 = vmatprep.subr.mxu0 0.0
  %3210 = vmatpush2.msra.mxu0 0.0
  %3211 = vmatprep.mubr.f32.mxu0 0.0
  %3212 = vmatmul.mubr.f32.gmra.mxu0 %v3124
  %v3213 = vpop.f32.mrf.mxu0
  %v3214 = vadd.f32 0.0, %v3213
  %v3215 = vpop.f32.mrf.mxu0
  %3216 = vmatprep.mubr.f32.mxu0 0.0
  %3217 = vmatmul.mubr.f32.gmra.mxu0 %v3127
  %v3218 = vpop.f32.mrf.mxu0
  %v3219 = vadd.f32 0.0, %v3218
  %v3220 = vpop.f32.mrf.mxu0
  %3221 = vmatprep.mubr.f32.mxu0 0.0
  %3222 = vmatmul.mubr.f32.gmra.mxu0 %v3130
  %v3223 = vpop.f32.mrf.mxu0
  %v3224 = vadd.f32 0.0, %v3223
  %v3225 = vpop.f32.mrf.mxu0
  %3226 = vmatprep.mubr.f32.mxu0 0.0
  %3227 = vmatmul.mubr.f32.gmra.mxu0 %v3133
  %v3228 = vpop.f32.mrf.mxu0
  %v3229 = vadd.f32 0.0, %v3228
  %v3230 = vpop.f32.mrf.mxu0
  %3231 = vmatprep.mubr.f32.mxu0 0.0
  %3232 = vmatmul.mubr.f32.gmra.mxu0 %v3136
  %v3233 = vpop.f32.mrf.mxu0
  %v3234 = vadd.f32 0.0, %v3233
  %v3235 = vpop.f32.mrf.mxu0
  %3236 = vmatprep.mubr.f32.mxu0 0.0
  %3237 = vmatmul.mubr.f32.gmra.mxu0 %v3139
  %v3238 = vpop.f32.mrf.mxu0
  %v3239 = vadd.f32 0.0, %v3238
  %v3240 = vpop.f32.mrf.mxu0
  %3241 = vmatprep.mubr.f32.mxu0 0.0
  %3242 = vmatmul.mubr.f32.gmra.mxu0 %v3142
  %v3243 = vpop.f32.mrf.mxu0
  %v3244 = vadd.f32 0.0, %v3243
  %v3245 = vpop.f32.mrf.mxu0
  %3246 = vmatprep.mubr.f32.mxu0 0.0
  %3247 = vmatmul.mubr.f32.gmra.mxu0 %v3145
  %v3248 = vpop.f32.mrf.mxu0
  %v3249 = vadd.f32 0.0, %v3248
  %v3250 = vpop.f32.mrf.mxu0
  %3251 = vdwg.mxu0
  %v3252 = vadd.f32 %v2982, %v3214
  %v3253 = vadd.f32 %v2987, %v3219
  %v3254 = vadd.f32 %v2992, %v3224
  %v3255 = vadd.f32 %v2997, %v3229
  %v3256 = vadd.f32 %v3002, %v3234
  %v3257 = vadd.f32 %v3007, %v3239
  %v3258 = vadd.f32 %v3012, %v3244
  %v3259 = vadd.f32 %v3017, %v3249
  %v3260 = vld [vmem:[%s26] sm:$0x1]
  %v3262 = vlaneseq
  %v3263 = vshrl.u32 %v3262, 7
  %v3264 = vsub.s32 0, %v3263
  %v3265 = vrot.slane %v3260, %v3264
  %v3267 = vadd.f32 %v3252, %v3265
  %v3268 = vadd.f32 %v3253, %v3265
  %v3269 = vadd.f32 %v3254, %v3265
  %v3270 = vadd.f32 %v3255, %v3265
  %v3271 = vadd.f32 %v3256, %v3265
  %v3272 = vadd.f32 %v3257, %v3265
  %v3273 = vadd.f32 %v3258, %v3265
  %v3274 = vadd.f32 %v3259, %v3265
  %v3275 = vtanh.pop %v3267
  %v3276 = vtanh.pop %v3268
  %v3277 = vtanh.pop %v3269
  %v3278 = vtanh.pop %v3270
  %v3279 = vtanh.pop %v3271
  %v3280 = vtanh.pop %v3272
  %v3281 = vtanh.pop %v3273
  %v3282 = vtanh.pop %v3274
  %vm3283 = vcmask 785408
  %3284 = vst.msk [vmem:[%s27] sm:$0xff] %vm3283, %v3275
  %3285 = vst.msk [vmem:[%s27 + $0x8] sm:$0xff] %vm3283, %v3276
  %3286 = vst.msk [vmem:[%s27 + $0x10] sm:$0xff] %vm3283, %v3277
  %3287 = vst.msk [vmem:[%s27 + $0x18] sm:$0xff] %vm3283, %v3278
  %3288 = vst.msk [vmem:[%s27 + $0x20] sm:$0xff] %vm3283, %v3279
  %3289 = vst.msk [vmem:[%s27 + $0x28] sm:$0xff] %vm3283, %v3280
  %3290 = vst.msk [vmem:[%s27 + $0x30] sm:$0xff] %vm3283, %v3281
  %3291 = vst.msk [vmem:[%s27 + $0x38] sm:$0xff] %vm3283, %v3282
  // Predicated region
  $region110: #{generator_forward.1} parent=0 // pred_check
    _
  $region111: #{generator_forward.1} parent=0 // pred_check_branch
    %3293 = sbr.rel (0) target = $region113
  $region112: #{generator_forward.1} parent=0 // pred_region
    _
  $region113: #{generator_forward.1} parent=0 // pred_fallthru
    _
  // Predicated region
  $region114: #{generator_forward.1} parent=0 // pred_check
    _
  $region115: #{generator_forward.1} parent=0 // pred_check_branch
    %3295 = sbr.rel (0) target = $region117
  $region116: #{generator_forward.1} parent=0 // pred_region
    _
  $region117: #{generator_forward.1} parent=0 // pred_fallthru
    _

</llo_original>
